<compile_context>
chip_gen: v6e
topology: v6e:2x2x1
jax: 0.10.0
libtpu: 0.0.40
codegen_flags: <defaults>
</compile_context>

<pallas_src>
import jax
import jax.numpy as jnp
from jax import lax
from jax.experimental import pallas as pl
from jax.experimental.pallas import tpu as pltpu


def _round_up(x, m):
    return ((x + m - 1) // m) * m


def _time_chunk(T, target=16):
    """Largest divisor of T that is <= target (keeps chunking exact)."""
    best = 1
    for d in range(1, min(T, target) + 1):
        if T % d == 0:
            best = d
    return best


def _lstm_fc_kernel(x_ref, wih_ref, whh_ref, b_ref, wfc_ref, bfc_ref,
                    out_ref, seq_scr, gx_scr):
    """One grid step = (batch chunk b, layer l).  Layers iterate fastest."""
    T, Bblk, In = seq_scr.shape          # padded: Bblk % 8 == 0, In % 128 == 0
    Tc, _, G = gx_scr.shape              # G = 4 * Hp, Hp % 128 == 0
    Hp = G // 4
    n_chunks = T // Tc
    l = pl.program_id(1)

    # Layer 0: stage this batch chunk's (time-major, padded) input sequence
    # into the inter-layer VMEM buffer; later layers read/overwrite in place.
    @pl.when(l == 0)
    def _():
        seq_scr[...] = x_ref[...]

    def chunk_body(ci, carry):
        h, c = carry
        t0 = pl.multiple_of(ci * Tc, Tc)

        # Hoisted input projection for the whole time chunk (one MXU op), so
        # the per-step critical path is only the small recurrent matmul + the
        # VPU/EUP gate math.
        xin = seq_scr[pl.ds(t0, Tc)].reshape(Tc * Bblk, In)
        gx = jnp.dot(xin, wih_ref[0], preferred_element_type=jnp.float32)
        gx_scr[...] = (gx + b_ref[0]).reshape(Tc, Bblk, G)

        def step(t, hc):
            h, c = hc
            gates = gx_scr[t] + jnp.dot(h, whh_ref[0],
                                        preferred_element_type=jnp.float32)
            # Lane-aligned gate slices (Hp is a multiple of 128).
            i_g = jax.nn.sigmoid(gates[:, 0 * Hp:1 * Hp])
            f_g = jax.nn.sigmoid(gates[:, 1 * Hp:2 * Hp])
            g_g = jnp.tanh(gates[:, 2 * Hp:3 * Hp])
            o_g = jax.nn.sigmoid(gates[:, 3 * Hp:4 * Hp])
            c = f_g * c + i_g * g_g
            h = o_g * jnp.tanh(c)
            # Sequence output = next layer's input.  Safe to overwrite: this
            # chunk's rows were already consumed by the projection above.
            h_store = h if In == Hp else jnp.pad(h, ((0, 0), (0, In - Hp)))
            seq_scr[t0 + t] = h_store
            return (h, c)

        return lax.fori_loop(0, Tc, step, (h, c), unroll=min(8, Tc))

    h0 = jnp.zeros((Bblk, Hp), jnp.float32)
    c0 = jnp.zeros((Bblk, Hp), jnp.float32)
    h_last, _ = lax.fori_loop(0, n_chunks, chunk_body, (h0, c0))

    # Final hidden of this layer -> FC logits (lane-dense padded store).
    out_ref[0] = (jnp.dot(h_last, wfc_ref[...],
                          preferred_element_type=jnp.float32) + bfc_ref[...])


class LSTMParams:
    """Mirrors torch.nn.LSTM(batch_first=True) + nn.Linear initialization."""

    def __init__(self, key, num_classes, input_size, hidden_size, num_layers):
        self.num_classes = num_classes
        self.input_size = input_size
        self.hidden_size = hidden_size
        self.num_layers = num_layers
        H = hidden_size
        bound = 1.0 / jnp.sqrt(jnp.float32(H))
        self.layers = []
        for layer in range(num_layers):
            in_sz = input_size if layer == 0 else hidden_size
            key, k1, k2, k3, k4 = jax.random.split(key, 5)
            w_ih = jax.random.uniform(k1, (4 * H, in_sz), jnp.float32, -bound, bound)
            w_hh = jax.random.uniform(k2, (4 * H, H), jnp.float32, -bound, bound)
            b_ih = jax.random.uniform(k3, (4 * H,), jnp.float32, -bound, bound)
            b_hh = jax.random.uniform(k4, (4 * H,), jnp.float32, -bound, bound)
            self.layers.append((w_ih, w_hh, b_ih, b_hh))
        key, k5, k6 = jax.random.split(key, 3)
        fb = 1.0 / jnp.sqrt(jnp.float32(H))
        self.w_fc = jax.random.uniform(k5, (num_classes, H), jnp.float32, -fb, fb)
        self.b_fc = jax.random.uniform(k6, (num_classes,), jnp.float32, -fb, fb)


def lstm_forward(params, x_bti, *, time_chunk=16):
    """x_bti: (B, T, input_size) f32, batch_first like the PyTorch module.

    Returns (num_layers * B, num_classes), matching fc(h_out.view(-1, H)).
    """
    # The PyTorch forward builds h_0 with shape (num_classes, B, H); that only
    # type-checks when num_classes == num_layers (values are zeros either way).
    assert params.num_classes == params.num_layers, (
        "PyTorch forward's h_0 shape requires num_classes == num_layers")

    x = jnp.asarray(x_bti, jnp.float32)
    B, T, I = x.shape
    H, L, C = params.hidden_size, params.num_layers, params.num_classes

    # Padded tile sizes.
    Hp = _round_up(H, 128)
    G = 4 * Hp
    In = max(_round_up(I, 128), Hp)      # common input width for all layers
    Cp = _round_up(C, 128)
    Bblk = _round_up(B, 8) if B <= 64 else 64   # batch chunk (>=8 sublanes)
    Bp = _round_up(B, Bblk)
    n_bc = Bp // Bblk
    Tc = _time_chunk(T, time_chunk)

    def pad_gate_cols(w):
        # (rows, 4H) -> (rows, G): zero-pad each gate block to Hp lanes so gate
        # slices inside the kernel are 128-lane aligned.
        rows = w.shape[0]
        out = jnp.zeros((rows, G), jnp.float32)
        for k in range(4):
            out = out.at[:, k * Hp:k * Hp + H].set(w[:, k * H:(k + 1) * H])
        return out

    wih_l, whh_l, bias_l = [], [], []
    for (w_ih, w_hh, b_ih, b_hh) in params.layers:
        in_l = w_ih.shape[1]
        wi = pad_gate_cols(jnp.asarray(w_ih, jnp.float32).T)          # (in_l, G)
        wi = jnp.zeros((In, G), jnp.float32).at[:in_l, :].set(wi)     # (In, G)
        wh = pad_gate_cols(jnp.asarray(w_hh, jnp.float32).T)          # (H, G)
        wh = jnp.zeros((Hp, G), jnp.float32).at[:H, :].set(wh)        # (Hp, G)
        bsum = pad_gate_cols((jnp.asarray(b_ih, jnp.float32)
                              + jnp.asarray(b_hh, jnp.float32)).reshape(1, 4 * H))
        wih_l.append(wi)
        whh_l.append(wh)
        bias_l.append(bsum)
    w_ih_all = jnp.stack(wih_l)           # (L, In, G)
    w_hh_all = jnp.stack(whh_l)           # (L, Hp, G)
    bias_all = jnp.stack(bias_l)          # (L, 1, G)

    w_fc = jnp.zeros((Hp, Cp), jnp.float32).at[:H, :C].set(
        jnp.asarray(params.w_fc, jnp.float32).T)
    b_fc = jnp.zeros((1, Cp), jnp.float32).at[0, :C].set(
        jnp.asarray(params.b_fc, jnp.float32))

    # Time-major, tile-padded input.
    x_t = jnp.transpose(x, (1, 0, 2))                                  # (T, B, I)
    x_pad = jnp.zeros((T, Bp, In), jnp.float32).at[:, :B, :I].set(x_t)

    # VMEM budget: double-buffered blocks + the two scratches (+25% headroom).
    f32b = 4
    vmem_need = f32b * (
        2 * T * Bblk * In                     # x block (pipeline double-buffer)
        + 2 * (In * G + Hp * G + G)           # per-layer weights (2 slots)
        + 2 * (Hp * Cp + Cp)                  # fc weights / bias
        + 2 * Bblk * Cp                       # out block
        + T * Bblk * In                       # inter-layer sequence scratch
        + Tc * Bblk * G)                      # chunked gate pre-activations
    vmem_limit = max(32 << 20, min(int(vmem_need * 1.25) + (2 << 20), 100 << 20))

    grid_spec = pltpu.PrefetchScalarGridSpec(
        num_scalar_prefetch=0,
        grid=(n_bc, L),                       # layers iterate fastest
        in_specs=[
            pl.BlockSpec((T, Bblk, In), lambda b, l: (0, b, 0)),   # x
            pl.BlockSpec((1, In, G), lambda b, l: (l, 0, 0)),      # W_ih[l]
            pl.BlockSpec((1, Hp, G), lambda b, l: (l, 0, 0)),      # W_hh[l]
            pl.BlockSpec((1, 1, G), lambda b, l: (l, 0, 0)),       # bias[l]
            pl.BlockSpec((Hp, Cp), lambda b, l: (0, 0)),           # W_fc
            pl.BlockSpec((1, Cp), lambda b, l: (0, 0)),            # b_fc
        ],
        out_specs=pl.BlockSpec((1, Bblk, Cp), lambda b, l: (l, b, 0)),
        scratch_shapes=[
            pltpu.VMEM((T, Bblk, In), jnp.float32),   # inter-layer sequence
            pltpu.VMEM((Tc, Bblk, G), jnp.float32),   # chunked gate pre-acts
        ],
    )

    out = pl.pallas_call(
        _lstm_fc_kernel,
        out_shape=jax.ShapeDtypeStruct((L, Bp, Cp), jnp.float32),
        grid_spec=grid_spec,
        compiler_params=pltpu.CompilerParams(
            dimension_semantics=("parallel", "arbitrary"),
            vmem_limit_bytes=vmem_limit),
    )(x_pad, w_ih_all, w_hh_all, bias_all, w_fc, b_fc)

    return out[:, :B, :C].reshape(L * B, C)


def _reference_forward(params, x):
    """Plain-JAX reference (same math as torch: gate order [i,f,g,o])."""
    x = jnp.asarray(x, jnp.float32)
    B, T, I = x.shape
    H = params.hidden_size
    inp = jnp.transpose(x, (1, 0, 2))
    finals = []
    for (w_ih, w_hh, b_ih, b_hh) in params.layers:
        h = jnp.zeros((B, H), jnp.float32)
        c = jnp.zeros((B, H), jnp.float32)
        outs = []
        for t in range(T):
            g = inp[t] @ w_ih.T + b_ih + h @ w_hh.T + b_hh
            i = jax.nn.sigmoid(g[:, :H])
            f = jax.nn.sigmoid(g[:, H:2 * H])
            gg = jnp.tanh(g[:, 2 * H:3 * H])
            o = jax.nn.sigmoid(g[:, 3 * H:])
            c = f * c + i * gg
            h = o * jnp.tanh(c)
            outs.append(h)
        inp = jnp.stack(outs)
        finals.append(h)
    h_out = jnp.concatenate(finals, axis=0)
    return h_out @ params.w_fc.T + params.b_fc


if __name__ == "__main__":
    num_classes = 2
    num_layers = 2          # matches num_classes so the PyTorch h_0 shape is consistent
    input_size = 4
    hidden_size = 32
    batch = 2
    seq = 8

    key = jax.random.PRNGKey(0)
    key, kx = jax.random.split(key)
    x = jax.random.normal(kx, (batch, seq, input_size), jnp.float32)
    params = LSTMParams(key, num_classes, input_size, hidden_size, num_layers)

    out = jax.block_until_ready(lstm_forward(params, x))
    assert out.shape == (num_layers * batch, num_classes), out.shape
    assert bool(jnp.all(jnp.isfinite(out)))

    ref = _reference_forward(params, x)
    assert bool(jnp.allclose(out, ref, atol=1e-3, rtol=1e-3)), (
        float(jnp.max(jnp.abs(out - ref))))
    print("KERNEL_OK")
</pallas_src>

<mosaic_0001>
module attributes {stable_mosaic.version = 11 : i64} {
  func.func @_lstm_fc_kernel(%arg0: i32, %arg1: i32, %arg2: memref<8x8x128xf32, #tpu.memory_space<vmem>>, %arg3: memref<1x128x512xf32, #tpu.memory_space<vmem>>, %arg4: memref<1x128x512xf32, #tpu.memory_space<vmem>>, %arg5: memref<1x1x512xf32, #tpu.memory_space<vmem>>, %arg6: memref<128x128xf32, #tpu.memory_space<vmem>>, %arg7: memref<1x128xf32, #tpu.memory_space<vmem>>, %arg8: memref<1x8x128xf32, #tpu.memory_space<vmem>>, %arg9: memref<8x8x128xf32, #tpu.memory_space<vmem>>, %arg10: memref<8x8x512xf32, #tpu.memory_space<vmem>>) attributes {dimension_semantics = [#tpu.dimension_semantics<parallel>, #tpu.dimension_semantics<arbitrary>], iteration_bounds = array<i64: 1, 2>, scalar_prefetch = 0 : i64, scratch_operands = 2 : i64, tpu.core_type = #tpu.core_type<tc>, window_params = [{transform_indices = @transform_0, window_bounds = array<i64: 8, 8, 128>}, {transform_indices = @transform_1, window_bounds = array<i64: 1, 128, 512>}, {transform_indices = @transform_2, window_bounds = array<i64: 1, 128, 512>}, {transform_indices = @transform_3, window_bounds = array<i64: 1, 1, 512>}, {pipeline_mode = #tpu.pipeline_mode<synchronous>, transform_indices = @transform_4, window_bounds = array<i64: 128, 128>}, {pipeline_mode = #tpu.pipeline_mode<synchronous>, transform_indices = @transform_5, window_bounds = array<i64: 1, 128>}, {transform_indices = @transform_6, window_bounds = array<i64: 1, 8, 128>}]} {
    %c0_i32 = arith.constant 0 : i32
    %0 = arith.cmpi eq, %arg1, %c0_i32 : i32
    %1 = arith.extui %0 : i1 to i32
    %c0_i32_0 = arith.constant 0 : i32
    %2 = arith.cmpi ne, %1, %c0_i32_0 : i32
    scf.if %2 {
      %c0_113 = arith.constant 0 : index
      %c0_114 = arith.constant 0 : index
      %c0_115 = arith.constant 0 : index
      %323 = vector.load %arg2[%c0_113, %c0_114, %c0_115] : memref<8x8x128xf32, #tpu.memory_space<vmem>>, vector<8x8x128xf32>
      %c0_116 = arith.constant 0 : index
      %c0_117 = arith.constant 0 : index
      %c0_118 = arith.constant 0 : index
      %324 = vector.load %arg9[%c0_116, %c0_117, %c0_118] : memref<8x8x128xf32, #tpu.memory_space<vmem>>, vector<8x8x128xf32>
      tpu.vector_store %arg9[%c0_116, %c0_117, %c0_118], %323 {strides = array<i32>} : memref<8x8x128xf32, #tpu.memory_space<vmem>>, vector<8x8x128xf32>,
    } else {
    }
    %cst = arith.constant 0.000000e+00 : f32
    %3 = vector.broadcast %cst : f32 to vector<8x128xf32>
    %cst_1 = arith.constant 0.000000e+00 : f32
    %4 = vector.broadcast %cst_1 : f32 to vector<8x128xf32>
    %c0_i32_2 = arith.constant 0 : i32
    %c8_i32 = arith.constant 8 : i32
    %5 = arith.muli %c0_i32_2, %c8_i32 : i32
    %6 = tpu.assume_multiple %5, 8 : i32
    %7 = arith.index_cast %6 : i32 to index
    %c0 = arith.constant 0 : index
    %c0_3 = arith.constant 0 : index
    %8 = vector.load %arg9[%7, %c0, %c0_3] : memref<8x8x128xf32, #tpu.memory_space<vmem>>, vector<8x8x128xf32>
    %9 = vector.shape_cast %8 : vector<8x8x128xf32> to vector<64x128xf32>
    %c0_4 = arith.constant 0 : index
    %c0_5 = arith.constant 0 : index
    %c0_6 = arith.constant 0 : index
    %10 = vector.load %arg3[%c0_4, %c0_5, %c0_6] : memref<1x128x512xf32, #tpu.memory_space<vmem>>, vector<1x128x512xf32>
    %11 = vector.shape_cast %10 : vector<1x128x512xf32> to vector<128x512xf32>
    %cst_7 = arith.constant dense<0.000000e+00> : vector<64x512xf32>
    %12 = tpu.matmul %9, %11, %cst_7 {dimension_numbers = #tpu.dot_dimension_numbers<[1], [0], [0], [1], [0, 0, 1, 1], [], []>} : vector<64x128xf32>, vector<128x512xf32>, vector<64x512xf32> -> vector<64x512xf32>
    %c0_8 = arith.constant 0 : index
    %c0_9 = arith.constant 0 : index
    %c0_10 = arith.constant 0 : index
    %13 = vector.load %arg5[%c0_8, %c0_9, %c0_10] : memref<1x1x512xf32, #tpu.memory_space<vmem>>, vector<1x1x512xf32>
    %14 = vector.shape_cast %13 : vector<1x1x512xf32> to vector<1x512xf32>
    %15 = vector.broadcast %14 : vector<1x512xf32> to vector<64x512xf32>
    %16 = arith.addf %12, %15 : vector<64x512xf32>
    %17 = vector.shape_cast %16 : vector<64x512xf32> to vector<8x8x512xf32>
    %c0_11 = arith.constant 0 : index
    %c0_12 = arith.constant 0 : index
    %c0_13 = arith.constant 0 : index
    %18 = vector.load %arg10[%c0_11, %c0_12, %c0_13] : memref<8x8x512xf32, #tpu.memory_space<vmem>>, vector<8x8x512xf32>
    tpu.vector_store %arg10[%c0_11, %c0_12, %c0_13], %17 {strides = array<i32>} : memref<8x8x512xf32, #tpu.memory_space<vmem>>, vector<8x8x512xf32>,
    %c0_i32_14 = arith.constant 0 : i32
    %19 = arith.index_cast %c0_i32_14 : i32 to index
    %c0_15 = arith.constant 0 : index
    %c0_16 = arith.constant 0 : index
    %20 = vector.load %arg10[%19, %c0_15, %c0_16] : memref<8x8x512xf32, #tpu.memory_space<vmem>>, vector<1x8x512xf32>
    %21 = vector.shape_cast %20 : vector<1x8x512xf32> to vector<8x512xf32>
    %c0_17 = arith.constant 0 : index
    %c0_18 = arith.constant 0 : index
    %c0_19 = arith.constant 0 : index
    %22 = vector.load %arg4[%c0_17, %c0_18, %c0_19] : memref<1x128x512xf32, #tpu.memory_space<vmem>>, vector<1x128x512xf32>
    %23 = vector.shape_cast %22 : vector<1x128x512xf32> to vector<128x512xf32>
    %cst_20 = arith.constant dense<0.000000e+00> : vector<8x512xf32>
    %24 = tpu.matmul %3, %23, %cst_20 {dimension_numbers = #tpu.dot_dimension_numbers<[1], [0], [0], [1], [0, 0, 1, 1], [], []>} : vector<8x128xf32>, vector<128x512xf32>, vector<8x512xf32> -> vector<8x512xf32>
    %25 = arith.addf %21, %24 : vector<8x512xf32>
    %26 = vector.extract_strided_slice %25 {offsets = [0, 0], sizes = [8, 128], strides = [1, 1]} : vector<8x512xf32> to vector<8x128xf32>
    %27 = arith.negf %26 : vector<8x128xf32>
    %28 = math.exp %27 : vector<8x128xf32>
    %cst_21 = arith.constant 1.000000e+00 : f32
    %29 = vector.broadcast %cst_21 : f32 to vector<8x128xf32>
    %30 = arith.addf %29, %28 : vector<8x128xf32>
    %31 = arith.divf %29, %30 : vector<8x128xf32>
    %32 = vector.extract_strided_slice %25 {offsets = [0, 128], sizes = [8, 128], strides = [1, 1]} : vector<8x512xf32> to vector<8x128xf32>
    %33 = arith.negf %32 : vector<8x128xf32>
    %34 = math.exp %33 : vector<8x128xf32>
    %cst_22 = arith.constant 1.000000e+00 : f32
    %35 = vector.broadcast %cst_22 : f32 to vector<8x128xf32>
    %36 = arith.addf %35, %34 : vector<8x128xf32>
    %37 = arith.divf %35, %36 : vector<8x128xf32>
    %38 = vector.extract_strided_slice %25 {offsets = [0, 256], sizes = [8, 128], strides = [1, 1]} : vector<8x512xf32> to vector<8x128xf32>
    %39 = math.tanh %38 : vector<8x128xf32>
    %40 = vector.extract_strided_slice %25 {offsets = [0, 384], sizes = [8, 128], strides = [1, 1]} : vector<8x512xf32> to vector<8x128xf32>
    %41 = arith.negf %40 : vector<8x128xf32>
    %42 = math.exp %41 : vector<8x128xf32>
    %cst_23 = arith.constant 1.000000e+00 : f32
    %43 = vector.broadcast %cst_23 : f32 to vector<8x128xf32>
    %44 = arith.addf %43, %42 : vector<8x128xf32>
    %45 = arith.divf %43, %44 : vector<8x128xf32>
    %46 = arith.mulf %37, %4 : vector<8x128xf32>
    %47 = arith.mulf %31, %39 : vector<8x128xf32>
    %48 = arith.addf %46, %47 : vector<8x128xf32>
    %49 = math.tanh %48 : vector<8x128xf32>
    %50 = arith.mulf %45, %49 : vector<8x128xf32>
    %51 = arith.addi %6, %c0_i32_14 : i32
    %52 = arith.index_cast %51 : i32 to index
    %c0_24 = arith.constant 0 : index
    %c0_25 = arith.constant 0 : index
    %53 = vector.load %arg9[%52, %c0_24, %c0_25] : memref<8x8x128xf32, #tpu.memory_space<vmem>>, vector<1x8x128xf32>
    %54 = vector.shape_cast %53 : vector<1x8x128xf32> to vector<8x128xf32>
    %55 = vector.shape_cast %50 : vector<8x128xf32> to vector<1x8x128xf32>
    tpu.vector_store %arg9[%52, %c0_24, %c0_25], %55 {strides = array<i32>} : memref<8x8x128xf32, #tpu.memory_space<vmem>>, vector<1x8x128xf32>,
    %c1_i32 = arith.constant 1 : i32
    %56 = arith.index_cast %c1_i32 : i32 to index
    %c0_26 = arith.constant 0 : index
    %c0_27 = arith.constant 0 : index
    %57 = vector.load %arg10[%56, %c0_26, %c0_27] : memref<8x8x512xf32, #tpu.memory_space<vmem>>, vector<1x8x512xf32>
    %58 = vector.shape_cast %57 : vector<1x8x512xf32> to vector<8x512xf32>
    %c0_28 = arith.constant 0 : index
    %c0_29 = arith.constant 0 : index
    %c0_30 = arith.constant 0 : index
    %59 = vector.load %arg4[%c0_28, %c0_29, %c0_30] : memref<1x128x512xf32, #tpu.memory_space<vmem>>, vector<1x128x512xf32>
    %60 = vector.shape_cast %59 : vector<1x128x512xf32> to vector<128x512xf32>
    %cst_31 = arith.constant dense<0.000000e+00> : vector<8x512xf32>
    %61 = tpu.matmul %50, %60, %cst_31 {dimension_numbers = #tpu.dot_dimension_numbers<[1], [0], [0], [1], [0, 0, 1, 1], [], []>} : vector<8x128xf32>, vector<128x512xf32>, vector<8x512xf32> -> vector<8x512xf32>
    %62 = arith.addf %58, %61 : vector<8x512xf32>
    %63 = vector.extract_strided_slice %62 {offsets = [0, 0], sizes = [8, 128], strides = [1, 1]} : vector<8x512xf32> to vector<8x128xf32>
    %64 = arith.negf %63 : vector<8x128xf32>
    %65 = math.exp %64 : vector<8x128xf32>
    %cst_32 = arith.constant 1.000000e+00 : f32
    %66 = vector.broadcast %cst_32 : f32 to vector<8x128xf32>
    %67 = arith.addf %66, %65 : vector<8x128xf32>
    %68 = arith.divf %66, %67 : vector<8x128xf32>
    %69 = vector.extract_strided_slice %62 {offsets = [0, 128], sizes = [8, 128], strides = [1, 1]} : vector<8x512xf32> to vector<8x128xf32>
    %70 = arith.negf %69 : vector<8x128xf32>
    %71 = math.exp %70 : vector<8x128xf32>
    %cst_33 = arith.constant 1.000000e+00 : f32
    %72 = vector.broadcast %cst_33 : f32 to vector<8x128xf32>
    %73 = arith.addf %72, %71 : vector<8x128xf32>
    %74 = arith.divf %72, %73 : vector<8x128xf32>
    %75 = vector.extract_strided_slice %62 {offsets = [0, 256], sizes = [8, 128], strides = [1, 1]} : vector<8x512xf32> to vector<8x128xf32>
    %76 = math.tanh %75 : vector<8x128xf32>
    %77 = vector.extract_strided_slice %62 {offsets = [0, 384], sizes = [8, 128], strides = [1, 1]} : vector<8x512xf32> to vector<8x128xf32>
    %78 = arith.negf %77 : vector<8x128xf32>
    %79 = math.exp %78 : vector<8x128xf32>
    %cst_34 = arith.constant 1.000000e+00 : f32
    %80 = vector.broadcast %cst_34 : f32 to vector<8x128xf32>
    %81 = arith.addf %80, %79 : vector<8x128xf32>
    %82 = arith.divf %80, %81 : vector<8x128xf32>
    %83 = arith.mulf %74, %48 : vector<8x128xf32>
    %84 = arith.mulf %68, %76 : vector<8x128xf32>
    %85 = arith.addf %83, %84 : vector<8x128xf32>
    %86 = math.tanh %85 : vector<8x128xf32>
    %87 = arith.mulf %82, %86 : vector<8x128xf32>
    %88 = arith.addi %6, %c1_i32 : i32
    %89 = arith.index_cast %88 : i32 to index
    %c0_35 = arith.constant 0 : index
    %c0_36 = arith.constant 0 : index
    %90 = vector.load %arg9[%89, %c0_35, %c0_36] : memref<8x8x128xf32, #tpu.memory_space<vmem>>, vector<1x8x128xf32>
    %91 = vector.shape_cast %90 : vector<1x8x128xf32> to vector<8x128xf32>
    %92 = vector.shape_cast %87 : vector<8x128xf32> to vector<1x8x128xf32>
    tpu.vector_store %arg9[%89, %c0_35, %c0_36], %92 {strides = array<i32>} : memref<8x8x128xf32, #tpu.memory_space<vmem>>, vector<1x8x128xf32>,
    %c2_i32 = arith.constant 2 : i32
    %93 = arith.index_cast %c2_i32 : i32 to index
    %c0_37 = arith.constant 0 : index
    %c0_38 = arith.constant 0 : index
    %94 = vector.load %arg10[%93, %c0_37, %c0_38] : memref<8x8x512xf32, #tpu.memory_space<vmem>>, vector<1x8x512xf32>
    %95 = vector.shape_cast %94 : vector<1x8x512xf32> to vector<8x512xf32>
    %c0_39 = arith.constant 0 : index
    %c0_40 = arith.constant 0 : index
    %c0_41 = arith.constant 0 : index
    %96 = vector.load %arg4[%c0_39, %c0_40, %c0_41] : memref<1x128x512xf32, #tpu.memory_space<vmem>>, vector<1x128x512xf32>
    %97 = vector.shape_cast %96 : vector<1x128x512xf32> to vector<128x512xf32>
    %cst_42 = arith.constant dense<0.000000e+00> : vector<8x512xf32>
    %98 = tpu.matmul %87, %97, %cst_42 {dimension_numbers = #tpu.dot_dimension_numbers<[1], [0], [0], [1], [0, 0, 1, 1], [], []>} : vector<8x128xf32>, vector<128x512xf32>, vector<8x512xf32> -> vector<8x512xf32>
    %99 = arith.addf %95, %98 : vector<8x512xf32>
    %100 = vector.extract_strided_slice %99 {offsets = [0, 0], sizes = [8, 128], strides = [1, 1]} : vector<8x512xf32> to vector<8x128xf32>
    %101 = arith.negf %100 : vector<8x128xf32>
    %102 = math.exp %101 : vector<8x128xf32>
    %cst_43 = arith.constant 1.000000e+00 : f32
    %103 = vector.broadcast %cst_43 : f32 to vector<8x128xf32>
    %104 = arith.addf %103, %102 : vector<8x128xf32>
    %105 = arith.divf %103, %104 : vector<8x128xf32>
    %106 = vector.extract_strided_slice %99 {offsets = [0, 128], sizes = [8, 128], strides = [1, 1]} : vector<8x512xf32> to vector<8x128xf32>
    %107 = arith.negf %106 : vector<8x128xf32>
    %108 = math.exp %107 : vector<8x128xf32>
    %cst_44 = arith.constant 1.000000e+00 : f32
    %109 = vector.broadcast %cst_44 : f32 to vector<8x128xf32>
    %110 = arith.addf %109, %108 : vector<8x128xf32>
    %111 = arith.divf %109, %110 : vector<8x128xf32>
    %112 = vector.extract_strided_slice %99 {offsets = [0, 256], sizes = [8, 128], strides = [1, 1]} : vector<8x512xf32> to vector<8x128xf32>
    %113 = math.tanh %112 : vector<8x128xf32>
    %114 = vector.extract_strided_slice %99 {offsets = [0, 384], sizes = [8, 128], strides = [1, 1]} : vector<8x512xf32> to vector<8x128xf32>
    %115 = arith.negf %114 : vector<8x128xf32>
    %116 = math.exp %115 : vector<8x128xf32>
    %cst_45 = arith.constant 1.000000e+00 : f32
    %117 = vector.broadcast %cst_45 : f32 to vector<8x128xf32>
    %118 = arith.addf %117, %116 : vector<8x128xf32>
    %119 = arith.divf %117, %118 : vector<8x128xf32>
    %120 = arith.mulf %111, %85 : vector<8x128xf32>
    %121 = arith.mulf %105, %113 : vector<8x128xf32>
    %122 = arith.addf %120, %121 : vector<8x128xf32>
    %123 = math.tanh %122 : vector<8x128xf32>
    %124 = arith.mulf %119, %123 : vector<8x128xf32>
    %125 = arith.addi %6, %c2_i32 : i32
    %126 = arith.index_cast %125 : i32 to index
    %c0_46 = arith.constant 0 : index
    %c0_47 = arith.constant 0 : index
    %127 = vector.load %arg9[%126, %c0_46, %c0_47] : memref<8x8x128xf32, #tpu.memory_space<vmem>>, vector<1x8x128xf32>
    %128 = vector.shape_cast %127 : vector<1x8x128xf32> to vector<8x128xf32>
    %129 = vector.shape_cast %124 : vector<8x128xf32> to vector<1x8x128xf32>
    tpu.vector_store %arg9[%126, %c0_46, %c0_47], %129 {strides = array<i32>} : memref<8x8x128xf32, #tpu.memory_space<vmem>>, vector<1x8x128xf32>,
    %c3_i32 = arith.constant 3 : i32
    %130 = arith.index_cast %c3_i32 : i32 to index
    %c0_48 = arith.constant 0 : index
    %c0_49 = arith.constant 0 : index
    %131 = vector.load %arg10[%130, %c0_48, %c0_49] : memref<8x8x512xf32, #tpu.memory_space<vmem>>, vector<1x8x512xf32>
    %132 = vector.shape_cast %131 : vector<1x8x512xf32> to vector<8x512xf32>
    %c0_50 = arith.constant 0 : index
    %c0_51 = arith.constant 0 : index
    %c0_52 = arith.constant 0 : index
    %133 = vector.load %arg4[%c0_50, %c0_51, %c0_52] : memref<1x128x512xf32, #tpu.memory_space<vmem>>, vector<1x128x512xf32>
    %134 = vector.shape_cast %133 : vector<1x128x512xf32> to vector<128x512xf32>
    %cst_53 = arith.constant dense<0.000000e+00> : vector<8x512xf32>
    %135 = tpu.matmul %124, %134, %cst_53 {dimension_numbers = #tpu.dot_dimension_numbers<[1], [0], [0], [1], [0, 0, 1, 1], [], []>} : vector<8x128xf32>, vector<128x512xf32>, vector<8x512xf32> -> vector<8x512xf32>
    %136 = arith.addf %132, %135 : vector<8x512xf32>
    %137 = vector.extract_strided_slice %136 {offsets = [0, 0], sizes = [8, 128], strides = [1, 1]} : vector<8x512xf32> to vector<8x128xf32>
    %138 = arith.negf %137 : vector<8x128xf32>
    %139 = math.exp %138 : vector<8x128xf32>
    %cst_54 = arith.constant 1.000000e+00 : f32
    %140 = vector.broadcast %cst_54 : f32 to vector<8x128xf32>
    %141 = arith.addf %140, %139 : vector<8x128xf32>
    %142 = arith.divf %140, %141 : vector<8x128xf32>
    %143 = vector.extract_strided_slice %136 {offsets = [0, 128], sizes = [8, 128], strides = [1, 1]} : vector<8x512xf32> to vector<8x128xf32>
    %144 = arith.negf %143 : vector<8x128xf32>
    %145 = math.exp %144 : vector<8x128xf32>
    %cst_55 = arith.constant 1.000000e+00 : f32
    %146 = vector.broadcast %cst_55 : f32 to vector<8x128xf32>
    %147 = arith.addf %146, %145 : vector<8x128xf32>
    %148 = arith.divf %146, %147 : vector<8x128xf32>
    %149 = vector.extract_strided_slice %136 {offsets = [0, 256], sizes = [8, 128], strides = [1, 1]} : vector<8x512xf32> to vector<8x128xf32>
    %150 = math.tanh %149 : vector<8x128xf32>
    %151 = vector.extract_strided_slice %136 {offsets = [0, 384], sizes = [8, 128], strides = [1, 1]} : vector<8x512xf32> to vector<8x128xf32>
    %152 = arith.negf %151 : vector<8x128xf32>
    %153 = math.exp %152 : vector<8x128xf32>
    %cst_56 = arith.constant 1.000000e+00 : f32
    %154 = vector.broadcast %cst_56 : f32 to vector<8x128xf32>
    %155 = arith.addf %154, %153 : vector<8x128xf32>
    %156 = arith.divf %154, %155 : vector<8x128xf32>
    %157 = arith.mulf %148, %122 : vector<8x128xf32>
    %158 = arith.mulf %142, %150 : vector<8x128xf32>
    %159 = arith.addf %157, %158 : vector<8x128xf32>
    %160 = math.tanh %159 : vector<8x128xf32>
    %161 = arith.mulf %156, %160 : vector<8x128xf32>
    %162 = arith.addi %6, %c3_i32 : i32
    %163 = arith.index_cast %162 : i32 to index
    %c0_57 = arith.constant 0 : index
    %c0_58 = arith.constant 0 : index
    %164 = vector.load %arg9[%163, %c0_57, %c0_58] : memref<8x8x128xf32, #tpu.memory_space<vmem>>, vector<1x8x128xf32>
    %165 = vector.shape_cast %164 : vector<1x8x128xf32> to vector<8x128xf32>
    %166 = vector.shape_cast %161 : vector<8x128xf32> to vector<1x8x128xf32>
    tpu.vector_store %arg9[%163, %c0_57, %c0_58], %166 {strides = array<i32>} : memref<8x8x128xf32, #tpu.memory_space<vmem>>, vector<1x8x128xf32>,
    %c4_i32 = arith.constant 4 : i32
    %167 = arith.index_cast %c4_i32 : i32 to index
    %c0_59 = arith.constant 0 : index
    %c0_60 = arith.constant 0 : index
    %168 = vector.load %arg10[%167, %c0_59, %c0_60] : memref<8x8x512xf32, #tpu.memory_space<vmem>>, vector<1x8x512xf32>
    %169 = vector.shape_cast %168 : vector<1x8x512xf32> to vector<8x512xf32>
    %c0_61 = arith.constant 0 : index
    %c0_62 = arith.constant 0 : index
    %c0_63 = arith.constant 0 : index
    %170 = vector.load %arg4[%c0_61, %c0_62, %c0_63] : memref<1x128x512xf32, #tpu.memory_space<vmem>>, vector<1x128x512xf32>
    %171 = vector.shape_cast %170 : vector<1x128x512xf32> to vector<128x512xf32>
    %cst_64 = arith.constant dense<0.000000e+00> : vector<8x512xf32>
    %172 = tpu.matmul %161, %171, %cst_64 {dimension_numbers = #tpu.dot_dimension_numbers<[1], [0], [0], [1], [0, 0, 1, 1], [], []>} : vector<8x128xf32>, vector<128x512xf32>, vector<8x512xf32> -> vector<8x512xf32>
    %173 = arith.addf %169, %172 : vector<8x512xf32>
    %174 = vector.extract_strided_slice %173 {offsets = [0, 0], sizes = [8, 128], strides = [1, 1]} : vector<8x512xf32> to vector<8x128xf32>
    %175 = arith.negf %174 : vector<8x128xf32>
    %176 = math.exp %175 : vector<8x128xf32>
    %cst_65 = arith.constant 1.000000e+00 : f32
    %177 = vector.broadcast %cst_65 : f32 to vector<8x128xf32>
    %178 = arith.addf %177, %176 : vector<8x128xf32>
    %179 = arith.divf %177, %178 : vector<8x128xf32>
    %180 = vector.extract_strided_slice %173 {offsets = [0, 128], sizes = [8, 128], strides = [1, 1]} : vector<8x512xf32> to vector<8x128xf32>
    %181 = arith.negf %180 : vector<8x128xf32>
    %182 = math.exp %181 : vector<8x128xf32>
    %cst_66 = arith.constant 1.000000e+00 : f32
    %183 = vector.broadcast %cst_66 : f32 to vector<8x128xf32>
    %184 = arith.addf %183, %182 : vector<8x128xf32>
    %185 = arith.divf %183, %184 : vector<8x128xf32>
    %186 = vector.extract_strided_slice %173 {offsets = [0, 256], sizes = [8, 128], strides = [1, 1]} : vector<8x512xf32> to vector<8x128xf32>
    %187 = math.tanh %186 : vector<8x128xf32>
    %188 = vector.extract_strided_slice %173 {offsets = [0, 384], sizes = [8, 128], strides = [1, 1]} : vector<8x512xf32> to vector<8x128xf32>
    %189 = arith.negf %188 : vector<8x128xf32>
    %190 = math.exp %189 : vector<8x128xf32>
    %cst_67 = arith.constant 1.000000e+00 : f32
    %191 = vector.broadcast %cst_67 : f32 to vector<8x128xf32>
    %192 = arith.addf %191, %190 : vector<8x128xf32>
    %193 = arith.divf %191, %192 : vector<8x128xf32>
    %194 = arith.mulf %185, %159 : vector<8x128xf32>
    %195 = arith.mulf %179, %187 : vector<8x128xf32>
    %196 = arith.addf %194, %195 : vector<8x128xf32>
    %197 = math.tanh %196 : vector<8x128xf32>
    %198 = arith.mulf %193, %197 : vector<8x128xf32>
    %199 = arith.addi %6, %c4_i32 : i32
    %200 = arith.index_cast %199 : i32 to index
    %c0_68 = arith.constant 0 : index
    %c0_69 = arith.constant 0 : index
    %201 = vector.load %arg9[%200, %c0_68, %c0_69] : memref<8x8x128xf32, #tpu.memory_space<vmem>>, vector<1x8x128xf32>
    %202 = vector.shape_cast %201 : vector<1x8x128xf32> to vector<8x128xf32>
    %203 = vector.shape_cast %198 : vector<8x128xf32> to vector<1x8x128xf32>
    tpu.vector_store %arg9[%200, %c0_68, %c0_69], %203 {strides = array<i32>} : memref<8x8x128xf32, #tpu.memory_space<vmem>>, vector<1x8x128xf32>,
    %c5_i32 = arith.constant 5 : i32
    %204 = arith.index_cast %c5_i32 : i32 to index
    %c0_70 = arith.constant 0 : index
    %c0_71 = arith.constant 0 : index
    %205 = vector.load %arg10[%204, %c0_70, %c0_71] : memref<8x8x512xf32, #tpu.memory_space<vmem>>, vector<1x8x512xf32>
    %206 = vector.shape_cast %205 : vector<1x8x512xf32> to vector<8x512xf32>
    %c0_72 = arith.constant 0 : index
    %c0_73 = arith.constant 0 : index
    %c0_74 = arith.constant 0 : index
    %207 = vector.load %arg4[%c0_72, %c0_73, %c0_74] : memref<1x128x512xf32, #tpu.memory_space<vmem>>, vector<1x128x512xf32>
    %208 = vector.shape_cast %207 : vector<1x128x512xf32> to vector<128x512xf32>
    %cst_75 = arith.constant dense<0.000000e+00> : vector<8x512xf32>
    %209 = tpu.matmul %198, %208, %cst_75 {dimension_numbers = #tpu.dot_dimension_numbers<[1], [0], [0], [1], [0, 0, 1, 1], [], []>} : vector<8x128xf32>, vector<128x512xf32>, vector<8x512xf32> -> vector<8x512xf32>
    %210 = arith.addf %206, %209 : vector<8x512xf32>
    %211 = vector.extract_strided_slice %210 {offsets = [0, 0], sizes = [8, 128], strides = [1, 1]} : vector<8x512xf32> to vector<8x128xf32>
    %212 = arith.negf %211 : vector<8x128xf32>
    %213 = math.exp %212 : vector<8x128xf32>
    %cst_76 = arith.constant 1.000000e+00 : f32
    %214 = vector.broadcast %cst_76 : f32 to vector<8x128xf32>
    %215 = arith.addf %214, %213 : vector<8x128xf32>
    %216 = arith.divf %214, %215 : vector<8x128xf32>
    %217 = vector.extract_strided_slice %210 {offsets = [0, 128], sizes = [8, 128], strides = [1, 1]} : vector<8x512xf32> to vector<8x128xf32>
    %218 = arith.negf %217 : vector<8x128xf32>
    %219 = math.exp %218 : vector<8x128xf32>
    %cst_77 = arith.constant 1.000000e+00 : f32
    %220 = vector.broadcast %cst_77 : f32 to vector<8x128xf32>
    %221 = arith.addf %220, %219 : vector<8x128xf32>
    %222 = arith.divf %220, %221 : vector<8x128xf32>
    %223 = vector.extract_strided_slice %210 {offsets = [0, 256], sizes = [8, 128], strides = [1, 1]} : vector<8x512xf32> to vector<8x128xf32>
    %224 = math.tanh %223 : vector<8x128xf32>
    %225 = vector.extract_strided_slice %210 {offsets = [0, 384], sizes = [8, 128], strides = [1, 1]} : vector<8x512xf32> to vector<8x128xf32>
    %226 = arith.negf %225 : vector<8x128xf32>
    %227 = math.exp %226 : vector<8x128xf32>
    %cst_78 = arith.constant 1.000000e+00 : f32
    %228 = vector.broadcast %cst_78 : f32 to vector<8x128xf32>
    %229 = arith.addf %228, %227 : vector<8x128xf32>
    %230 = arith.divf %228, %229 : vector<8x128xf32>
    %231 = arith.mulf %222, %196 : vector<8x128xf32>
    %232 = arith.mulf %216, %224 : vector<8x128xf32>
    %233 = arith.addf %231, %232 : vector<8x128xf32>
    %234 = math.tanh %233 : vector<8x128xf32>
    %235 = arith.mulf %230, %234 : vector<8x128xf32>
    %236 = arith.addi %6, %c5_i32 : i32
    %237 = arith.index_cast %236 : i32 to index
    %c0_79 = arith.constant 0 : index
    %c0_80 = arith.constant 0 : index
    %238 = vector.load %arg9[%237, %c0_79, %c0_80] : memref<8x8x128xf32, #tpu.memory_space<vmem>>, vector<1x8x128xf32>
    %239 = vector.shape_cast %238 : vector<1x8x128xf32> to vector<8x128xf32>
    %240 = vector.shape_cast %235 : vector<8x128xf32> to vector<1x8x128xf32>
    tpu.vector_store %arg9[%237, %c0_79, %c0_80], %240 {strides = array<i32>} : memref<8x8x128xf32, #tpu.memory_space<vmem>>, vector<1x8x128xf32>,
    %c6_i32 = arith.constant 6 : i32
    %241 = arith.index_cast %c6_i32 : i32 to index
    %c0_81 = arith.constant 0 : index
    %c0_82 = arith.constant 0 : index
    %242 = vector.load %arg10[%241, %c0_81, %c0_82] : memref<8x8x512xf32, #tpu.memory_space<vmem>>, vector<1x8x512xf32>
    %243 = vector.shape_cast %242 : vector<1x8x512xf32> to vector<8x512xf32>
    %c0_83 = arith.constant 0 : index
    %c0_84 = arith.constant 0 : index
    %c0_85 = arith.constant 0 : index
    %244 = vector.load %arg4[%c0_83, %c0_84, %c0_85] : memref<1x128x512xf32, #tpu.memory_space<vmem>>, vector<1x128x512xf32>
    %245 = vector.shape_cast %244 : vector<1x128x512xf32> to vector<128x512xf32>
    %cst_86 = arith.constant dense<0.000000e+00> : vector<8x512xf32>
    %246 = tpu.matmul %235, %245, %cst_86 {dimension_numbers = #tpu.dot_dimension_numbers<[1], [0], [0], [1], [0, 0, 1, 1], [], []>} : vector<8x128xf32>, vector<128x512xf32>, vector<8x512xf32> -> vector<8x512xf32>
    %247 = arith.addf %243, %246 : vector<8x512xf32>
    %248 = vector.extract_strided_slice %247 {offsets = [0, 0], sizes = [8, 128], strides = [1, 1]} : vector<8x512xf32> to vector<8x128xf32>
    %249 = arith.negf %248 : vector<8x128xf32>
    %250 = math.exp %249 : vector<8x128xf32>
    %cst_87 = arith.constant 1.000000e+00 : f32
    %251 = vector.broadcast %cst_87 : f32 to vector<8x128xf32>
    %252 = arith.addf %251, %250 : vector<8x128xf32>
    %253 = arith.divf %251, %252 : vector<8x128xf32>
    %254 = vector.extract_strided_slice %247 {offsets = [0, 128], sizes = [8, 128], strides = [1, 1]} : vector<8x512xf32> to vector<8x128xf32>
    %255 = arith.negf %254 : vector<8x128xf32>
    %256 = math.exp %255 : vector<8x128xf32>
    %cst_88 = arith.constant 1.000000e+00 : f32
    %257 = vector.broadcast %cst_88 : f32 to vector<8x128xf32>
    %258 = arith.addf %257, %256 : vector<8x128xf32>
    %259 = arith.divf %257, %258 : vector<8x128xf32>
    %260 = vector.extract_strided_slice %247 {offsets = [0, 256], sizes = [8, 128], strides = [1, 1]} : vector<8x512xf32> to vector<8x128xf32>
    %261 = math.tanh %260 : vector<8x128xf32>
    %262 = vector.extract_strided_slice %247 {offsets = [0, 384], sizes = [8, 128], strides = [1, 1]} : vector<8x512xf32> to vector<8x128xf32>
    %263 = arith.negf %262 : vector<8x128xf32>
    %264 = math.exp %263 : vector<8x128xf32>
    %cst_89 = arith.constant 1.000000e+00 : f32
    %265 = vector.broadcast %cst_89 : f32 to vector<8x128xf32>
    %266 = arith.addf %265, %264 : vector<8x128xf32>
    %267 = arith.divf %265, %266 : vector<8x128xf32>
    %268 = arith.mulf %259, %233 : vector<8x128xf32>
    %269 = arith.mulf %253, %261 : vector<8x128xf32>
    %270 = arith.addf %268, %269 : vector<8x128xf32>
    %271 = math.tanh %270 : vector<8x128xf32>
    %272 = arith.mulf %267, %271 : vector<8x128xf32>
    %273 = arith.addi %6, %c6_i32 : i32
    %274 = arith.index_cast %273 : i32 to index
    %c0_90 = arith.constant 0 : index
    %c0_91 = arith.constant 0 : index
    %275 = vector.load %arg9[%274, %c0_90, %c0_91] : memref<8x8x128xf32, #tpu.memory_space<vmem>>, vector<1x8x128xf32>
    %276 = vector.shape_cast %275 : vector<1x8x128xf32> to vector<8x128xf32>
    %277 = vector.shape_cast %272 : vector<8x128xf32> to vector<1x8x128xf32>
    tpu.vector_store %arg9[%274, %c0_90, %c0_91], %277 {strides = array<i32>} : memref<8x8x128xf32, #tpu.memory_space<vmem>>, vector<1x8x128xf32>,
    %c7_i32 = arith.constant 7 : i32
    %278 = arith.index_cast %c7_i32 : i32 to index
    %c0_92 = arith.constant 0 : index
    %c0_93 = arith.constant 0 : index
    %279 = vector.load %arg10[%278, %c0_92, %c0_93] : memref<8x8x512xf32, #tpu.memory_space<vmem>>, vector<1x8x512xf32>
    %280 = vector.shape_cast %279 : vector<1x8x512xf32> to vector<8x512xf32>
    %c0_94 = arith.constant 0 : index
    %c0_95 = arith.constant 0 : index
    %c0_96 = arith.constant 0 : index
    %281 = vector.load %arg4[%c0_94, %c0_95, %c0_96] : memref<1x128x512xf32, #tpu.memory_space<vmem>>, vector<1x128x512xf32>
    %282 = vector.shape_cast %281 : vector<1x128x512xf32> to vector<128x512xf32>
    %cst_97 = arith.constant dense<0.000000e+00> : vector<8x512xf32>
    %283 = tpu.matmul %272, %282, %cst_97 {dimension_numbers = #tpu.dot_dimension_numbers<[1], [0], [0], [1], [0, 0, 1, 1], [], []>} : vector<8x128xf32>, vector<128x512xf32>, vector<8x512xf32> -> vector<8x512xf32>
    %284 = arith.addf %280, %283 : vector<8x512xf32>
    %285 = vector.extract_strided_slice %284 {offsets = [0, 0], sizes = [8, 128], strides = [1, 1]} : vector<8x512xf32> to vector<8x128xf32>
    %286 = arith.negf %285 : vector<8x128xf32>
    %287 = math.exp %286 : vector<8x128xf32>
    %cst_98 = arith.constant 1.000000e+00 : f32
    %288 = vector.broadcast %cst_98 : f32 to vector<8x128xf32>
    %289 = arith.addf %288, %287 : vector<8x128xf32>
    %290 = arith.divf %288, %289 : vector<8x128xf32>
    %291 = vector.extract_strided_slice %284 {offsets = [0, 128], sizes = [8, 128], strides = [1, 1]} : vector<8x512xf32> to vector<8x128xf32>
    %292 = arith.negf %291 : vector<8x128xf32>
    %293 = math.exp %292 : vector<8x128xf32>
    %cst_99 = arith.constant 1.000000e+00 : f32
    %294 = vector.broadcast %cst_99 : f32 to vector<8x128xf32>
    %295 = arith.addf %294, %293 : vector<8x128xf32>
    %296 = arith.divf %294, %295 : vector<8x128xf32>
    %297 = vector.extract_strided_slice %284 {offsets = [0, 256], sizes = [8, 128], strides = [1, 1]} : vector<8x512xf32> to vector<8x128xf32>
    %298 = math.tanh %297 : vector<8x128xf32>
    %299 = vector.extract_strided_slice %284 {offsets = [0, 384], sizes = [8, 128], strides = [1, 1]} : vector<8x512xf32> to vector<8x128xf32>
    %300 = arith.negf %299 : vector<8x128xf32>
    %301 = math.exp %300 : vector<8x128xf32>
    %cst_100 = arith.constant 1.000000e+00 : f32
    %302 = vector.broadcast %cst_100 : f32 to vector<8x128xf32>
    %303 = arith.addf %302, %301 : vector<8x128xf32>
    %304 = arith.divf %302, %303 : vector<8x128xf32>
    %305 = arith.mulf %296, %270 : vector<8x128xf32>
    %306 = arith.mulf %290, %298 : vector<8x128xf32>
    %307 = arith.addf %305, %306 : vector<8x128xf32>
    %308 = math.tanh %307 : vector<8x128xf32>
    %309 = arith.mulf %304, %308 : vector<8x128xf32>
    %310 = arith.addi %6, %c7_i32 : i32
    %311 = arith.index_cast %310 : i32 to index
    %c0_101 = arith.constant 0 : index
    %c0_102 = arith.constant 0 : index
    %312 = vector.load %arg9[%311, %c0_101, %c0_102] : memref<8x8x128xf32, #tpu.memory_space<vmem>>, vector<1x8x128xf32>
    %313 = vector.shape_cast %312 : vector<1x8x128xf32> to vector<8x128xf32>
    %314 = vector.shape_cast %309 : vector<8x128xf32> to vector<1x8x128xf32>
    tpu.vector_store %arg9[%311, %c0_101, %c0_102], %314 {strides = array<i32>} : memref<8x8x128xf32, #tpu.memory_space<vmem>>, vector<1x8x128xf32>,
    %c8_i32_103 = arith.constant 8 : i32
    %c1_i32_104 = arith.constant 1 : i32
    %c0_105 = arith.constant 0 : index
    %c0_106 = arith.constant 0 : index
    %315 = vector.load %arg6[%c0_105, %c0_106] : memref<128x128xf32, #tpu.memory_space<vmem>>, vector<128x128xf32>
    %cst_107 = arith.constant dense<0.000000e+00> : vector<8x128xf32>
    %316 = tpu.matmul %309, %315, %cst_107 {dimension_numbers = #tpu.dot_dimension_numbers<[1], [0], [0], [1], [0, 0, 1, 1], [], []>} : vector<8x128xf32>, vector<128x128xf32>, vector<8x128xf32> -> vector<8x128xf32>
    %c0_108 = arith.constant 0 : index
    %c0_109 = arith.constant 0 : index
    %317 = vector.load %arg7[%c0_108, %c0_109] : memref<1x128xf32, #tpu.memory_space<vmem>>, vector<1x128xf32>
    %318 = vector.broadcast %317 : vector<1x128xf32> to vector<8x128xf32>
    %319 = arith.addf %316, %318 : vector<8x128xf32>
    %c0_110 = arith.constant 0 : index
    %c0_111 = arith.constant 0 : index
    %c0_112 = arith.constant 0 : index
    %320 = vector.load %arg8[%c0_110, %c0_111, %c0_112] : memref<1x8x128xf32, #tpu.memory_space<vmem>>, vector<1x8x128xf32>
    %321 = vector.shape_cast %320 : vector<1x8x128xf32> to vector<8x128xf32>
    %322 = vector.shape_cast %319 : vector<8x128xf32> to vector<1x8x128xf32>
    tpu.vector_store %arg8[%c0_110, %c0_111, %c0_112], %322 {strides = array<i32>} : memref<1x8x128xf32, #tpu.memory_space<vmem>>, vector<1x8x128xf32>,
    return
  }
  func.func @transform_0(%arg0: i32, %arg1: i32) -> (i32, i32, i32) {
    %c0_i32 = arith.constant 0 : i32
    %c0_i32_0 = arith.constant 0 : i32
    %c0_i32_1 = arith.constant 0 : i32
    return %c0_i32, %arg0, %c0_i32_0 : i32, i32, i32
  }
  func.func @transform_1(%arg0: i32, %arg1: i32) -> (i32, i32, i32) {
    %c0_i32 = arith.constant 0 : i32
    %c0_i32_0 = arith.constant 0 : i32
    %c0_i32_1 = arith.constant 0 : i32
    return %arg1, %c0_i32, %c0_i32_0 : i32, i32, i32
  }
  func.func @transform_2(%arg0: i32, %arg1: i32) -> (i32, i32, i32) {
    %c0_i32 = arith.constant 0 : i32
    %c0_i32_0 = arith.constant 0 : i32
    %c0_i32_1 = arith.constant 0 : i32
    return %arg1, %c0_i32, %c0_i32_0 : i32, i32, i32
  }
  func.func @transform_3(%arg0: i32, %arg1: i32) -> (i32, i32, i32) {
    %c0_i32 = arith.constant 0 : i32
    %c0_i32_0 = arith.constant 0 : i32
    %c0_i32_1 = arith.constant 0 : i32
    return %arg1, %c0_i32, %c0_i32_0 : i32, i32, i32
  }
  func.func @transform_4(%arg0: i32, %arg1: i32) -> (i32, i32) {
    %c0_i32 = arith.constant 0 : i32
    %c0_i32_0 = arith.constant 0 : i32
    %c0_i32_1 = arith.constant 0 : i32
    return %c0_i32, %c0_i32_0 : i32, i32
  }
  func.func @transform_5(%arg0: i32, %arg1: i32) -> (i32, i32) {
    %c0_i32 = arith.constant 0 : i32
    %c0_i32_0 = arith.constant 0 : i32
    %c0_i32_1 = arith.constant 0 : i32
    return %c0_i32, %c0_i32_0 : i32, i32
  }
  func.func @transform_6(%arg0: i32, %arg1: i32) -> (i32, i32, i32) {
    %c0_i32 = arith.constant 0 : i32
    %c0_i32_0 = arith.constant 0 : i32
    return %arg1, %arg0, %c0_i32 : i32, i32, i32
  }
}

</mosaic_0001>

<llo_original>
// kernel: tpu_custom_call.1
$region0: #{tpu_custom_call.1}
  #allocation0 [shape = 'u32[]', space=smem, size = 0x4, offset = 0x4, fixed_abs, tag = 'smem constant byte address 0x4 - core index']
  #allocation1 [shape = 'u32[144,128]{1,0:T(1,128)}', space=vmem, size = 0x12000, scoped, tag = 'internal scratch']
  #allocation2 [shape = 'f32[8,8,128]{2,1,0:T(8,128)}', space=vmem, size = 0x8000, scoped, tag = 'scratch operand']
  #allocation3 [shape = 'f32[8,8,512]{2,1,0:T(8,128)}', space=vmem, size = 0x20000, scoped, tag = 'scratch operand']
  %s0 = inlined_call_operand.hbm [shape: f32[8,8,128], index: 0, kind: input, shape index: {}]
  %s1 = inlined_call_operand.hbm [shape: f32[2,128,512], index: 1, kind: input, shape index: {}]
  %s2 = inlined_call_operand.hbm [shape: f32[2,128,512], index: 2, kind: input, shape index: {}]
  %s3 = inlined_call_operand.hbm [shape: f32[2,1,512], index: 3, kind: input, shape index: {}]
  %s4 = inlined_call_operand.hbm [shape: f32[128,128], index: 4, kind: input, shape index: {}]
  %s5 = inlined_call_operand.vmem [shape: f32[1,128], index: 5, kind: input, shape index: {}]
  %s6 = inlined_call_operand.hbm [shape: f32[2,8,128], index: 6, kind: output, shape index: {}]
  %s7 = sld [smem:[#allocation0]]
  $region81: #{tpu_custom_call.1} parent=0
    _
  %s9 = ssub.s32 1, %s7
  %s10 = scalar_select 0, %s9, %s7
  $region1: #{tpu_custom_call.1} parent=0
    #allocation4 [shape = 'u8[32768]{0}', space=vmem, size = 0x8000, scoped, tag = 'input window, operand 0, single buffered']
    #allocation5 [shape = 's32[2]{0}', space=sflag, size = 0x8, scoped, tag = 'scoped memory for tpu_custom_call.1']
    #allocation6 [shape = 's32[2]{0}', space=sflag, size = 0x8, scoped, tag = 'scoped memory for tpu_custom_call.1']
    #allocation7 [shape = 'u8[524288]{0}', space=vmem, size = 0x80000, scoped, tag = 'input window, operand 1']
    #allocation8 [shape = 's32[2]{0}', space=sflag, size = 0x8, scoped, tag = 'scoped memory for tpu_custom_call.1']
    #allocation9 [shape = 'u8[524288]{0}', space=vmem, size = 0x80000, scoped, tag = 'input window, operand 2']
    #allocation10 [shape = 'u8[4096]{0}', space=vmem, size = 0x1000, scoped, tag = 'input window, operand 3']
    #allocation11 [shape = 's32[2]{0}', space=sflag, size = 0x8, scoped, tag = 'scoped memory for tpu_custom_call.1']
    #allocation12 [shape = 'u8[65536]{0}', space=vmem, size = 0x10000, scoped, tag = 'input window, operand 4, single buffered']
    #allocation13 [shape = 'u8[8192]{0}', space=vmem, size = 0x2000, scoped, tag = 'output window, operand 0']
    %11 = vsyncpa [#allocation5], 0
    %12 = vsyncpa [#allocation8], 0
    %s13 = scalar_lea.sflag [#allocation8], 1
    %14 = vsyncpa %s13, 0
    %15 = vsyncpa [#allocation11], 0
    %s16 = scalar_lea.sflag [#allocation11], 1
    %17 = vsyncpa %s16, 0
    %18 = vsyncpa [#allocation6], 0
    %s19 = scalar_lea.sflag [#allocation6], 1
    %20 = vsyncpa %s19, 0
    loop: start=0, step=1, limit=4
    $region2: #{tpu_custom_call.1} parent=1 // loop_pre_header
      _
    $region3: #{tpu_custom_call.1} parent=1 // loop_header
      %s22 = sphi 0, %s26
      %p23 = scmp.ge.s32.totalorder %s22, 4
      %s29 = sphi 0, %s41
      %s30 = sphi 0, %s37
      %s31 = sphi 0, %s29
      %s32 = sphi 0, %s30
      %s33 = sphi 0, %s31
      %s34 = sphi 0, %s32
      %s44 = sphi 0, %s46
      %s47 = sphi 0, %s44
      %s48 = sphi 0, %s47
      %s64 = sphi 0, %s48
      %s70 = sphi 0, %s72
      %s73 = sphi 0, %s70
      %s74 = sphi 0, %s73
      %s90 = sphi 0, %s74
      %s96 = sphi 0, %s98
      %s99 = sphi 0, %s96
      %s100 = sphi 0, %s99
      %s116 = sphi 0, %s100
      %s122 = sphi 0, %s124
      %s125 = sphi 0, %s122
      %s126 = sphi 0, %s125
      %s142 = sphi 0, %s126
      %s146 = sphi 0, %s146
      %s148 = sphi 0, %s146
      %s149 = sphi 0, %s148
      %s163 = sphi 0, %s149
      %s167 = sphi 0, %s167
      %s169 = sphi 0, %s167
      %s170 = sphi 0, %s169
      %s184 = sphi 0, %s170
      %s192 = sphi 0, %s194
      %s195 = sphi 0, %s192
      %s196 = sphi 0, %s195
      %s212 = sphi 0, %s196
    $region4: #{tpu_custom_call.1} parent=1 // loop_header_branch
      %25 = sbr.rel (%p23) target = $region8
    $region5: #{tpu_custom_call.1} parent=1 // loop_body
      %s27 = ssub.s32 %s22, 1
      %s28 = ssub.s32 %s22, 2
      %s35 = sadd.s32 1, %s30
      %p36 = scmp.ge.s32.totalorder %s35, 2
      %s37 = scalar_select %p36, 0, %s35
      %s38 = sadd.s32 1, %s29
      %s39 = scalar_select %p36, %s38, %s29
      %p40 = scmp.ge.s32.totalorder %s39, 1
      %s41 = scalar_select %p40, 0, %s39
      %s42 = ssub.s32 %s29, %s41
      %p43 = scmp.eq.s32.totalorder %s42, 0
      %s45 = sadd.s32 %s44, 1
      %s46 = scalar_select %p43, %s44, %s45
      %p49 = pneg %p43
      %p50 = scmp.eq.s32.totalorder %s22, 1
      %p51 = por %p49, %p50
      %p52 = scmp.ne.s32.totalorder %s44, %s47
      %p53 = scmp.eq.s32.totalorder %s22, 0
      %p54 = por %p52, %p53
      %p55 = scmp.ne.s32.totalorder %s44, %s47
      %p56 = scmp.eq.s32.totalorder %s27, 1
      %p57 = por %p55, %p56
      %p58 = scmp.ne.s32.totalorder %s47, %s48
      %p59 = scmp.eq.s32.totalorder %s27, 0
      %p60 = por %p58, %p59
      %p61 = scmp.ne.s32.totalorder %s47, %s48
      %p62 = scmp.eq.s32.totalorder %s28, 1
      %p63 = por %p61, %p62
      %p65 = scmp.ne.s32.totalorder %s48, %s64
      %p66 = scmp.eq.s32.totalorder %s28, 0
      %p67 = por %p65, %p66
      %s68 = ssub.s32 %s30, %s37
      %p69 = scmp.eq.s32.totalorder %s68, 0
      %s71 = sadd.s32 %s70, 1
      %s72 = scalar_select %p69, %s70, %s71
      %p75 = pneg %p69
      %p76 = scmp.eq.s32.totalorder %s22, 1
      %p77 = por %p75, %p76
      %p78 = scmp.ne.s32.totalorder %s70, %s73
      %p79 = scmp.eq.s32.totalorder %s22, 0
      %p80 = por %p78, %p79
      %p81 = scmp.ne.s32.totalorder %s70, %s73
      %p82 = scmp.eq.s32.totalorder %s27, 1
      %p83 = por %p81, %p82
      %p84 = scmp.ne.s32.totalorder %s73, %s74
      %p85 = scmp.eq.s32.totalorder %s27, 0
      %p86 = por %p84, %p85
      %p87 = scmp.ne.s32.totalorder %s73, %s74
      %p88 = scmp.eq.s32.totalorder %s28, 1
      %p89 = por %p87, %p88
      %p91 = scmp.ne.s32.totalorder %s74, %s90
      %p92 = scmp.eq.s32.totalorder %s28, 0
      %p93 = por %p91, %p92
      %s94 = ssub.s32 %s30, %s37
      %p95 = scmp.eq.s32.totalorder %s94, 0
      %s97 = sadd.s32 %s96, 1
      %s98 = scalar_select %p95, %s96, %s97
      %p101 = pneg %p95
      %p102 = scmp.eq.s32.totalorder %s22, 1
      %p103 = por %p101, %p102
      %p104 = scmp.ne.s32.totalorder %s96, %s99
      %p105 = scmp.eq.s32.totalorder %s22, 0
      %p106 = por %p104, %p105
      %p107 = scmp.ne.s32.totalorder %s96, %s99
      %p108 = scmp.eq.s32.totalorder %s27, 1
      %p109 = por %p107, %p108
      %p110 = scmp.ne.s32.totalorder %s99, %s100
      %p111 = scmp.eq.s32.totalorder %s27, 0
      %p112 = por %p110, %p111
      %p113 = scmp.ne.s32.totalorder %s99, %s100
      %p114 = scmp.eq.s32.totalorder %s28, 1
      %p115 = por %p113, %p114
      %p117 = scmp.ne.s32.totalorder %s100, %s116
      %p118 = scmp.eq.s32.totalorder %s28, 0
      %p119 = por %p117, %p118
      %s120 = ssub.s32 %s30, %s37
      %p121 = scmp.eq.s32.totalorder %s120, 0
      %s123 = sadd.s32 %s122, 1
      %s124 = scalar_select %p121, %s122, %s123
      %p127 = pneg %p121
      %p128 = scmp.eq.s32.totalorder %s22, 1
      %p129 = por %p127, %p128
      %p130 = scmp.ne.s32.totalorder %s122, %s125
      %p131 = scmp.eq.s32.totalorder %s22, 0
      %p132 = por %p130, %p131
      %p133 = scmp.ne.s32.totalorder %s122, %s125
      %p134 = scmp.eq.s32.totalorder %s27, 1
      %p135 = por %p133, %p134
      %p136 = scmp.ne.s32.totalorder %s125, %s126
      %p137 = scmp.eq.s32.totalorder %s27, 0
      %p138 = por %p136, %p137
      %p139 = scmp.ne.s32.totalorder %s125, %s126
      %p140 = scmp.eq.s32.totalorder %s28, 1
      %p141 = por %p139, %p140
      %p143 = scmp.ne.s32.totalorder %s126, %s142
      %p144 = scmp.eq.s32.totalorder %s28, 0
      %p145 = por %p143, %p144
      %s147 = sadd.s32 %s146, 1
      %p150 = scmp.eq.s32.totalorder %s22, 1
      %p151 = scmp.ne.s32.totalorder %s146, %s148
      %p152 = scmp.eq.s32.totalorder %s22, 0
      %p153 = por %p151, %p152
      %p154 = scmp.ne.s32.totalorder %s146, %s148
      %p155 = scmp.eq.s32.totalorder %s27, 1
      %p156 = por %p154, %p155
      %p157 = scmp.ne.s32.totalorder %s148, %s149
      %p158 = scmp.eq.s32.totalorder %s27, 0
      %p159 = por %p157, %p158
      %p160 = scmp.ne.s32.totalorder %s148, %s149
      %p161 = scmp.eq.s32.totalorder %s28, 1
      %p162 = por %p160, %p161
      %p164 = scmp.ne.s32.totalorder %s149, %s163
      %p165 = scmp.eq.s32.totalorder %s28, 0
      %p166 = por %p164, %p165
      %s168 = sadd.s32 %s167, 1
      %p171 = scmp.eq.s32.totalorder %s22, 1
      %p172 = scmp.ne.s32.totalorder %s167, %s169
      %p173 = scmp.eq.s32.totalorder %s22, 0
      %p174 = por %p172, %p173
      %p175 = scmp.ne.s32.totalorder %s167, %s169
      %p176 = scmp.eq.s32.totalorder %s27, 1
      %p177 = por %p175, %p176
      %p178 = scmp.ne.s32.totalorder %s169, %s170
      %p179 = scmp.eq.s32.totalorder %s27, 0
      %p180 = por %p178, %p179
      %p181 = scmp.ne.s32.totalorder %s169, %s170
      %p182 = scmp.eq.s32.totalorder %s28, 1
      %p183 = por %p181, %p182
      %p185 = scmp.ne.s32.totalorder %s170, %s184
      %p186 = scmp.eq.s32.totalorder %s28, 0
      %p187 = por %p185, %p186
      %s188 = ssub.s32 %s30, %s37
      %s189 = ssub.s32 %s29, %s41
      %s190 = sor.u32 %s188, %s189
      %p191 = scmp.eq.s32.totalorder %s190, 0
      %s193 = sadd.s32 %s192, 1
      %s194 = scalar_select %p191, %s192, %s193
      %p197 = pneg %p191
      %p198 = scmp.eq.s32.totalorder %s22, 1
      %p199 = por %p197, %p198
      %p200 = scmp.ne.s32.totalorder %s192, %s195
      %p201 = scmp.eq.s32.totalorder %s22, 0
      %p202 = por %p200, %p201
      %p203 = scmp.ne.s32.totalorder %s192, %s195
      %p204 = scmp.eq.s32.totalorder %s27, 1
      %p205 = por %p203, %p204
      %p206 = scmp.ne.s32.totalorder %s195, %s196
      %p207 = scmp.eq.s32.totalorder %s27, 0
      %p208 = por %p206, %p207
      %p209 = scmp.ne.s32.totalorder %s195, %s196
      %p210 = scmp.eq.s32.totalorder %s28, 1
      %p211 = por %p209, %p210
      %p213 = scmp.ne.s32.totalorder %s196, %s212
      %p214 = scmp.eq.s32.totalorder %s28, 0
      %p215 = por %p213, %p214
      %p216 = scmp.le.s32.totalorder 1, %s22
      %p217 = scmp.lt.s32.totalorder %s22, 3
      %p218 = pnand %p216, %p217
      %p219 = pneg %p218
      // Predicated region
      $region9: #{tpu_custom_call.1} parent=5 // pred_check
        _
      $region10: #{tpu_custom_call.1} parent=5 // pred_check_branch
        %221 = sbr.rel (%p218) target = $region12
      $region11: #{tpu_custom_call.1} parent=5 // pred_region
        %s222 = ssub.s32 %s22, 1
        // Predicated region
        $region13: #{tpu_custom_call.1} parent=11 // pred_check
          %p223 = pneg %p60
        $region14: #{tpu_custom_call.1} parent=11 // pred_check_branch
          %225 = sbr.rel (%p223) target = $region16
        $region15: #{tpu_custom_call.1} parent=11 // pred_region
          %s227 = ssub.s32 1024, 1024
          %228 = vsyncadd [#allocation5], %s227
          %s229 = smul.addr %s31, 128
          %s230 = scalar_lea.hbm %s0, %s229
          %s231 = sshll.u32 [#allocation4], 4
          %s232 = int_to_ptr.vmem [resolvable:$true] %s231
          %237 = dma.hbm_to_vmem [thread:$0]  %s230, 1024, %s232, [#allocation5], 128, 128, 8
        $region16: #{tpu_custom_call.1} parent=11 // pred_fallthru
          _
        // Predicated region
        $region17: #{tpu_custom_call.1} parent=11 // pred_check
          %p238 = pneg %p159
        $region18: #{tpu_custom_call.1} parent=11 // pred_check_branch
          %240 = sbr.rel (%p238) target = $region20
        $region19: #{tpu_custom_call.1} parent=11 // pred_region
          %s242 = ssub.s32 2048, 2048
          %243 = vsyncadd [#allocation11], %s242
          %s244 = sshll.u32 [#allocation12], 4
          %s245 = int_to_ptr.vmem [resolvable:$true] %s244
          %250 = dma.hbm_to_vmem [thread:$0]  %s4, 2048, %s245, [#allocation11], 128, 128, 8
        $region20: #{tpu_custom_call.1} parent=11 // pred_fallthru
          _
        // Predicated region
        $region21: #{tpu_custom_call.1} parent=11 // pred_check
          %p251 = pneg %p180
        $region22: #{tpu_custom_call.1} parent=11 // pred_check_branch
          %253 = sbr.rel (%p251) target = $region24
        $region23: #{tpu_custom_call.1} parent=11 // pred_region
          _
        $region24: #{tpu_custom_call.1} parent=11 // pred_fallthru
          _
      $region12: #{tpu_custom_call.1} parent=5 // pred_fallthru
        _
      %p254 = scmp.lt.s32.totalorder %s22, 2
      // Predicated region
      $region25: #{tpu_custom_call.1} parent=5 // pred_check
        %p255 = pneg %p254
      $region26: #{tpu_custom_call.1} parent=5 // pred_check_branch
        %257 = sbr.rel (%p255) target = $region28
      $region27: #{tpu_custom_call.1} parent=5 // pred_region
        // Predicated region
        $region29: #{tpu_custom_call.1} parent=27 // pred_check
          %p258 = pneg %p80
        $region30: #{tpu_custom_call.1} parent=27 // pred_check_branch
          %260 = sbr.rel (%p258) target = $region32
        $region31: #{tpu_custom_call.1} parent=27 // pred_region
          %s261 = sand.u32 %s22, 1
          %s262 = scalar_lea.sflag [#allocation8], %s261
          %s263 = sand.u32 %s70, 1
          %s264 = smul.addr %s263, 512
          %s265 = scalar_lea.vmem [#allocation7], %s264
          %s267 = ssub.s32 8192, 8192
          %268 = vsyncadd %s262, %s267
          %s269 = smul.addr %s30, 64
          %s270 = smul.addr %s269, 128
          %s271 = scalar_lea.hbm %s1, %s270
          %s272 = sshll.u32 %s265, 4
          %s273 = int_to_ptr.vmem [resolvable:$true] %s272
          %278 = dma.hbm_to_vmem [thread:$0]  %s271, 8192, %s273, %s262, 512, 512, 32
        $region32: #{tpu_custom_call.1} parent=27 // pred_fallthru
          _
        // Predicated region
        $region33: #{tpu_custom_call.1} parent=27 // pred_check
          %p279 = pneg %p106
        $region34: #{tpu_custom_call.1} parent=27 // pred_check_branch
          %281 = sbr.rel (%p279) target = $region36
        $region35: #{tpu_custom_call.1} parent=27 // pred_region
          %s282 = sand.u32 %s22, 1
          %s283 = scalar_lea.sflag [#allocation8], %s282
          %s284 = sand.u32 %s96, 1
          %s285 = smul.addr %s284, 512
          %s286 = scalar_lea.vmem [#allocation9], %s285
          %s288 = ssub.s32 8192, 8192
          %289 = vsyncadd %s283, %s288
          %s290 = smul.addr %s30, 64
          %s291 = smul.addr %s290, 128
          %s292 = scalar_lea.hbm %s2, %s291
          %s293 = sshll.u32 %s286, 4
          %s294 = int_to_ptr.vmem [resolvable:$true] %s293
          %299 = dma.hbm_to_vmem [thread:$0]  %s292, 8192, %s294, %s283, 512, 512, 32
        $region36: #{tpu_custom_call.1} parent=27 // pred_fallthru
          _
        // Predicated region
        $region37: #{tpu_custom_call.1} parent=27 // pred_check
          %p300 = pneg %p132
        $region38: #{tpu_custom_call.1} parent=27 // pred_check_branch
          %302 = sbr.rel (%p300) target = $region40
        $region39: #{tpu_custom_call.1} parent=27 // pred_region
          %s303 = sand.u32 %s22, 1
          %s304 = scalar_lea.sflag [#allocation11], %s303
          %s305 = sand.u32 %s122, 1
          %s306 = smul.addr %s305, 4
          %s307 = scalar_lea.vmem [#allocation10], %s306
          %s309 = ssub.s32 64, 64
          %310 = vsyncadd %s304, %s309
          %s311 = smul.addr %s30, 4
          %s312 = smul.addr %s311, 16
          %s313 = scalar_lea.hbm %s3, %s312
          %s315 = sshll.u32 %s307, 4
          %s316 = int_to_ptr.vmem [resolvable:$true] %s315
          %318 = dma.hbm_to_vmem [thread:$0]  %s313, 64, %s316, %s304
        $region40: #{tpu_custom_call.1} parent=27 // pred_fallthru
          _
      $region28: #{tpu_custom_call.1} parent=5 // pred_fallthru
        _
      %p319 = scmp.le.s32.totalorder 1, %s22
      %p320 = scmp.lt.s32.totalorder %s22, 3
      %p321 = pnand %p319, %p320
      %p322 = pneg %p321
      // Predicated region
      $region41: #{tpu_custom_call.1} parent=5 // pred_check
        _
      $region42: #{tpu_custom_call.1} parent=5 // pred_check_branch
        %324 = sbr.rel (%p321) target = $region44
      $region43: #{tpu_custom_call.1} parent=5 // pred_region
        %s325 = ssub.s32 %s22, 1
        // Predicated region
        $region45: #{tpu_custom_call.1} parent=43 // pred_check
          %p326 = pneg %p60
        $region46: #{tpu_custom_call.1} parent=43 // pred_check_branch
          %328 = sbr.rel (%p326) target = $region48
        $region47: #{tpu_custom_call.1} parent=43 // pred_region
          %329 = dma.done [#allocation5], 1024
        $region48: #{tpu_custom_call.1} parent=43 // pred_fallthru
          _
        %s330 = sand.u32 %s27, 1
        %s331 = scalar_lea.sflag [#allocation8], %s330
        %s332 = sand.u32 %s73, 1
        %s333 = smul.addr %s332, 512
        %s334 = scalar_lea.vmem [#allocation7], %s333
        // Predicated region
        $region49: #{tpu_custom_call.1} parent=43 // pred_check
          %p335 = pneg %p86
        $region50: #{tpu_custom_call.1} parent=43 // pred_check_branch
          %337 = sbr.rel (%p335) target = $region52
        $region51: #{tpu_custom_call.1} parent=43 // pred_region
          %338 = dma.done %s331, 8192
        $region52: #{tpu_custom_call.1} parent=43 // pred_fallthru
          _
        %s339 = sand.u32 %s27, 1
        %s340 = scalar_lea.sflag [#allocation8], %s339
        %s341 = sand.u32 %s99, 1
        %s342 = smul.addr %s341, 512
        %s343 = scalar_lea.vmem [#allocation9], %s342
        // Predicated region
        $region53: #{tpu_custom_call.1} parent=43 // pred_check
          %p344 = pneg %p112
        $region54: #{tpu_custom_call.1} parent=43 // pred_check_branch
          %346 = sbr.rel (%p344) target = $region56
        $region55: #{tpu_custom_call.1} parent=43 // pred_region
          %347 = dma.done %s340, 8192
        $region56: #{tpu_custom_call.1} parent=43 // pred_fallthru
          _
        %s348 = sand.u32 %s27, 1
        %s349 = scalar_lea.sflag [#allocation11], %s348
        %s350 = sand.u32 %s125, 1
        %s351 = smul.addr %s350, 4
        %s352 = scalar_lea.vmem [#allocation10], %s351
        // Predicated region
        $region57: #{tpu_custom_call.1} parent=43 // pred_check
          %p353 = pneg %p138
        $region58: #{tpu_custom_call.1} parent=43 // pred_check_branch
          %355 = sbr.rel (%p353) target = $region60
        $region59: #{tpu_custom_call.1} parent=43 // pred_region
          %356 = dma.done %s349, 64
        $region60: #{tpu_custom_call.1} parent=43 // pred_fallthru
          _
        // Predicated region
        $region61: #{tpu_custom_call.1} parent=43 // pred_check
          %p357 = pneg %p159
        $region62: #{tpu_custom_call.1} parent=43 // pred_check_branch
          %359 = sbr.rel (%p357) target = $region64
        $region63: #{tpu_custom_call.1} parent=43 // pred_region
          %360 = dma.done [#allocation11], 2048
        $region64: #{tpu_custom_call.1} parent=43 // pred_fallthru
          _
        %p361 = pneg %p60
        %p362 = pneg %p57
        %s363 = sand.u32 %s27, 1
        %s364 = scalar_lea.sflag [#allocation8], %s363
        %s365 = sand.u32 %s73, 1
        %s366 = smul.addr %s365, 512
        %s367 = scalar_lea.vmem [#allocation7], %s366
        %p368 = pneg %p86
        %p369 = pneg %p83
        %s370 = sand.u32 %s27, 1
        %s371 = scalar_lea.sflag [#allocation8], %s370
        %s372 = sand.u32 %s99, 1
        %s373 = smul.addr %s372, 512
        %s374 = scalar_lea.vmem [#allocation9], %s373
        %p375 = pneg %p112
        %p376 = pneg %p109
        %s377 = sand.u32 %s27, 1
        %s378 = scalar_lea.sflag [#allocation11], %s377
        %s379 = sand.u32 %s125, 1
        %s380 = smul.addr %s379, 4
        %s381 = scalar_lea.vmem [#allocation10], %s380
        %p382 = pneg %p138
        %p383 = pneg %p135
        %p384 = pneg %p159
        %p385 = pneg %p156
        %p386 = pneg %p180
        %p387 = pneg %p177
        %p388 = pneg %p208
        %p389 = pneg %p205
        %s390 = sand.u32 %s195, 1
        %s391 = scalar_lea.sflag [#allocation6], %s390
        %s392 = sand.u32 %s195, 1
        %s393 = smul.addr %s392, 8
        %s394 = scalar_lea.vmem [#allocation13], %s393
        %p395 = scmp.eq.s32.totalorder %s32, 0
        // Predicated region
        $region65: #{tpu_custom_call.1} parent=43 // pred_check
          %p396 = pneg %p395
        $region66: #{tpu_custom_call.1} parent=43 // pred_check_branch
          %398 = sbr.rel (%p396) target = $region68
        $region67: #{tpu_custom_call.1} parent=43 // pred_region
          %v399 = vld [vmem:[#allocation4] sm:$0xff]
          %v400 = vld [vmem:[#allocation4 + $0x8] sm:$0xff]
          %v401 = vld [vmem:[#allocation4 + $0x10] sm:$0xff]
          %v402 = vld [vmem:[#allocation4 + $0x18] sm:$0xff]
          %v403 = vld [vmem:[#allocation4 + $0x20] sm:$0xff]
          %v404 = vld [vmem:[#allocation4 + $0x28] sm:$0xff]
          %v405 = vld [vmem:[#allocation4 + $0x30] sm:$0xff]
          %v406 = vld [vmem:[#allocation4 + $0x38] sm:$0xff]
          %407 = vst [vmem:[#allocation2] sm:$0xff] %v399
          %408 = vst [vmem:[#allocation2 + $0x8] sm:$0xff] %v400
          %409 = vst [vmem:[#allocation2 + $0x10] sm:$0xff] %v401
          %410 = vst [vmem:[#allocation2 + $0x18] sm:$0xff] %v402
          %411 = vst [vmem:[#allocation2 + $0x20] sm:$0xff] %v403
          %412 = vst [vmem:[#allocation2 + $0x28] sm:$0xff] %v404
          %413 = vst [vmem:[#allocation2 + $0x30] sm:$0xff] %v405
          %414 = vst [vmem:[#allocation2 + $0x38] sm:$0xff] %v406
        $region68: #{tpu_custom_call.1} parent=43 // pred_fallthru
          _
        %s415 = smul.u32 0, 8
        %s416 = scalar_lea.vmem [#allocation2], %s415
        %v417 = vld [vmem:[%s416] sm:$0xff]
        %v418 = vld [vmem:[%s416 + $0x8] sm:$0xff]
        %v419 = vld [vmem:[%s416 + $0x10] sm:$0xff]
        %v420 = vld [vmem:[%s416 + $0x18] sm:$0xff]
        %v421 = vld [vmem:[%s416 + $0x20] sm:$0xff]
        %v422 = vld [vmem:[%s416 + $0x28] sm:$0xff]
        %v423 = vld [vmem:[%s416 + $0x30] sm:$0xff]
        %v424 = vld [vmem:[%s416 + $0x38] sm:$0xff]
        %v425 = vld [vmem:[%s334] sm:$0xff]
        %v426 = vld [vmem:[%s334 + $0x8] sm:$0xff]
        %v427 = vld [vmem:[%s334 + $0x10] sm:$0xff]
        %v428 = vld [vmem:[%s334 + $0x18] sm:$0xff]
        %v429 = vld [vmem:[%s334 + $0x20] sm:$0xff]
        %v430 = vld [vmem:[%s334 + $0x28] sm:$0xff]
        %v431 = vld [vmem:[%s334 + $0x30] sm:$0xff]
        %v432 = vld [vmem:[%s334 + $0x38] sm:$0xff]
        %v433 = vld [vmem:[%s334 + $0x40] sm:$0xff]
        %v434 = vld [vmem:[%s334 + $0x48] sm:$0xff]
        %v435 = vld [vmem:[%s334 + $0x50] sm:$0xff]
        %v436 = vld [vmem:[%s334 + $0x58] sm:$0xff]
        %v437 = vld [vmem:[%s334 + $0x60] sm:$0xff]
        %v438 = vld [vmem:[%s334 + $0x68] sm:$0xff]
        %v439 = vld [vmem:[%s334 + $0x70] sm:$0xff]
        %v440 = vld [vmem:[%s334 + $0x78] sm:$0xff]
        %v441 = vld [vmem:[%s334 + $0x80] sm:$0xff]
        %v442 = vld [vmem:[%s334 + $0x88] sm:$0xff]
        %v443 = vld [vmem:[%s334 + $0x90] sm:$0xff]
        %v444 = vld [vmem:[%s334 + $0x98] sm:$0xff]
        %v445 = vld [vmem:[%s334 + $0xa0] sm:$0xff]
        %v446 = vld [vmem:[%s334 + $0xa8] sm:$0xff]
        %v447 = vld [vmem:[%s334 + $0xb0] sm:$0xff]
        %v448 = vld [vmem:[%s334 + $0xb8] sm:$0xff]
        %v449 = vld [vmem:[%s334 + $0xc0] sm:$0xff]
        %v450 = vld [vmem:[%s334 + $0xc8] sm:$0xff]
        %v451 = vld [vmem:[%s334 + $0xd0] sm:$0xff]
        %v452 = vld [vmem:[%s334 + $0xd8] sm:$0xff]
        %v453 = vld [vmem:[%s334 + $0xe0] sm:$0xff]
        %v454 = vld [vmem:[%s334 + $0xe8] sm:$0xff]
        %v455 = vld [vmem:[%s334 + $0xf0] sm:$0xff]
        %v456 = vld [vmem:[%s334 + $0xf8] sm:$0xff]
        %v457 = vld [vmem:[%s334 + $0x100] sm:$0xff]
        %v458 = vld [vmem:[%s334 + $0x108] sm:$0xff]
        %v459 = vld [vmem:[%s334 + $0x110] sm:$0xff]
        %v460 = vld [vmem:[%s334 + $0x118] sm:$0xff]
        %v461 = vld [vmem:[%s334 + $0x120] sm:$0xff]
        %v462 = vld [vmem:[%s334 + $0x128] sm:$0xff]
        %v463 = vld [vmem:[%s334 + $0x130] sm:$0xff]
        %v464 = vld [vmem:[%s334 + $0x138] sm:$0xff]
        %v465 = vld [vmem:[%s334 + $0x140] sm:$0xff]
        %v466 = vld [vmem:[%s334 + $0x148] sm:$0xff]
        %v467 = vld [vmem:[%s334 + $0x150] sm:$0xff]
        %v468 = vld [vmem:[%s334 + $0x158] sm:$0xff]
        %v469 = vld [vmem:[%s334 + $0x160] sm:$0xff]
        %v470 = vld [vmem:[%s334 + $0x168] sm:$0xff]
        %v471 = vld [vmem:[%s334 + $0x170] sm:$0xff]
        %v472 = vld [vmem:[%s334 + $0x178] sm:$0xff]
        %v473 = vld [vmem:[%s334 + $0x180] sm:$0xff]
        %v474 = vld [vmem:[%s334 + $0x188] sm:$0xff]
        %v475 = vld [vmem:[%s334 + $0x190] sm:$0xff]
        %v476 = vld [vmem:[%s334 + $0x198] sm:$0xff]
        %v477 = vld [vmem:[%s334 + $0x1a0] sm:$0xff]
        %v478 = vld [vmem:[%s334 + $0x1a8] sm:$0xff]
        %v479 = vld [vmem:[%s334 + $0x1b0] sm:$0xff]
        %v480 = vld [vmem:[%s334 + $0x1b8] sm:$0xff]
        %v481 = vld [vmem:[%s334 + $0x1c0] sm:$0xff]
        %v482 = vld [vmem:[%s334 + $0x1c8] sm:$0xff]
        %v483 = vld [vmem:[%s334 + $0x1d0] sm:$0xff]
        %v484 = vld [vmem:[%s334 + $0x1d8] sm:$0xff]
        %v485 = vld [vmem:[%s334 + $0x1e0] sm:$0xff]
        %v486 = vld [vmem:[%s334 + $0x1e8] sm:$0xff]
        %v487 = vld [vmem:[%s334 + $0x1f0] sm:$0xff]
        %v488 = vld [vmem:[%s334 + $0x1f8] sm:$0xff]
        %v489 = vld [vmem:[%s352] sm:$0xf]
        %v491 = vlaneseq
        %v492 = vshrl.u32 %v491, 7
        %v493 = vsub.s32 0, %v492
        %v494 = vrot.slane %v489, %v493
        %v495 = vlaneseq
        %v496 = vshrl.u32 %v495, 7
        %v497 = vsub.s32 1, %v496
        %v498 = vrot.slane %v489, %v497
        %v499 = vlaneseq
        %v500 = vshrl.u32 %v499, 7
        %v501 = vsub.s32 2, %v500
        %v502 = vrot.slane %v489, %v501
        %v503 = vlaneseq
        %v504 = vshrl.u32 %v503, 7
        %v505 = vsub.s32 3, %v504
        %v506 = vrot.slane %v489, %v505
        %511 = vmatprep.subr.mxu0 %v486
        %512 = vmatpush1.msra.mxu0 %v485
        %513 = vmatprep.subr.mxu0 %v482
        %514 = vmatpush1.msra.mxu0 %v481
        %515 = vmatprep.subr.mxu0 %v478
        %516 = vmatpush1.msra.mxu0 %v477
        %517 = vmatprep.subr.mxu0 %v474
        %518 = vmatpush1.msra.mxu0 %v473
        %519 = vmatprep.subr.mxu0 %v470
        %520 = vmatpush1.msra.mxu0 %v469
        %521 = vmatprep.subr.mxu0 %v466
        %522 = vmatpush1.msra.mxu0 %v465
        %523 = vmatprep.subr.mxu0 %v462
        %524 = vmatpush1.msra.mxu0 %v461
        %525 = vmatprep.subr.mxu0 %v458
        %526 = vmatpush1.msra.mxu0 %v457
        %527 = vmatprep.subr.mxu0 %v454
        %528 = vmatpush1.msra.mxu0 %v453
        %529 = vmatprep.subr.mxu0 %v450
        %530 = vmatpush1.msra.mxu0 %v449
        %531 = vmatprep.subr.mxu0 %v446
        %532 = vmatpush1.msra.mxu0 %v445
        %533 = vmatprep.subr.mxu0 %v442
        %534 = vmatpush1.msra.mxu0 %v441
        %535 = vmatprep.subr.mxu0 %v438
        %536 = vmatpush1.msra.mxu0 %v437
        %537 = vmatprep.subr.mxu0 %v434
        %538 = vmatpush1.msra.mxu0 %v433
        %539 = vmatprep.subr.mxu0 %v430
        %540 = vmatpush1.msra.mxu0 %v429
        %541 = vmatprep.subr.mxu0 %v426
        %542 = vmatpush1.msra.mxu0 %v425
        %543 = vmatprep.subr.mxu0 0.0
        %544 = vmatpush2.msra.mxu0 0.0
        %545 = vmatprep.subr.mxu0 0.0
        %546 = vmatpush2.msra.mxu0 0.0
        %547 = vmatprep.subr.mxu0 0.0
        %548 = vmatpush2.msra.mxu0 0.0
        %549 = vmatprep.subr.mxu0 0.0
        %550 = vmatpush2.msra.mxu0 0.0
        %551 = vmatprep.subr.mxu0 0.0
        %552 = vmatpush2.msra.mxu0 0.0
        %553 = vmatprep.subr.mxu0 0.0
        %554 = vmatpush2.msra.mxu0 0.0
        %555 = vmatprep.subr.mxu0 0.0
        %556 = vmatpush2.msra.mxu0 0.0
        %557 = vmatprep.subr.mxu0 0.0
        %558 = vmatpush2.msra.mxu0 0.0
        %559 = vmatprep.subr.mxu0 0.0
        %560 = vmatpush2.msra.mxu0 0.0
        %561 = vmatprep.subr.mxu0 0.0
        %562 = vmatpush2.msra.mxu0 0.0
        %563 = vmatprep.subr.mxu0 0.0
        %564 = vmatpush2.msra.mxu0 0.0
        %565 = vmatprep.subr.mxu0 0.0
        %566 = vmatpush2.msra.mxu0 0.0
        %567 = vmatprep.subr.mxu0 0.0
        %568 = vmatpush2.msra.mxu0 0.0
        %569 = vmatprep.subr.mxu0 0.0
        %570 = vmatpush2.msra.mxu0 0.0
        %571 = vmatprep.subr.mxu0 0.0
        %572 = vmatpush2.msra.mxu0 0.0
        %573 = vmatprep.subr.mxu0 0.0
        %574 = vmatpush2.msra.mxu0 0.0
        %575 = vmatprep.mubr.f32.mxu0 0.0
        %576 = vmatmul.mubr.f32.gmra.mxu0 %v417
        %v577 = vpop.f32.mrf.mxu0
        %v578 = vadd.f32 %v494, %v577
        %v579 = vpop.f32.mrf.mxu0
        %v580 = vadd.f32 %v498, %v579
        %581 = vmatprep.mubr.f32.mxu0 0.0
        %582 = vmatmul.mubr.f32.gmra.mxu0 %v418
        %v583 = vpop.f32.mrf.mxu0
        %v584 = vadd.f32 %v494, %v583
        %v585 = vpop.f32.mrf.mxu0
        %v586 = vadd.f32 %v498, %v585
        %587 = vmatprep.mubr.f32.mxu0 0.0
        %588 = vmatmul.mubr.f32.gmra.mxu0 %v419
        %v589 = vpop.f32.mrf.mxu0
        %v590 = vadd.f32 %v494, %v589
        %v591 = vpop.f32.mrf.mxu0
        %v592 = vadd.f32 %v498, %v591
        %593 = vmatprep.mubr.f32.mxu0 0.0
        %594 = vmatmul.mubr.f32.gmra.mxu0 %v420
        %v595 = vpop.f32.mrf.mxu0
        %v596 = vadd.f32 %v494, %v595
        %v597 = vpop.f32.mrf.mxu0
        %v598 = vadd.f32 %v498, %v597
        %599 = vmatprep.mubr.f32.mxu0 0.0
        %600 = vmatmul.mubr.f32.gmra.mxu0 %v421
        %v601 = vpop.f32.mrf.mxu0
        %v602 = vadd.f32 %v494, %v601
        %v603 = vpop.f32.mrf.mxu0
        %v604 = vadd.f32 %v498, %v603
        %605 = vmatprep.mubr.f32.mxu0 0.0
        %606 = vmatmul.mubr.f32.gmra.mxu0 %v422
        %v607 = vpop.f32.mrf.mxu0
        %v608 = vadd.f32 %v494, %v607
        %v609 = vpop.f32.mrf.mxu0
        %v610 = vadd.f32 %v498, %v609
        %611 = vmatprep.mubr.f32.mxu0 0.0
        %612 = vmatmul.mubr.f32.gmra.mxu0 %v423
        %v613 = vpop.f32.mrf.mxu0
        %v614 = vadd.f32 %v494, %v613
        %v615 = vpop.f32.mrf.mxu0
        %v616 = vadd.f32 %v498, %v615
        %617 = vmatprep.mubr.f32.mxu0 0.0
        %618 = vmatmul.mubr.f32.gmra.mxu0 %v424
        %v619 = vpop.f32.mrf.mxu0
        %v620 = vadd.f32 %v494, %v619
        %v621 = vpop.f32.mrf.mxu0
        %v622 = vadd.f32 %v498, %v621
        %623 = vdwg.mxu0
        %624 = vmatprep.subr.mxu0 %v488
        %625 = vmatpush1.msra.mxu0 %v487
        %626 = vmatprep.subr.mxu0 %v484
        %627 = vmatpush1.msra.mxu0 %v483
        %628 = vmatprep.subr.mxu0 %v480
        %629 = vmatpush1.msra.mxu0 %v479
        %630 = vmatprep.subr.mxu0 %v476
        %631 = vmatpush1.msra.mxu0 %v475
        %632 = vmatprep.subr.mxu0 %v472
        %633 = vmatpush1.msra.mxu0 %v471
        %634 = vmatprep.subr.mxu0 %v468
        %635 = vmatpush1.msra.mxu0 %v467
        %636 = vmatprep.subr.mxu0 %v464
        %637 = vmatpush1.msra.mxu0 %v463
        %638 = vmatprep.subr.mxu0 %v460
        %639 = vmatpush1.msra.mxu0 %v459
        %640 = vmatprep.subr.mxu0 %v456
        %641 = vmatpush1.msra.mxu0 %v455
        %642 = vmatprep.subr.mxu0 %v452
        %643 = vmatpush1.msra.mxu0 %v451
        %644 = vmatprep.subr.mxu0 %v448
        %645 = vmatpush1.msra.mxu0 %v447
        %646 = vmatprep.subr.mxu0 %v444
        %647 = vmatpush1.msra.mxu0 %v443
        %648 = vmatprep.subr.mxu0 %v440
        %649 = vmatpush1.msra.mxu0 %v439
        %650 = vmatprep.subr.mxu0 %v436
        %651 = vmatpush1.msra.mxu0 %v435
        %652 = vmatprep.subr.mxu0 %v432
        %653 = vmatpush1.msra.mxu0 %v431
        %654 = vmatprep.subr.mxu0 %v428
        %655 = vmatpush1.msra.mxu0 %v427
        %656 = vmatprep.subr.mxu0 0.0
        %657 = vmatpush2.msra.mxu0 0.0
        %658 = vmatprep.subr.mxu0 0.0
        %659 = vmatpush2.msra.mxu0 0.0
        %660 = vmatprep.subr.mxu0 0.0
        %661 = vmatpush2.msra.mxu0 0.0
        %662 = vmatprep.subr.mxu0 0.0
        %663 = vmatpush2.msra.mxu0 0.0
        %664 = vmatprep.subr.mxu0 0.0
        %665 = vmatpush2.msra.mxu0 0.0
        %666 = vmatprep.subr.mxu0 0.0
        %667 = vmatpush2.msra.mxu0 0.0
        %668 = vmatprep.subr.mxu0 0.0
        %669 = vmatpush2.msra.mxu0 0.0
        %670 = vmatprep.subr.mxu0 0.0
        %671 = vmatpush2.msra.mxu0 0.0
        %672 = vmatprep.subr.mxu0 0.0
        %673 = vmatpush2.msra.mxu0 0.0
        %674 = vmatprep.subr.mxu0 0.0
        %675 = vmatpush2.msra.mxu0 0.0
        %676 = vmatprep.subr.mxu0 0.0
        %677 = vmatpush2.msra.mxu0 0.0
        %678 = vmatprep.subr.mxu0 0.0
        %679 = vmatpush2.msra.mxu0 0.0
        %680 = vmatprep.subr.mxu0 0.0
        %681 = vmatpush2.msra.mxu0 0.0
        %682 = vmatprep.subr.mxu0 0.0
        %683 = vmatpush2.msra.mxu0 0.0
        %684 = vmatprep.subr.mxu0 0.0
        %685 = vmatpush2.msra.mxu0 0.0
        %686 = vmatprep.subr.mxu0 0.0
        %687 = vmatpush2.msra.mxu0 0.0
        %688 = vmatprep.mubr.f32.mxu0 0.0
        %689 = vmatmul.mubr.f32.gmra.mxu0 %v417
        %v690 = vpop.f32.mrf.mxu0
        %v691 = vadd.f32 %v502, %v690
        %v692 = vpop.f32.mrf.mxu0
        %v693 = vadd.f32 %v506, %v692
        %694 = vmatprep.mubr.f32.mxu0 0.0
        %695 = vmatmul.mubr.f32.gmra.mxu0 %v418
        %v696 = vpop.f32.mrf.mxu0
        %v697 = vadd.f32 %v502, %v696
        %v698 = vpop.f32.mrf.mxu0
        %v699 = vadd.f32 %v506, %v698
        %700 = vmatprep.mubr.f32.mxu0 0.0
        %701 = vmatmul.mubr.f32.gmra.mxu0 %v419
        %v702 = vpop.f32.mrf.mxu0
        %v703 = vadd.f32 %v502, %v702
        %v704 = vpop.f32.mrf.mxu0
        %v705 = vadd.f32 %v506, %v704
        %706 = vmatprep.mubr.f32.mxu0 0.0
        %707 = vmatmul.mubr.f32.gmra.mxu0 %v420
        %v708 = vpop.f32.mrf.mxu0
        %v709 = vadd.f32 %v502, %v708
        %v710 = vpop.f32.mrf.mxu0
        %v711 = vadd.f32 %v506, %v710
        %712 = vmatprep.mubr.f32.mxu0 0.0
        %713 = vmatmul.mubr.f32.gmra.mxu0 %v421
        %v714 = vpop.f32.mrf.mxu0
        %v715 = vadd.f32 %v502, %v714
        %v716 = vpop.f32.mrf.mxu0
        %v717 = vadd.f32 %v506, %v716
        %718 = vmatprep.mubr.f32.mxu0 0.0
        %719 = vmatmul.mubr.f32.gmra.mxu0 %v422
        %v720 = vpop.f32.mrf.mxu0
        %v721 = vadd.f32 %v502, %v720
        %v722 = vpop.f32.mrf.mxu0
        %v723 = vadd.f32 %v506, %v722
        %724 = vmatprep.mubr.f32.mxu0 0.0
        %725 = vmatmul.mubr.f32.gmra.mxu0 %v423
        %v726 = vpop.f32.mrf.mxu0
        %v727 = vadd.f32 %v502, %v726
        %v728 = vpop.f32.mrf.mxu0
        %v729 = vadd.f32 %v506, %v728
        %730 = vmatprep.mubr.f32.mxu0 0.0
        %731 = vmatmul.mubr.f32.gmra.mxu0 %v424
        %v732 = vpop.f32.mrf.mxu0
        %v733 = vadd.f32 %v502, %v732
        %v734 = vpop.f32.mrf.mxu0
        %v735 = vadd.f32 %v506, %v734
        %736 = vdwg.mxu0
        %737 = vst [vmem:[#allocation3] sm:$0xff] %v578
        %738 = vst [vmem:[#allocation3 + $0x8] sm:$0xff] %v580
        %739 = vst [vmem:[#allocation3 + $0x10] sm:$0xff] %v691
        %740 = vst [vmem:[#allocation3 + $0x18] sm:$0xff] %v693
        %741 = vst [vmem:[#allocation3 + $0x20] sm:$0xff] %v584
        %742 = vst [vmem:[#allocation3 + $0x28] sm:$0xff] %v586
        %743 = vst [vmem:[#allocation3 + $0x30] sm:$0xff] %v697
        %744 = vst [vmem:[#allocation3 + $0x38] sm:$0xff] %v699
        %745 = vst [vmem:[#allocation3 + $0x40] sm:$0xff] %v590
        %746 = vst [vmem:[#allocation3 + $0x48] sm:$0xff] %v592
        %747 = vst [vmem:[#allocation3 + $0x50] sm:$0xff] %v703
        %748 = vst [vmem:[#allocation3 + $0x58] sm:$0xff] %v705
        %749 = vst [vmem:[#allocation3 + $0x60] sm:$0xff] %v596
        %750 = vst [vmem:[#allocation3 + $0x68] sm:$0xff] %v598
        %751 = vst [vmem:[#allocation3 + $0x70] sm:$0xff] %v709
        %752 = vst [vmem:[#allocation3 + $0x78] sm:$0xff] %v711
        %753 = vst [vmem:[#allocation3 + $0x80] sm:$0xff] %v602
        %754 = vst [vmem:[#allocation3 + $0x88] sm:$0xff] %v604
        %755 = vst [vmem:[#allocation3 + $0x90] sm:$0xff] %v715
        %756 = vst [vmem:[#allocation3 + $0x98] sm:$0xff] %v717
        %757 = vst [vmem:[#allocation3 + $0xa0] sm:$0xff] %v608
        %758 = vst [vmem:[#allocation3 + $0xa8] sm:$0xff] %v610
        %759 = vst [vmem:[#allocation3 + $0xb0] sm:$0xff] %v721
        %760 = vst [vmem:[#allocation3 + $0xb8] sm:$0xff] %v723
        %761 = vst [vmem:[#allocation3 + $0xc0] sm:$0xff] %v614
        %762 = vst [vmem:[#allocation3 + $0xc8] sm:$0xff] %v616
        %763 = vst [vmem:[#allocation3 + $0xd0] sm:$0xff] %v727
        %764 = vst [vmem:[#allocation3 + $0xd8] sm:$0xff] %v729
        %765 = vst [vmem:[#allocation3 + $0xe0] sm:$0xff] %v620
        %766 = vst [vmem:[#allocation3 + $0xe8] sm:$0xff] %v622
        %767 = vst [vmem:[#allocation3 + $0xf0] sm:$0xff] %v733
        %768 = vst [vmem:[#allocation3 + $0xf8] sm:$0xff] %v735
        %v769 = vld [vmem:[#allocation3] sm:$0xff]
        %v770 = vld [vmem:[#allocation3 + $0x8] sm:$0xff]
        %v771 = vld [vmem:[#allocation3 + $0x10] sm:$0xff]
        %v772 = vld [vmem:[#allocation3 + $0x18] sm:$0xff]
        %v773 = vld [vmem:[%s343] sm:$0xff]
        %v774 = vld [vmem:[%s343 + $0x8] sm:$0xff]
        %v775 = vld [vmem:[%s343 + $0x10] sm:$0xff]
        %v776 = vld [vmem:[%s343 + $0x18] sm:$0xff]
        %v777 = vld [vmem:[%s343 + $0x20] sm:$0xff]
        %v778 = vld [vmem:[%s343 + $0x28] sm:$0xff]
        %v779 = vld [vmem:[%s343 + $0x30] sm:$0xff]
        %v780 = vld [vmem:[%s343 + $0x38] sm:$0xff]
        %v781 = vld [vmem:[%s343 + $0x40] sm:$0xff]
        %v782 = vld [vmem:[%s343 + $0x48] sm:$0xff]
        %v783 = vld [vmem:[%s343 + $0x50] sm:$0xff]
        %v784 = vld [vmem:[%s343 + $0x58] sm:$0xff]
        %v785 = vld [vmem:[%s343 + $0x60] sm:$0xff]
        %v786 = vld [vmem:[%s343 + $0x68] sm:$0xff]
        %v787 = vld [vmem:[%s343 + $0x70] sm:$0xff]
        %v788 = vld [vmem:[%s343 + $0x78] sm:$0xff]
        %v789 = vld [vmem:[%s343 + $0x80] sm:$0xff]
        %v790 = vld [vmem:[%s343 + $0x88] sm:$0xff]
        %v791 = vld [vmem:[%s343 + $0x90] sm:$0xff]
        %v792 = vld [vmem:[%s343 + $0x98] sm:$0xff]
        %v793 = vld [vmem:[%s343 + $0xa0] sm:$0xff]
        %v794 = vld [vmem:[%s343 + $0xa8] sm:$0xff]
        %v795 = vld [vmem:[%s343 + $0xb0] sm:$0xff]
        %v796 = vld [vmem:[%s343 + $0xb8] sm:$0xff]
        %v797 = vld [vmem:[%s343 + $0xc0] sm:$0xff]
        %v798 = vld [vmem:[%s343 + $0xc8] sm:$0xff]
        %v799 = vld [vmem:[%s343 + $0xd0] sm:$0xff]
        %v800 = vld [vmem:[%s343 + $0xd8] sm:$0xff]
        %v801 = vld [vmem:[%s343 + $0xe0] sm:$0xff]
        %v802 = vld [vmem:[%s343 + $0xe8] sm:$0xff]
        %v803 = vld [vmem:[%s343 + $0xf0] sm:$0xff]
        %v804 = vld [vmem:[%s343 + $0xf8] sm:$0xff]
        %v805 = vld [vmem:[%s343 + $0x100] sm:$0xff]
        %v806 = vld [vmem:[%s343 + $0x108] sm:$0xff]
        %v807 = vld [vmem:[%s343 + $0x110] sm:$0xff]
        %v808 = vld [vmem:[%s343 + $0x118] sm:$0xff]
        %v809 = vld [vmem:[%s343 + $0x120] sm:$0xff]
        %v810 = vld [vmem:[%s343 + $0x128] sm:$0xff]
        %v811 = vld [vmem:[%s343 + $0x130] sm:$0xff]
        %v812 = vld [vmem:[%s343 + $0x138] sm:$0xff]
        %v813 = vld [vmem:[%s343 + $0x140] sm:$0xff]
        %v814 = vld [vmem:[%s343 + $0x148] sm:$0xff]
        %v815 = vld [vmem:[%s343 + $0x150] sm:$0xff]
        %v816 = vld [vmem:[%s343 + $0x158] sm:$0xff]
        %v817 = vld [vmem:[%s343 + $0x160] sm:$0xff]
        %v818 = vld [vmem:[%s343 + $0x168] sm:$0xff]
        %v819 = vld [vmem:[%s343 + $0x170] sm:$0xff]
        %v820 = vld [vmem:[%s343 + $0x178] sm:$0xff]
        %v821 = vld [vmem:[%s343 + $0x180] sm:$0xff]
        %v822 = vld [vmem:[%s343 + $0x188] sm:$0xff]
        %v823 = vld [vmem:[%s343 + $0x190] sm:$0xff]
        %v824 = vld [vmem:[%s343 + $0x198] sm:$0xff]
        %v825 = vld [vmem:[%s343 + $0x1a0] sm:$0xff]
        %v826 = vld [vmem:[%s343 + $0x1a8] sm:$0xff]
        %v827 = vld [vmem:[%s343 + $0x1b0] sm:$0xff]
        %v828 = vld [vmem:[%s343 + $0x1b8] sm:$0xff]
        %v829 = vld [vmem:[%s343 + $0x1c0] sm:$0xff]
        %v830 = vld [vmem:[%s343 + $0x1c8] sm:$0xff]
        %v831 = vld [vmem:[%s343 + $0x1d0] sm:$0xff]
        %v832 = vld [vmem:[%s343 + $0x1d8] sm:$0xff]
        %v833 = vld [vmem:[%s343 + $0x1e0] sm:$0xff]
        %v834 = vld [vmem:[%s343 + $0x1e8] sm:$0xff]
        %v835 = vld [vmem:[%s343 + $0x1f0] sm:$0xff]
        %v836 = vld [vmem:[%s343 + $0x1f8] sm:$0xff]
        %837 = vmatprep.subr.mxu0 %v834
        %838 = vmatpush1.msra.mxu0 %v833
        %839 = vmatprep.subr.mxu0 %v830
        %840 = vmatpush1.msra.mxu0 %v829
        %841 = vmatprep.subr.mxu0 %v826
        %842 = vmatpush1.msra.mxu0 %v825
        %843 = vmatprep.subr.mxu0 %v822
        %844 = vmatpush1.msra.mxu0 %v821
        %845 = vmatprep.subr.mxu0 %v818
        %846 = vmatpush1.msra.mxu0 %v817
        %847 = vmatprep.subr.mxu0 %v814
        %848 = vmatpush1.msra.mxu0 %v813
        %849 = vmatprep.subr.mxu0 %v810
        %850 = vmatpush1.msra.mxu0 %v809
        %851 = vmatprep.subr.mxu0 %v806
        %852 = vmatpush1.msra.mxu0 %v805
        %853 = vmatprep.subr.mxu0 %v802
        %854 = vmatpush1.msra.mxu0 %v801
        %855 = vmatprep.subr.mxu0 %v798
        %856 = vmatpush1.msra.mxu0 %v797
        %857 = vmatprep.subr.mxu0 %v794
        %858 = vmatpush1.msra.mxu0 %v793
        %859 = vmatprep.subr.mxu0 %v790
        %860 = vmatpush1.msra.mxu0 %v789
        %861 = vmatprep.subr.mxu0 %v786
        %862 = vmatpush1.msra.mxu0 %v785
        %863 = vmatprep.subr.mxu0 %v782
        %864 = vmatpush1.msra.mxu0 %v781
        %865 = vmatprep.subr.mxu0 %v778
        %866 = vmatpush1.msra.mxu0 %v777
        %867 = vmatprep.subr.mxu0 %v774
        %868 = vmatpush1.msra.mxu0 %v773
        %869 = vmatprep.subr.mxu0 0.0
        %870 = vmatpush2.msra.mxu0 0.0
        %871 = vmatprep.subr.mxu0 0.0
        %872 = vmatpush2.msra.mxu0 0.0
        %873 = vmatprep.subr.mxu0 0.0
        %874 = vmatpush2.msra.mxu0 0.0
        %875 = vmatprep.subr.mxu0 0.0
        %876 = vmatpush2.msra.mxu0 0.0
        %877 = vmatprep.subr.mxu0 0.0
        %878 = vmatpush2.msra.mxu0 0.0
        %879 = vmatprep.subr.mxu0 0.0
        %880 = vmatpush2.msra.mxu0 0.0
        %881 = vmatprep.subr.mxu0 0.0
        %882 = vmatpush2.msra.mxu0 0.0
        %883 = vmatprep.subr.mxu0 0.0
        %884 = vmatpush2.msra.mxu0 0.0
        %885 = vmatprep.subr.mxu0 0.0
        %886 = vmatpush2.msra.mxu0 0.0
        %887 = vmatprep.subr.mxu0 0.0
        %888 = vmatpush2.msra.mxu0 0.0
        %889 = vmatprep.subr.mxu0 0.0
        %890 = vmatpush2.msra.mxu0 0.0
        %891 = vmatprep.subr.mxu0 0.0
        %892 = vmatpush2.msra.mxu0 0.0
        %893 = vmatprep.subr.mxu0 0.0
        %894 = vmatpush2.msra.mxu0 0.0
        %895 = vmatprep.subr.mxu0 0.0
        %896 = vmatpush2.msra.mxu0 0.0
        %897 = vmatprep.subr.mxu0 0.0
        %898 = vmatpush2.msra.mxu0 0.0
        %899 = vmatprep.subr.mxu0 0.0
        %900 = vmatpush2.msra.mxu0 0.0
        %901 = vmatprep.mubr.f32.mxu0 0.0
        %902 = vmatmul.mubr.f32.gmra.mxu0 0.0
        %v903 = vpop.f32.mrf.mxu0
        %v904 = vadd.f32 0.0, %v903
        %v905 = vpop.f32.mrf.mxu0
        %v906 = vadd.f32 0.0, %v905
        %907 = vdwg.mxu0
        %908 = vmatprep.subr.mxu0 %v836
        %909 = vmatpush1.msra.mxu0 %v835
        %910 = vmatprep.subr.mxu0 %v832
        %911 = vmatpush1.msra.mxu0 %v831
        %912 = vmatprep.subr.mxu0 %v828
        %913 = vmatpush1.msra.mxu0 %v827
        %914 = vmatprep.subr.mxu0 %v824
        %915 = vmatpush1.msra.mxu0 %v823
        %916 = vmatprep.subr.mxu0 %v820
        %917 = vmatpush1.msra.mxu0 %v819
        %918 = vmatprep.subr.mxu0 %v816
        %919 = vmatpush1.msra.mxu0 %v815
        %920 = vmatprep.subr.mxu0 %v812
        %921 = vmatpush1.msra.mxu0 %v811
        %922 = vmatprep.subr.mxu0 %v808
        %923 = vmatpush1.msra.mxu0 %v807
        %924 = vmatprep.subr.mxu0 %v804
        %925 = vmatpush1.msra.mxu0 %v803
        %926 = vmatprep.subr.mxu0 %v800
        %927 = vmatpush1.msra.mxu0 %v799
        %928 = vmatprep.subr.mxu0 %v796
        %929 = vmatpush1.msra.mxu0 %v795
        %930 = vmatprep.subr.mxu0 %v792
        %931 = vmatpush1.msra.mxu0 %v791
        %932 = vmatprep.subr.mxu0 %v788
        %933 = vmatpush1.msra.mxu0 %v787
        %934 = vmatprep.subr.mxu0 %v784
        %935 = vmatpush1.msra.mxu0 %v783
        %936 = vmatprep.subr.mxu0 %v780
        %937 = vmatpush1.msra.mxu0 %v779
        %938 = vmatprep.subr.mxu0 %v776
        %939 = vmatpush1.msra.mxu0 %v775
        %940 = vmatprep.subr.mxu0 0.0
        %941 = vmatpush2.msra.mxu0 0.0
        %942 = vmatprep.subr.mxu0 0.0
        %943 = vmatpush2.msra.mxu0 0.0
        %944 = vmatprep.subr.mxu0 0.0
        %945 = vmatpush2.msra.mxu0 0.0
        %946 = vmatprep.subr.mxu0 0.0
        %947 = vmatpush2.msra.mxu0 0.0
        %948 = vmatprep.subr.mxu0 0.0
        %949 = vmatpush2.msra.mxu0 0.0
        %950 = vmatprep.subr.mxu0 0.0
        %951 = vmatpush2.msra.mxu0 0.0
        %952 = vmatprep.subr.mxu0 0.0
        %953 = vmatpush2.msra.mxu0 0.0
        %954 = vmatprep.subr.mxu0 0.0
        %955 = vmatpush2.msra.mxu0 0.0
        %956 = vmatprep.subr.mxu0 0.0
        %957 = vmatpush2.msra.mxu0 0.0
        %958 = vmatprep.subr.mxu0 0.0
        %959 = vmatpush2.msra.mxu0 0.0
        %960 = vmatprep.subr.mxu0 0.0
        %961 = vmatpush2.msra.mxu0 0.0
        %962 = vmatprep.subr.mxu0 0.0
        %963 = vmatpush2.msra.mxu0 0.0
        %964 = vmatprep.subr.mxu0 0.0
        %965 = vmatpush2.msra.mxu0 0.0
        %966 = vmatprep.subr.mxu0 0.0
        %967 = vmatpush2.msra.mxu0 0.0
        %968 = vmatprep.subr.mxu0 0.0
        %969 = vmatpush2.msra.mxu0 0.0
        %970 = vmatprep.subr.mxu0 0.0
        %971 = vmatpush2.msra.mxu0 0.0
        %972 = vmatprep.mubr.f32.mxu0 0.0
        %973 = vmatmul.mubr.f32.gmra.mxu0 0.0
        %v974 = vpop.f32.mrf.mxu0
        %v975 = vadd.f32 0.0, %v974
        %v976 = vpop.f32.mrf.mxu0
        %v977 = vadd.f32 0.0, %v976
        %978 = vdwg.mxu0
        %v979 = vadd.f32 %v769, %v904
        %v980 = vadd.f32 %v770, %v906
        %v981 = vadd.f32 %v771, %v975
        %v982 = vadd.f32 %v772, %v977
        %v983 = vxor.u32 %v979, 2147483648
        %v984 = vmul.f32 %v983, 1.442695
        %v985 = vpow.pop %v984
        %v986 = vadd.f32 %v985, 1.0
        %v987 = vrcp.pop %v986
        %v988 = vmul.f32 1.0, %v987
        %v989 = vxor.u32 %v980, 2147483648
        %v990 = vmul.f32 %v989, 1.442695
        %v991 = vpow.pop %v990
        %v992 = vadd.f32 %v991, 1.0
        %v993 = vrcp.pop %v992
        %v994 = vmul.f32 1.0, %v993
        %v995 = vtanh.pop %v981
        %v996 = vxor.u32 %v982, 2147483648
        %v997 = vmul.f32 %v996, 1.442695
        %v998 = vpow.pop %v997
        %v999 = vadd.f32 %v998, 1.0
        %v1000 = vrcp.pop %v999
        %v1001 = vmul.f32 1.0, %v1000
        %v1002 = vmul.f32 %v994, 0.0
        %v1003 = vmul.f32 %v988, %v995
        %v1004 = vadd.f32 %v1002, %v1003
        %v1005 = vtanh.pop %v1004
        %v1006 = vmul.f32 %v1001, %v1005
        %1007 = vst [vmem:[%s416] sm:$0xff] %v1006
        %s1008 = scalar_lea.vmem [#allocation3], 32
        %v1009 = vld [vmem:[%s1008] sm:$0xff]
        %v1010 = vld [vmem:[%s1008 + $0x8] sm:$0xff]
        %v1011 = vld [vmem:[%s1008 + $0x10] sm:$0xff]
        %v1012 = vld [vmem:[%s1008 + $0x18] sm:$0xff]
        %v1013 = vld [vmem:[%s343] sm:$0xff]
        %v1014 = vld [vmem:[%s343 + $0x8] sm:$0xff]
        %v1015 = vld [vmem:[%s343 + $0x10] sm:$0xff]
        %v1016 = vld [vmem:[%s343 + $0x18] sm:$0xff]
        %v1017 = vld [vmem:[%s343 + $0x20] sm:$0xff]
        %v1018 = vld [vmem:[%s343 + $0x28] sm:$0xff]
        %v1019 = vld [vmem:[%s343 + $0x30] sm:$0xff]
        %v1020 = vld [vmem:[%s343 + $0x38] sm:$0xff]
        %v1021 = vld [vmem:[%s343 + $0x40] sm:$0xff]
        %v1022 = vld [vmem:[%s343 + $0x48] sm:$0xff]
        %v1023 = vld [vmem:[%s343 + $0x50] sm:$0xff]
        %v1024 = vld [vmem:[%s343 + $0x58] sm:$0xff]
        %v1025 = vld [vmem:[%s343 + $0x60] sm:$0xff]
        %v1026 = vld [vmem:[%s343 + $0x68] sm:$0xff]
        %v1027 = vld [vmem:[%s343 + $0x70] sm:$0xff]
        %v1028 = vld [vmem:[%s343 + $0x78] sm:$0xff]
        %v1029 = vld [vmem:[%s343 + $0x80] sm:$0xff]
        %v1030 = vld [vmem:[%s343 + $0x88] sm:$0xff]
        %v1031 = vld [vmem:[%s343 + $0x90] sm:$0xff]
        %v1032 = vld [vmem:[%s343 + $0x98] sm:$0xff]
        %v1033 = vld [vmem:[%s343 + $0xa0] sm:$0xff]
        %v1034 = vld [vmem:[%s343 + $0xa8] sm:$0xff]
        %v1035 = vld [vmem:[%s343 + $0xb0] sm:$0xff]
        %v1036 = vld [vmem:[%s343 + $0xb8] sm:$0xff]
        %v1037 = vld [vmem:[%s343 + $0xc0] sm:$0xff]
        %v1038 = vld [vmem:[%s343 + $0xc8] sm:$0xff]
        %v1039 = vld [vmem:[%s343 + $0xd0] sm:$0xff]
        %v1040 = vld [vmem:[%s343 + $0xd8] sm:$0xff]
        %v1041 = vld [vmem:[%s343 + $0xe0] sm:$0xff]
        %v1042 = vld [vmem:[%s343 + $0xe8] sm:$0xff]
        %v1043 = vld [vmem:[%s343 + $0xf0] sm:$0xff]
        %v1044 = vld [vmem:[%s343 + $0xf8] sm:$0xff]
        %v1045 = vld [vmem:[%s343 + $0x100] sm:$0xff]
        %v1046 = vld [vmem:[%s343 + $0x108] sm:$0xff]
        %v1047 = vld [vmem:[%s343 + $0x110] sm:$0xff]
        %v1048 = vld [vmem:[%s343 + $0x118] sm:$0xff]
        %v1049 = vld [vmem:[%s343 + $0x120] sm:$0xff]
        %v1050 = vld [vmem:[%s343 + $0x128] sm:$0xff]
        %v1051 = vld [vmem:[%s343 + $0x130] sm:$0xff]
        %v1052 = vld [vmem:[%s343 + $0x138] sm:$0xff]
        %v1053 = vld [vmem:[%s343 + $0x140] sm:$0xff]
        %v1054 = vld [vmem:[%s343 + $0x148] sm:$0xff]
        %v1055 = vld [vmem:[%s343 + $0x150] sm:$0xff]
        %v1056 = vld [vmem:[%s343 + $0x158] sm:$0xff]
        %v1057 = vld [vmem:[%s343 + $0x160] sm:$0xff]
        %v1058 = vld [vmem:[%s343 + $0x168] sm:$0xff]
        %v1059 = vld [vmem:[%s343 + $0x170] sm:$0xff]
        %v1060 = vld [vmem:[%s343 + $0x178] sm:$0xff]
        %v1061 = vld [vmem:[%s343 + $0x180] sm:$0xff]
        %v1062 = vld [vmem:[%s343 + $0x188] sm:$0xff]
        %v1063 = vld [vmem:[%s343 + $0x190] sm:$0xff]
        %v1064 = vld [vmem:[%s343 + $0x198] sm:$0xff]
        %v1065 = vld [vmem:[%s343 + $0x1a0] sm:$0xff]
        %v1066 = vld [vmem:[%s343 + $0x1a8] sm:$0xff]
        %v1067 = vld [vmem:[%s343 + $0x1b0] sm:$0xff]
        %v1068 = vld [vmem:[%s343 + $0x1b8] sm:$0xff]
        %v1069 = vld [vmem:[%s343 + $0x1c0] sm:$0xff]
        %v1070 = vld [vmem:[%s343 + $0x1c8] sm:$0xff]
        %v1071 = vld [vmem:[%s343 + $0x1d0] sm:$0xff]
        %v1072 = vld [vmem:[%s343 + $0x1d8] sm:$0xff]
        %v1073 = vld [vmem:[%s343 + $0x1e0] sm:$0xff]
        %v1074 = vld [vmem:[%s343 + $0x1e8] sm:$0xff]
        %v1075 = vld [vmem:[%s343 + $0x1f0] sm:$0xff]
        %v1076 = vld [vmem:[%s343 + $0x1f8] sm:$0xff]
        %1077 = vmatprep.subr.mxu0 %v1074
        %1078 = vmatpush1.msra.mxu0 %v1073
        %1079 = vmatprep.subr.mxu0 %v1070
        %1080 = vmatpush1.msra.mxu0 %v1069
        %1081 = vmatprep.subr.mxu0 %v1066
        %1082 = vmatpush1.msra.mxu0 %v1065
        %1083 = vmatprep.subr.mxu0 %v1062
        %1084 = vmatpush1.msra.mxu0 %v1061
        %1085 = vmatprep.subr.mxu0 %v1058
        %1086 = vmatpush1.msra.mxu0 %v1057
        %1087 = vmatprep.subr.mxu0 %v1054
        %1088 = vmatpush1.msra.mxu0 %v1053
        %1089 = vmatprep.subr.mxu0 %v1050
        %1090 = vmatpush1.msra.mxu0 %v1049
        %1091 = vmatprep.subr.mxu0 %v1046
        %1092 = vmatpush1.msra.mxu0 %v1045
        %1093 = vmatprep.subr.mxu0 %v1042
        %1094 = vmatpush1.msra.mxu0 %v1041
        %1095 = vmatprep.subr.mxu0 %v1038
        %1096 = vmatpush1.msra.mxu0 %v1037
        %1097 = vmatprep.subr.mxu0 %v1034
        %1098 = vmatpush1.msra.mxu0 %v1033
        %1099 = vmatprep.subr.mxu0 %v1030
        %1100 = vmatpush1.msra.mxu0 %v1029
        %1101 = vmatprep.subr.mxu0 %v1026
        %1102 = vmatpush1.msra.mxu0 %v1025
        %1103 = vmatprep.subr.mxu0 %v1022
        %1104 = vmatpush1.msra.mxu0 %v1021
        %1105 = vmatprep.subr.mxu0 %v1018
        %1106 = vmatpush1.msra.mxu0 %v1017
        %1107 = vmatprep.subr.mxu0 %v1014
        %1108 = vmatpush1.msra.mxu0 %v1013
        %1109 = vmatprep.subr.mxu0 0.0
        %1110 = vmatpush2.msra.mxu0 0.0
        %1111 = vmatprep.subr.mxu0 0.0
        %1112 = vmatpush2.msra.mxu0 0.0
        %1113 = vmatprep.subr.mxu0 0.0
        %1114 = vmatpush2.msra.mxu0 0.0
        %1115 = vmatprep.subr.mxu0 0.0
        %1116 = vmatpush2.msra.mxu0 0.0
        %1117 = vmatprep.subr.mxu0 0.0
        %1118 = vmatpush2.msra.mxu0 0.0
        %1119 = vmatprep.subr.mxu0 0.0
        %1120 = vmatpush2.msra.mxu0 0.0
        %1121 = vmatprep.subr.mxu0 0.0
        %1122 = vmatpush2.msra.mxu0 0.0
        %1123 = vmatprep.subr.mxu0 0.0
        %1124 = vmatpush2.msra.mxu0 0.0
        %1125 = vmatprep.subr.mxu0 0.0
        %1126 = vmatpush2.msra.mxu0 0.0
        %1127 = vmatprep.subr.mxu0 0.0
        %1128 = vmatpush2.msra.mxu0 0.0
        %1129 = vmatprep.subr.mxu0 0.0
        %1130 = vmatpush2.msra.mxu0 0.0
        %1131 = vmatprep.subr.mxu0 0.0
        %1132 = vmatpush2.msra.mxu0 0.0
        %1133 = vmatprep.subr.mxu0 0.0
        %1134 = vmatpush2.msra.mxu0 0.0
        %1135 = vmatprep.subr.mxu0 0.0
        %1136 = vmatpush2.msra.mxu0 0.0
        %1137 = vmatprep.subr.mxu0 0.0
        %1138 = vmatpush2.msra.mxu0 0.0
        %1139 = vmatprep.subr.mxu0 0.0
        %1140 = vmatpush2.msra.mxu0 0.0
        %1141 = vmatprep.mubr.f32.mxu0 0.0
        %1142 = vmatmul.mubr.f32.gmra.mxu0 %v1006
        %v1143 = vpop.f32.mrf.mxu0
        %v1144 = vadd.f32 0.0, %v1143
        %v1145 = vpop.f32.mrf.mxu0
        %v1146 = vadd.f32 0.0, %v1145
        %1147 = vdwg.mxu0
        %1148 = vmatprep.subr.mxu0 %v1076
        %1149 = vmatpush1.msra.mxu0 %v1075
        %1150 = vmatprep.subr.mxu0 %v1072
        %1151 = vmatpush1.msra.mxu0 %v1071
        %1152 = vmatprep.subr.mxu0 %v1068
        %1153 = vmatpush1.msra.mxu0 %v1067
        %1154 = vmatprep.subr.mxu0 %v1064
        %1155 = vmatpush1.msra.mxu0 %v1063
        %1156 = vmatprep.subr.mxu0 %v1060
        %1157 = vmatpush1.msra.mxu0 %v1059
        %1158 = vmatprep.subr.mxu0 %v1056
        %1159 = vmatpush1.msra.mxu0 %v1055
        %1160 = vmatprep.subr.mxu0 %v1052
        %1161 = vmatpush1.msra.mxu0 %v1051
        %1162 = vmatprep.subr.mxu0 %v1048
        %1163 = vmatpush1.msra.mxu0 %v1047
        %1164 = vmatprep.subr.mxu0 %v1044
        %1165 = vmatpush1.msra.mxu0 %v1043
        %1166 = vmatprep.subr.mxu0 %v1040
        %1167 = vmatpush1.msra.mxu0 %v1039
        %1168 = vmatprep.subr.mxu0 %v1036
        %1169 = vmatpush1.msra.mxu0 %v1035
        %1170 = vmatprep.subr.mxu0 %v1032
        %1171 = vmatpush1.msra.mxu0 %v1031
        %1172 = vmatprep.subr.mxu0 %v1028
        %1173 = vmatpush1.msra.mxu0 %v1027
        %1174 = vmatprep.subr.mxu0 %v1024
        %1175 = vmatpush1.msra.mxu0 %v1023
        %1176 = vmatprep.subr.mxu0 %v1020
        %1177 = vmatpush1.msra.mxu0 %v1019
        %1178 = vmatprep.subr.mxu0 %v1016
        %1179 = vmatpush1.msra.mxu0 %v1015
        %1180 = vmatprep.subr.mxu0 0.0
        %1181 = vmatpush2.msra.mxu0 0.0
        %1182 = vmatprep.subr.mxu0 0.0
        %1183 = vmatpush2.msra.mxu0 0.0
        %1184 = vmatprep.subr.mxu0 0.0
        %1185 = vmatpush2.msra.mxu0 0.0
        %1186 = vmatprep.subr.mxu0 0.0
        %1187 = vmatpush2.msra.mxu0 0.0
        %1188 = vmatprep.subr.mxu0 0.0
        %1189 = vmatpush2.msra.mxu0 0.0
        %1190 = vmatprep.subr.mxu0 0.0
        %1191 = vmatpush2.msra.mxu0 0.0
        %1192 = vmatprep.subr.mxu0 0.0
        %1193 = vmatpush2.msra.mxu0 0.0
        %1194 = vmatprep.subr.mxu0 0.0
        %1195 = vmatpush2.msra.mxu0 0.0
        %1196 = vmatprep.subr.mxu0 0.0
        %1197 = vmatpush2.msra.mxu0 0.0
        %1198 = vmatprep.subr.mxu0 0.0
        %1199 = vmatpush2.msra.mxu0 0.0
        %1200 = vmatprep.subr.mxu0 0.0
        %1201 = vmatpush2.msra.mxu0 0.0
        %1202 = vmatprep.subr.mxu0 0.0
        %1203 = vmatpush2.msra.mxu0 0.0
        %1204 = vmatprep.subr.mxu0 0.0
        %1205 = vmatpush2.msra.mxu0 0.0
        %1206 = vmatprep.subr.mxu0 0.0
        %1207 = vmatpush2.msra.mxu0 0.0
        %1208 = vmatprep.subr.mxu0 0.0
        %1209 = vmatpush2.msra.mxu0 0.0
        %1210 = vmatprep.subr.mxu0 0.0
        %1211 = vmatpush2.msra.mxu0 0.0
        %1212 = vmatprep.mubr.f32.mxu0 0.0
        %1213 = vmatmul.mubr.f32.gmra.mxu0 %v1006
        %v1214 = vpop.f32.mrf.mxu0
        %v1215 = vadd.f32 0.0, %v1214
        %v1216 = vpop.f32.mrf.mxu0
        %v1217 = vadd.f32 0.0, %v1216
        %1218 = vdwg.mxu0
        %v1219 = vadd.f32 %v1009, %v1144
        %v1220 = vadd.f32 %v1010, %v1146
        %v1221 = vadd.f32 %v1011, %v1215
        %v1222 = vadd.f32 %v1012, %v1217
        %v1223 = vxor.u32 %v1219, 2147483648
        %v1224 = vmul.f32 %v1223, 1.442695
        %v1225 = vpow.pop %v1224
        %v1226 = vadd.f32 %v1225, 1.0
        %v1227 = vrcp.pop %v1226
        %v1228 = vmul.f32 1.0, %v1227
        %v1229 = vxor.u32 %v1220, 2147483648
        %v1230 = vmul.f32 %v1229, 1.442695
        %v1231 = vpow.pop %v1230
        %v1232 = vadd.f32 %v1231, 1.0
        %v1233 = vrcp.pop %v1232
        %v1234 = vmul.f32 1.0, %v1233
        %v1235 = vtanh.pop %v1221
        %v1236 = vxor.u32 %v1222, 2147483648
        %v1237 = vmul.f32 %v1236, 1.442695
        %v1238 = vpow.pop %v1237
        %v1239 = vadd.f32 %v1238, 1.0
        %v1240 = vrcp.pop %v1239
        %v1241 = vmul.f32 1.0, %v1240
        %v1242 = vmul.f32 %v1234, %v1004
        %v1243 = vmul.f32 %v1228, %v1235
        %v1244 = vadd.f32 %v1242, %v1243
        %v1245 = vtanh.pop %v1244
        %v1246 = vmul.f32 %v1241, %v1245
        %s1247 = sadd.s32 0, 1
        %s1248 = smul.u32 %s1247, 8
        %s1249 = scalar_lea.vmem [#allocation2], %s1248
        %1250 = vst [vmem:[%s1249] sm:$0xff] %v1246
        %s1251 = scalar_lea.vmem [#allocation3], 64
        %v1252 = vld [vmem:[%s1251] sm:$0xff]
        %v1253 = vld [vmem:[%s1251 + $0x8] sm:$0xff]
        %v1254 = vld [vmem:[%s1251 + $0x10] sm:$0xff]
        %v1255 = vld [vmem:[%s1251 + $0x18] sm:$0xff]
        %v1256 = vld [vmem:[%s343] sm:$0xff]
        %v1257 = vld [vmem:[%s343 + $0x8] sm:$0xff]
        %v1258 = vld [vmem:[%s343 + $0x10] sm:$0xff]
        %v1259 = vld [vmem:[%s343 + $0x18] sm:$0xff]
        %v1260 = vld [vmem:[%s343 + $0x20] sm:$0xff]
        %v1261 = vld [vmem:[%s343 + $0x28] sm:$0xff]
        %v1262 = vld [vmem:[%s343 + $0x30] sm:$0xff]
        %v1263 = vld [vmem:[%s343 + $0x38] sm:$0xff]
        %v1264 = vld [vmem:[%s343 + $0x40] sm:$0xff]
        %v1265 = vld [vmem:[%s343 + $0x48] sm:$0xff]
        %v1266 = vld [vmem:[%s343 + $0x50] sm:$0xff]
        %v1267 = vld [vmem:[%s343 + $0x58] sm:$0xff]
        %v1268 = vld [vmem:[%s343 + $0x60] sm:$0xff]
        %v1269 = vld [vmem:[%s343 + $0x68] sm:$0xff]
        %v1270 = vld [vmem:[%s343 + $0x70] sm:$0xff]
        %v1271 = vld [vmem:[%s343 + $0x78] sm:$0xff]
        %v1272 = vld [vmem:[%s343 + $0x80] sm:$0xff]
        %v1273 = vld [vmem:[%s343 + $0x88] sm:$0xff]
        %v1274 = vld [vmem:[%s343 + $0x90] sm:$0xff]
        %v1275 = vld [vmem:[%s343 + $0x98] sm:$0xff]
        %v1276 = vld [vmem:[%s343 + $0xa0] sm:$0xff]
        %v1277 = vld [vmem:[%s343 + $0xa8] sm:$0xff]
        %v1278 = vld [vmem:[%s343 + $0xb0] sm:$0xff]
        %v1279 = vld [vmem:[%s343 + $0xb8] sm:$0xff]
        %v1280 = vld [vmem:[%s343 + $0xc0] sm:$0xff]
        %v1281 = vld [vmem:[%s343 + $0xc8] sm:$0xff]
        %v1282 = vld [vmem:[%s343 + $0xd0] sm:$0xff]
        %v1283 = vld [vmem:[%s343 + $0xd8] sm:$0xff]
        %v1284 = vld [vmem:[%s343 + $0xe0] sm:$0xff]
        %v1285 = vld [vmem:[%s343 + $0xe8] sm:$0xff]
        %v1286 = vld [vmem:[%s343 + $0xf0] sm:$0xff]
        %v1287 = vld [vmem:[%s343 + $0xf8] sm:$0xff]
        %v1288 = vld [vmem:[%s343 + $0x100] sm:$0xff]
        %v1289 = vld [vmem:[%s343 + $0x108] sm:$0xff]
        %v1290 = vld [vmem:[%s343 + $0x110] sm:$0xff]
        %v1291 = vld [vmem:[%s343 + $0x118] sm:$0xff]
        %v1292 = vld [vmem:[%s343 + $0x120] sm:$0xff]
        %v1293 = vld [vmem:[%s343 + $0x128] sm:$0xff]
        %v1294 = vld [vmem:[%s343 + $0x130] sm:$0xff]
        %v1295 = vld [vmem:[%s343 + $0x138] sm:$0xff]
        %v1296 = vld [vmem:[%s343 + $0x140] sm:$0xff]
        %v1297 = vld [vmem:[%s343 + $0x148] sm:$0xff]
        %v1298 = vld [vmem:[%s343 + $0x150] sm:$0xff]
        %v1299 = vld [vmem:[%s343 + $0x158] sm:$0xff]
        %v1300 = vld [vmem:[%s343 + $0x160] sm:$0xff]
        %v1301 = vld [vmem:[%s343 + $0x168] sm:$0xff]
        %v1302 = vld [vmem:[%s343 + $0x170] sm:$0xff]
        %v1303 = vld [vmem:[%s343 + $0x178] sm:$0xff]
        %v1304 = vld [vmem:[%s343 + $0x180] sm:$0xff]
        %v1305 = vld [vmem:[%s343 + $0x188] sm:$0xff]
        %v1306 = vld [vmem:[%s343 + $0x190] sm:$0xff]
        %v1307 = vld [vmem:[%s343 + $0x198] sm:$0xff]
        %v1308 = vld [vmem:[%s343 + $0x1a0] sm:$0xff]
        %v1309 = vld [vmem:[%s343 + $0x1a8] sm:$0xff]
        %v1310 = vld [vmem:[%s343 + $0x1b0] sm:$0xff]
        %v1311 = vld [vmem:[%s343 + $0x1b8] sm:$0xff]
        %v1312 = vld [vmem:[%s343 + $0x1c0] sm:$0xff]
        %v1313 = vld [vmem:[%s343 + $0x1c8] sm:$0xff]
        %v1314 = vld [vmem:[%s343 + $0x1d0] sm:$0xff]
        %v1315 = vld [vmem:[%s343 + $0x1d8] sm:$0xff]
        %v1316 = vld [vmem:[%s343 + $0x1e0] sm:$0xff]
        %v1317 = vld [vmem:[%s343 + $0x1e8] sm:$0xff]
        %v1318 = vld [vmem:[%s343 + $0x1f0] sm:$0xff]
        %v1319 = vld [vmem:[%s343 + $0x1f8] sm:$0xff]
        %1320 = vmatprep.subr.mxu0 %v1317
        %1321 = vmatpush1.msra.mxu0 %v1316
        %1322 = vmatprep.subr.mxu0 %v1313
        %1323 = vmatpush1.msra.mxu0 %v1312
        %1324 = vmatprep.subr.mxu0 %v1309
        %1325 = vmatpush1.msra.mxu0 %v1308
        %1326 = vmatprep.subr.mxu0 %v1305
        %1327 = vmatpush1.msra.mxu0 %v1304
        %1328 = vmatprep.subr.mxu0 %v1301
        %1329 = vmatpush1.msra.mxu0 %v1300
        %1330 = vmatprep.subr.mxu0 %v1297
        %1331 = vmatpush1.msra.mxu0 %v1296
        %1332 = vmatprep.subr.mxu0 %v1293
        %1333 = vmatpush1.msra.mxu0 %v1292
        %1334 = vmatprep.subr.mxu0 %v1289
        %1335 = vmatpush1.msra.mxu0 %v1288
        %1336 = vmatprep.subr.mxu0 %v1285
        %1337 = vmatpush1.msra.mxu0 %v1284
        %1338 = vmatprep.subr.mxu0 %v1281
        %1339 = vmatpush1.msra.mxu0 %v1280
        %1340 = vmatprep.subr.mxu0 %v1277
        %1341 = vmatpush1.msra.mxu0 %v1276
        %1342 = vmatprep.subr.mxu0 %v1273
        %1343 = vmatpush1.msra.mxu0 %v1272
        %1344 = vmatprep.subr.mxu0 %v1269
        %1345 = vmatpush1.msra.mxu0 %v1268
        %1346 = vmatprep.subr.mxu0 %v1265
        %1347 = vmatpush1.msra.mxu0 %v1264
        %1348 = vmatprep.subr.mxu0 %v1261
        %1349 = vmatpush1.msra.mxu0 %v1260
        %1350 = vmatprep.subr.mxu0 %v1257
        %1351 = vmatpush1.msra.mxu0 %v1256
        %1352 = vmatprep.subr.mxu0 0.0
        %1353 = vmatpush2.msra.mxu0 0.0
        %1354 = vmatprep.subr.mxu0 0.0
        %1355 = vmatpush2.msra.mxu0 0.0
        %1356 = vmatprep.subr.mxu0 0.0
        %1357 = vmatpush2.msra.mxu0 0.0
        %1358 = vmatprep.subr.mxu0 0.0
        %1359 = vmatpush2.msra.mxu0 0.0
        %1360 = vmatprep.subr.mxu0 0.0
        %1361 = vmatpush2.msra.mxu0 0.0
        %1362 = vmatprep.subr.mxu0 0.0
        %1363 = vmatpush2.msra.mxu0 0.0
        %1364 = vmatprep.subr.mxu0 0.0
        %1365 = vmatpush2.msra.mxu0 0.0
        %1366 = vmatprep.subr.mxu0 0.0
        %1367 = vmatpush2.msra.mxu0 0.0
        %1368 = vmatprep.subr.mxu0 0.0
        %1369 = vmatpush2.msra.mxu0 0.0
        %1370 = vmatprep.subr.mxu0 0.0
        %1371 = vmatpush2.msra.mxu0 0.0
        %1372 = vmatprep.subr.mxu0 0.0
        %1373 = vmatpush2.msra.mxu0 0.0
        %1374 = vmatprep.subr.mxu0 0.0
        %1375 = vmatpush2.msra.mxu0 0.0
        %1376 = vmatprep.subr.mxu0 0.0
        %1377 = vmatpush2.msra.mxu0 0.0
        %1378 = vmatprep.subr.mxu0 0.0
        %1379 = vmatpush2.msra.mxu0 0.0
        %1380 = vmatprep.subr.mxu0 0.0
        %1381 = vmatpush2.msra.mxu0 0.0
        %1382 = vmatprep.subr.mxu0 0.0
        %1383 = vmatpush2.msra.mxu0 0.0
        %1384 = vmatprep.mubr.f32.mxu0 0.0
        %1385 = vmatmul.mubr.f32.gmra.mxu0 %v1246
        %v1386 = vpop.f32.mrf.mxu0
        %v1387 = vadd.f32 0.0, %v1386
        %v1388 = vpop.f32.mrf.mxu0
        %v1389 = vadd.f32 0.0, %v1388
        %1390 = vdwg.mxu0
        %1391 = vmatprep.subr.mxu0 %v1319
        %1392 = vmatpush1.msra.mxu0 %v1318
        %1393 = vmatprep.subr.mxu0 %v1315
        %1394 = vmatpush1.msra.mxu0 %v1314
        %1395 = vmatprep.subr.mxu0 %v1311
        %1396 = vmatpush1.msra.mxu0 %v1310
        %1397 = vmatprep.subr.mxu0 %v1307
        %1398 = vmatpush1.msra.mxu0 %v1306
        %1399 = vmatprep.subr.mxu0 %v1303
        %1400 = vmatpush1.msra.mxu0 %v1302
        %1401 = vmatprep.subr.mxu0 %v1299
        %1402 = vmatpush1.msra.mxu0 %v1298
        %1403 = vmatprep.subr.mxu0 %v1295
        %1404 = vmatpush1.msra.mxu0 %v1294
        %1405 = vmatprep.subr.mxu0 %v1291
        %1406 = vmatpush1.msra.mxu0 %v1290
        %1407 = vmatprep.subr.mxu0 %v1287
        %1408 = vmatpush1.msra.mxu0 %v1286
        %1409 = vmatprep.subr.mxu0 %v1283
        %1410 = vmatpush1.msra.mxu0 %v1282
        %1411 = vmatprep.subr.mxu0 %v1279
        %1412 = vmatpush1.msra.mxu0 %v1278
        %1413 = vmatprep.subr.mxu0 %v1275
        %1414 = vmatpush1.msra.mxu0 %v1274
        %1415 = vmatprep.subr.mxu0 %v1271
        %1416 = vmatpush1.msra.mxu0 %v1270
        %1417 = vmatprep.subr.mxu0 %v1267
        %1418 = vmatpush1.msra.mxu0 %v1266
        %1419 = vmatprep.subr.mxu0 %v1263
        %1420 = vmatpush1.msra.mxu0 %v1262
        %1421 = vmatprep.subr.mxu0 %v1259
        %1422 = vmatpush1.msra.mxu0 %v1258
        %1423 = vmatprep.subr.mxu0 0.0
        %1424 = vmatpush2.msra.mxu0 0.0
        %1425 = vmatprep.subr.mxu0 0.0
        %1426 = vmatpush2.msra.mxu0 0.0
        %1427 = vmatprep.subr.mxu0 0.0
        %1428 = vmatpush2.msra.mxu0 0.0
        %1429 = vmatprep.subr.mxu0 0.0
        %1430 = vmatpush2.msra.mxu0 0.0
        %1431 = vmatprep.subr.mxu0 0.0
        %1432 = vmatpush2.msra.mxu0 0.0
        %1433 = vmatprep.subr.mxu0 0.0
        %1434 = vmatpush2.msra.mxu0 0.0
        %1435 = vmatprep.subr.mxu0 0.0
        %1436 = vmatpush2.msra.mxu0 0.0
        %1437 = vmatprep.subr.mxu0 0.0
        %1438 = vmatpush2.msra.mxu0 0.0
        %1439 = vmatprep.subr.mxu0 0.0
        %1440 = vmatpush2.msra.mxu0 0.0
        %1441 = vmatprep.subr.mxu0 0.0
        %1442 = vmatpush2.msra.mxu0 0.0
        %1443 = vmatprep.subr.mxu0 0.0
        %1444 = vmatpush2.msra.mxu0 0.0
        %1445 = vmatprep.subr.mxu0 0.0
        %1446 = vmatpush2.msra.mxu0 0.0
        %1447 = vmatprep.subr.mxu0 0.0
        %1448 = vmatpush2.msra.mxu0 0.0
        %1449 = vmatprep.subr.mxu0 0.0
        %1450 = vmatpush2.msra.mxu0 0.0
        %1451 = vmatprep.subr.mxu0 0.0
        %1452 = vmatpush2.msra.mxu0 0.0
        %1453 = vmatprep.subr.mxu0 0.0
        %1454 = vmatpush2.msra.mxu0 0.0
        %1455 = vmatprep.mubr.f32.mxu0 0.0
        %1456 = vmatmul.mubr.f32.gmra.mxu0 %v1246
        %v1457 = vpop.f32.mrf.mxu0
        %v1458 = vadd.f32 0.0, %v1457
        %v1459 = vpop.f32.mrf.mxu0
        %v1460 = vadd.f32 0.0, %v1459
        %1461 = vdwg.mxu0
        %v1462 = vadd.f32 %v1252, %v1387
        %v1463 = vadd.f32 %v1253, %v1389
        %v1464 = vadd.f32 %v1254, %v1458
        %v1465 = vadd.f32 %v1255, %v1460
        %v1466 = vxor.u32 %v1462, 2147483648
        %v1467 = vmul.f32 %v1466, 1.442695
        %v1468 = vpow.pop %v1467
        %v1469 = vadd.f32 %v1468, 1.0
        %v1470 = vrcp.pop %v1469
        %v1471 = vmul.f32 1.0, %v1470
        %v1472 = vxor.u32 %v1463, 2147483648
        %v1473 = vmul.f32 %v1472, 1.442695
        %v1474 = vpow.pop %v1473
        %v1475 = vadd.f32 %v1474, 1.0
        %v1476 = vrcp.pop %v1475
        %v1477 = vmul.f32 1.0, %v1476
        %v1478 = vtanh.pop %v1464
        %v1479 = vxor.u32 %v1465, 2147483648
        %v1480 = vmul.f32 %v1479, 1.442695
        %v1481 = vpow.pop %v1480
        %v1482 = vadd.f32 %v1481, 1.0
        %v1483 = vrcp.pop %v1482
        %v1484 = vmul.f32 1.0, %v1483
        %v1485 = vmul.f32 %v1477, %v1244
        %v1486 = vmul.f32 %v1471, %v1478
        %v1487 = vadd.f32 %v1485, %v1486
        %v1488 = vtanh.pop %v1487
        %v1489 = vmul.f32 %v1484, %v1488
        %s1490 = sadd.s32 0, 2
        %s1491 = smul.u32 %s1490, 8
        %s1492 = scalar_lea.vmem [#allocation2], %s1491
        %1493 = vst [vmem:[%s1492] sm:$0xff] %v1489
        %s1494 = scalar_lea.vmem [#allocation3], 96
        %v1495 = vld [vmem:[%s1494] sm:$0xff]
        %v1496 = vld [vmem:[%s1494 + $0x8] sm:$0xff]
        %v1497 = vld [vmem:[%s1494 + $0x10] sm:$0xff]
        %v1498 = vld [vmem:[%s1494 + $0x18] sm:$0xff]
        %v1499 = vld [vmem:[%s343] sm:$0xff]
        %v1500 = vld [vmem:[%s343 + $0x8] sm:$0xff]
        %v1501 = vld [vmem:[%s343 + $0x10] sm:$0xff]
        %v1502 = vld [vmem:[%s343 + $0x18] sm:$0xff]
        %v1503 = vld [vmem:[%s343 + $0x20] sm:$0xff]
        %v1504 = vld [vmem:[%s343 + $0x28] sm:$0xff]
        %v1505 = vld [vmem:[%s343 + $0x30] sm:$0xff]
        %v1506 = vld [vmem:[%s343 + $0x38] sm:$0xff]
        %v1507 = vld [vmem:[%s343 + $0x40] sm:$0xff]
        %v1508 = vld [vmem:[%s343 + $0x48] sm:$0xff]
        %v1509 = vld [vmem:[%s343 + $0x50] sm:$0xff]
        %v1510 = vld [vmem:[%s343 + $0x58] sm:$0xff]
        %v1511 = vld [vmem:[%s343 + $0x60] sm:$0xff]
        %v1512 = vld [vmem:[%s343 + $0x68] sm:$0xff]
        %v1513 = vld [vmem:[%s343 + $0x70] sm:$0xff]
        %v1514 = vld [vmem:[%s343 + $0x78] sm:$0xff]
        %v1515 = vld [vmem:[%s343 + $0x80] sm:$0xff]
        %v1516 = vld [vmem:[%s343 + $0x88] sm:$0xff]
        %v1517 = vld [vmem:[%s343 + $0x90] sm:$0xff]
        %v1518 = vld [vmem:[%s343 + $0x98] sm:$0xff]
        %v1519 = vld [vmem:[%s343 + $0xa0] sm:$0xff]
        %v1520 = vld [vmem:[%s343 + $0xa8] sm:$0xff]
        %v1521 = vld [vmem:[%s343 + $0xb0] sm:$0xff]
        %v1522 = vld [vmem:[%s343 + $0xb8] sm:$0xff]
        %v1523 = vld [vmem:[%s343 + $0xc0] sm:$0xff]
        %v1524 = vld [vmem:[%s343 + $0xc8] sm:$0xff]
        %v1525 = vld [vmem:[%s343 + $0xd0] sm:$0xff]
        %v1526 = vld [vmem:[%s343 + $0xd8] sm:$0xff]
        %v1527 = vld [vmem:[%s343 + $0xe0] sm:$0xff]
        %v1528 = vld [vmem:[%s343 + $0xe8] sm:$0xff]
        %v1529 = vld [vmem:[%s343 + $0xf0] sm:$0xff]
        %v1530 = vld [vmem:[%s343 + $0xf8] sm:$0xff]
        %v1531 = vld [vmem:[%s343 + $0x100] sm:$0xff]
        %v1532 = vld [vmem:[%s343 + $0x108] sm:$0xff]
        %v1533 = vld [vmem:[%s343 + $0x110] sm:$0xff]
        %v1534 = vld [vmem:[%s343 + $0x118] sm:$0xff]
        %v1535 = vld [vmem:[%s343 + $0x120] sm:$0xff]
        %v1536 = vld [vmem:[%s343 + $0x128] sm:$0xff]
        %v1537 = vld [vmem:[%s343 + $0x130] sm:$0xff]
        %v1538 = vld [vmem:[%s343 + $0x138] sm:$0xff]
        %v1539 = vld [vmem:[%s343 + $0x140] sm:$0xff]
        %v1540 = vld [vmem:[%s343 + $0x148] sm:$0xff]
        %v1541 = vld [vmem:[%s343 + $0x150] sm:$0xff]
        %v1542 = vld [vmem:[%s343 + $0x158] sm:$0xff]
        %v1543 = vld [vmem:[%s343 + $0x160] sm:$0xff]
        %v1544 = vld [vmem:[%s343 + $0x168] sm:$0xff]
        %v1545 = vld [vmem:[%s343 + $0x170] sm:$0xff]
        %v1546 = vld [vmem:[%s343 + $0x178] sm:$0xff]
        %v1547 = vld [vmem:[%s343 + $0x180] sm:$0xff]
        %v1548 = vld [vmem:[%s343 + $0x188] sm:$0xff]
        %v1549 = vld [vmem:[%s343 + $0x190] sm:$0xff]
        %v1550 = vld [vmem:[%s343 + $0x198] sm:$0xff]
        %v1551 = vld [vmem:[%s343 + $0x1a0] sm:$0xff]
        %v1552 = vld [vmem:[%s343 + $0x1a8] sm:$0xff]
        %v1553 = vld [vmem:[%s343 + $0x1b0] sm:$0xff]
        %v1554 = vld [vmem:[%s343 + $0x1b8] sm:$0xff]
        %v1555 = vld [vmem:[%s343 + $0x1c0] sm:$0xff]
        %v1556 = vld [vmem:[%s343 + $0x1c8] sm:$0xff]
        %v1557 = vld [vmem:[%s343 + $0x1d0] sm:$0xff]
        %v1558 = vld [vmem:[%s343 + $0x1d8] sm:$0xff]
        %v1559 = vld [vmem:[%s343 + $0x1e0] sm:$0xff]
        %v1560 = vld [vmem:[%s343 + $0x1e8] sm:$0xff]
        %v1561 = vld [vmem:[%s343 + $0x1f0] sm:$0xff]
        %v1562 = vld [vmem:[%s343 + $0x1f8] sm:$0xff]
        %1563 = vmatprep.subr.mxu0 %v1560
        %1564 = vmatpush1.msra.mxu0 %v1559
        %1565 = vmatprep.subr.mxu0 %v1556
        %1566 = vmatpush1.msra.mxu0 %v1555
        %1567 = vmatprep.subr.mxu0 %v1552
        %1568 = vmatpush1.msra.mxu0 %v1551
        %1569 = vmatprep.subr.mxu0 %v1548
        %1570 = vmatpush1.msra.mxu0 %v1547
        %1571 = vmatprep.subr.mxu0 %v1544
        %1572 = vmatpush1.msra.mxu0 %v1543
        %1573 = vmatprep.subr.mxu0 %v1540
        %1574 = vmatpush1.msra.mxu0 %v1539
        %1575 = vmatprep.subr.mxu0 %v1536
        %1576 = vmatpush1.msra.mxu0 %v1535
        %1577 = vmatprep.subr.mxu0 %v1532
        %1578 = vmatpush1.msra.mxu0 %v1531
        %1579 = vmatprep.subr.mxu0 %v1528
        %1580 = vmatpush1.msra.mxu0 %v1527
        %1581 = vmatprep.subr.mxu0 %v1524
        %1582 = vmatpush1.msra.mxu0 %v1523
        %1583 = vmatprep.subr.mxu0 %v1520
        %1584 = vmatpush1.msra.mxu0 %v1519
        %1585 = vmatprep.subr.mxu0 %v1516
        %1586 = vmatpush1.msra.mxu0 %v1515
        %1587 = vmatprep.subr.mxu0 %v1512
        %1588 = vmatpush1.msra.mxu0 %v1511
        %1589 = vmatprep.subr.mxu0 %v1508
        %1590 = vmatpush1.msra.mxu0 %v1507
        %1591 = vmatprep.subr.mxu0 %v1504
        %1592 = vmatpush1.msra.mxu0 %v1503
        %1593 = vmatprep.subr.mxu0 %v1500
        %1594 = vmatpush1.msra.mxu0 %v1499
        %1595 = vmatprep.subr.mxu0 0.0
        %1596 = vmatpush2.msra.mxu0 0.0
        %1597 = vmatprep.subr.mxu0 0.0
        %1598 = vmatpush2.msra.mxu0 0.0
        %1599 = vmatprep.subr.mxu0 0.0
        %1600 = vmatpush2.msra.mxu0 0.0
        %1601 = vmatprep.subr.mxu0 0.0
        %1602 = vmatpush2.msra.mxu0 0.0
        %1603 = vmatprep.subr.mxu0 0.0
        %1604 = vmatpush2.msra.mxu0 0.0
        %1605 = vmatprep.subr.mxu0 0.0
        %1606 = vmatpush2.msra.mxu0 0.0
        %1607 = vmatprep.subr.mxu0 0.0
        %1608 = vmatpush2.msra.mxu0 0.0
        %1609 = vmatprep.subr.mxu0 0.0
        %1610 = vmatpush2.msra.mxu0 0.0
        %1611 = vmatprep.subr.mxu0 0.0
        %1612 = vmatpush2.msra.mxu0 0.0
        %1613 = vmatprep.subr.mxu0 0.0
        %1614 = vmatpush2.msra.mxu0 0.0
        %1615 = vmatprep.subr.mxu0 0.0
        %1616 = vmatpush2.msra.mxu0 0.0
        %1617 = vmatprep.subr.mxu0 0.0
        %1618 = vmatpush2.msra.mxu0 0.0
        %1619 = vmatprep.subr.mxu0 0.0
        %1620 = vmatpush2.msra.mxu0 0.0
        %1621 = vmatprep.subr.mxu0 0.0
        %1622 = vmatpush2.msra.mxu0 0.0
        %1623 = vmatprep.subr.mxu0 0.0
        %1624 = vmatpush2.msra.mxu0 0.0
        %1625 = vmatprep.subr.mxu0 0.0
        %1626 = vmatpush2.msra.mxu0 0.0
        %1627 = vmatprep.mubr.f32.mxu0 0.0
        %1628 = vmatmul.mubr.f32.gmra.mxu0 %v1489
        %v1629 = vpop.f32.mrf.mxu0
        %v1630 = vadd.f32 0.0, %v1629
        %v1631 = vpop.f32.mrf.mxu0
        %v1632 = vadd.f32 0.0, %v1631
        %1633 = vdwg.mxu0
        %1634 = vmatprep.subr.mxu0 %v1562
        %1635 = vmatpush1.msra.mxu0 %v1561
        %1636 = vmatprep.subr.mxu0 %v1558
        %1637 = vmatpush1.msra.mxu0 %v1557
        %1638 = vmatprep.subr.mxu0 %v1554
        %1639 = vmatpush1.msra.mxu0 %v1553
        %1640 = vmatprep.subr.mxu0 %v1550
        %1641 = vmatpush1.msra.mxu0 %v1549
        %1642 = vmatprep.subr.mxu0 %v1546
        %1643 = vmatpush1.msra.mxu0 %v1545
        %1644 = vmatprep.subr.mxu0 %v1542
        %1645 = vmatpush1.msra.mxu0 %v1541
        %1646 = vmatprep.subr.mxu0 %v1538
        %1647 = vmatpush1.msra.mxu0 %v1537
        %1648 = vmatprep.subr.mxu0 %v1534
        %1649 = vmatpush1.msra.mxu0 %v1533
        %1650 = vmatprep.subr.mxu0 %v1530
        %1651 = vmatpush1.msra.mxu0 %v1529
        %1652 = vmatprep.subr.mxu0 %v1526
        %1653 = vmatpush1.msra.mxu0 %v1525
        %1654 = vmatprep.subr.mxu0 %v1522
        %1655 = vmatpush1.msra.mxu0 %v1521
        %1656 = vmatprep.subr.mxu0 %v1518
        %1657 = vmatpush1.msra.mxu0 %v1517
        %1658 = vmatprep.subr.mxu0 %v1514
        %1659 = vmatpush1.msra.mxu0 %v1513
        %1660 = vmatprep.subr.mxu0 %v1510
        %1661 = vmatpush1.msra.mxu0 %v1509
        %1662 = vmatprep.subr.mxu0 %v1506
        %1663 = vmatpush1.msra.mxu0 %v1505
        %1664 = vmatprep.subr.mxu0 %v1502
        %1665 = vmatpush1.msra.mxu0 %v1501
        %1666 = vmatprep.subr.mxu0 0.0
        %1667 = vmatpush2.msra.mxu0 0.0
        %1668 = vmatprep.subr.mxu0 0.0
        %1669 = vmatpush2.msra.mxu0 0.0
        %1670 = vmatprep.subr.mxu0 0.0
        %1671 = vmatpush2.msra.mxu0 0.0
        %1672 = vmatprep.subr.mxu0 0.0
        %1673 = vmatpush2.msra.mxu0 0.0
        %1674 = vmatprep.subr.mxu0 0.0
        %1675 = vmatpush2.msra.mxu0 0.0
        %1676 = vmatprep.subr.mxu0 0.0
        %1677 = vmatpush2.msra.mxu0 0.0
        %1678 = vmatprep.subr.mxu0 0.0
        %1679 = vmatpush2.msra.mxu0 0.0
        %1680 = vmatprep.subr.mxu0 0.0
        %1681 = vmatpush2.msra.mxu0 0.0
        %1682 = vmatprep.subr.mxu0 0.0
        %1683 = vmatpush2.msra.mxu0 0.0
        %1684 = vmatprep.subr.mxu0 0.0
        %1685 = vmatpush2.msra.mxu0 0.0
        %1686 = vmatprep.subr.mxu0 0.0
        %1687 = vmatpush2.msra.mxu0 0.0
        %1688 = vmatprep.subr.mxu0 0.0
        %1689 = vmatpush2.msra.mxu0 0.0
        %1690 = vmatprep.subr.mxu0 0.0
        %1691 = vmatpush2.msra.mxu0 0.0
        %1692 = vmatprep.subr.mxu0 0.0
        %1693 = vmatpush2.msra.mxu0 0.0
        %1694 = vmatprep.subr.mxu0 0.0
        %1695 = vmatpush2.msra.mxu0 0.0
        %1696 = vmatprep.subr.mxu0 0.0
        %1697 = vmatpush2.msra.mxu0 0.0
        %1698 = vmatprep.mubr.f32.mxu0 0.0
        %1699 = vmatmul.mubr.f32.gmra.mxu0 %v1489
        %v1700 = vpop.f32.mrf.mxu0
        %v1701 = vadd.f32 0.0, %v1700
        %v1702 = vpop.f32.mrf.mxu0
        %v1703 = vadd.f32 0.0, %v1702
        %1704 = vdwg.mxu0
        %v1705 = vadd.f32 %v1495, %v1630
        %v1706 = vadd.f32 %v1496, %v1632
        %v1707 = vadd.f32 %v1497, %v1701
        %v1708 = vadd.f32 %v1498, %v1703
        %v1709 = vxor.u32 %v1705, 2147483648
        %v1710 = vmul.f32 %v1709, 1.442695
        %v1711 = vpow.pop %v1710
        %v1712 = vadd.f32 %v1711, 1.0
        %v1713 = vrcp.pop %v1712
        %v1714 = vmul.f32 1.0, %v1713
        %v1715 = vxor.u32 %v1706, 2147483648
        %v1716 = vmul.f32 %v1715, 1.442695
        %v1717 = vpow.pop %v1716
        %v1718 = vadd.f32 %v1717, 1.0
        %v1719 = vrcp.pop %v1718
        %v1720 = vmul.f32 1.0, %v1719
        %v1721 = vtanh.pop %v1707
        %v1722 = vxor.u32 %v1708, 2147483648
        %v1723 = vmul.f32 %v1722, 1.442695
        %v1724 = vpow.pop %v1723
        %v1725 = vadd.f32 %v1724, 1.0
        %v1726 = vrcp.pop %v1725
        %v1727 = vmul.f32 1.0, %v1726
        %v1728 = vmul.f32 %v1720, %v1487
        %v1729 = vmul.f32 %v1714, %v1721
        %v1730 = vadd.f32 %v1728, %v1729
        %v1731 = vtanh.pop %v1730
        %v1732 = vmul.f32 %v1727, %v1731
        %s1733 = sadd.s32 0, 3
        %s1734 = smul.u32 %s1733, 8
        %s1735 = scalar_lea.vmem [#allocation2], %s1734
        %1736 = vst [vmem:[%s1735] sm:$0xff] %v1732
        %s1737 = scalar_lea.vmem [#allocation3], 128
        %v1738 = vld [vmem:[%s1737] sm:$0xff]
        %v1739 = vld [vmem:[%s1737 + $0x8] sm:$0xff]
        %v1740 = vld [vmem:[%s1737 + $0x10] sm:$0xff]
        %v1741 = vld [vmem:[%s1737 + $0x18] sm:$0xff]
        %v1742 = vld [vmem:[%s343] sm:$0xff]
        %v1743 = vld [vmem:[%s343 + $0x8] sm:$0xff]
        %v1744 = vld [vmem:[%s343 + $0x10] sm:$0xff]
        %v1745 = vld [vmem:[%s343 + $0x18] sm:$0xff]
        %v1746 = vld [vmem:[%s343 + $0x20] sm:$0xff]
        %v1747 = vld [vmem:[%s343 + $0x28] sm:$0xff]
        %v1748 = vld [vmem:[%s343 + $0x30] sm:$0xff]
        %v1749 = vld [vmem:[%s343 + $0x38] sm:$0xff]
        %v1750 = vld [vmem:[%s343 + $0x40] sm:$0xff]
        %v1751 = vld [vmem:[%s343 + $0x48] sm:$0xff]
        %v1752 = vld [vmem:[%s343 + $0x50] sm:$0xff]
        %v1753 = vld [vmem:[%s343 + $0x58] sm:$0xff]
        %v1754 = vld [vmem:[%s343 + $0x60] sm:$0xff]
        %v1755 = vld [vmem:[%s343 + $0x68] sm:$0xff]
        %v1756 = vld [vmem:[%s343 + $0x70] sm:$0xff]
        %v1757 = vld [vmem:[%s343 + $0x78] sm:$0xff]
        %v1758 = vld [vmem:[%s343 + $0x80] sm:$0xff]
        %v1759 = vld [vmem:[%s343 + $0x88] sm:$0xff]
        %v1760 = vld [vmem:[%s343 + $0x90] sm:$0xff]
        %v1761 = vld [vmem:[%s343 + $0x98] sm:$0xff]
        %v1762 = vld [vmem:[%s343 + $0xa0] sm:$0xff]
        %v1763 = vld [vmem:[%s343 + $0xa8] sm:$0xff]
        %v1764 = vld [vmem:[%s343 + $0xb0] sm:$0xff]
        %v1765 = vld [vmem:[%s343 + $0xb8] sm:$0xff]
        %v1766 = vld [vmem:[%s343 + $0xc0] sm:$0xff]
        %v1767 = vld [vmem:[%s343 + $0xc8] sm:$0xff]
        %v1768 = vld [vmem:[%s343 + $0xd0] sm:$0xff]
        %v1769 = vld [vmem:[%s343 + $0xd8] sm:$0xff]
        %v1770 = vld [vmem:[%s343 + $0xe0] sm:$0xff]
        %v1771 = vld [vmem:[%s343 + $0xe8] sm:$0xff]
        %v1772 = vld [vmem:[%s343 + $0xf0] sm:$0xff]
        %v1773 = vld [vmem:[%s343 + $0xf8] sm:$0xff]
        %v1774 = vld [vmem:[%s343 + $0x100] sm:$0xff]
        %v1775 = vld [vmem:[%s343 + $0x108] sm:$0xff]
        %v1776 = vld [vmem:[%s343 + $0x110] sm:$0xff]
        %v1777 = vld [vmem:[%s343 + $0x118] sm:$0xff]
        %v1778 = vld [vmem:[%s343 + $0x120] sm:$0xff]
        %v1779 = vld [vmem:[%s343 + $0x128] sm:$0xff]
        %v1780 = vld [vmem:[%s343 + $0x130] sm:$0xff]
        %v1781 = vld [vmem:[%s343 + $0x138] sm:$0xff]
        %v1782 = vld [vmem:[%s343 + $0x140] sm:$0xff]
        %v1783 = vld [vmem:[%s343 + $0x148] sm:$0xff]
        %v1784 = vld [vmem:[%s343 + $0x150] sm:$0xff]
        %v1785 = vld [vmem:[%s343 + $0x158] sm:$0xff]
        %v1786 = vld [vmem:[%s343 + $0x160] sm:$0xff]
        %v1787 = vld [vmem:[%s343 + $0x168] sm:$0xff]
        %v1788 = vld [vmem:[%s343 + $0x170] sm:$0xff]
        %v1789 = vld [vmem:[%s343 + $0x178] sm:$0xff]
        %v1790 = vld [vmem:[%s343 + $0x180] sm:$0xff]
        %v1791 = vld [vmem:[%s343 + $0x188] sm:$0xff]
        %v1792 = vld [vmem:[%s343 + $0x190] sm:$0xff]
        %v1793 = vld [vmem:[%s343 + $0x198] sm:$0xff]
        %v1794 = vld [vmem:[%s343 + $0x1a0] sm:$0xff]
        %v1795 = vld [vmem:[%s343 + $0x1a8] sm:$0xff]
        %v1796 = vld [vmem:[%s343 + $0x1b0] sm:$0xff]
        %v1797 = vld [vmem:[%s343 + $0x1b8] sm:$0xff]
        %v1798 = vld [vmem:[%s343 + $0x1c0] sm:$0xff]
        %v1799 = vld [vmem:[%s343 + $0x1c8] sm:$0xff]
        %v1800 = vld [vmem:[%s343 + $0x1d0] sm:$0xff]
        %v1801 = vld [vmem:[%s343 + $0x1d8] sm:$0xff]
        %v1802 = vld [vmem:[%s343 + $0x1e0] sm:$0xff]
        %v1803 = vld [vmem:[%s343 + $0x1e8] sm:$0xff]
        %v1804 = vld [vmem:[%s343 + $0x1f0] sm:$0xff]
        %v1805 = vld [vmem:[%s343 + $0x1f8] sm:$0xff]
        %1806 = vmatprep.subr.mxu0 %v1803
        %1807 = vmatpush1.msra.mxu0 %v1802
        %1808 = vmatprep.subr.mxu0 %v1799
        %1809 = vmatpush1.msra.mxu0 %v1798
        %1810 = vmatprep.subr.mxu0 %v1795
        %1811 = vmatpush1.msra.mxu0 %v1794
        %1812 = vmatprep.subr.mxu0 %v1791
        %1813 = vmatpush1.msra.mxu0 %v1790
        %1814 = vmatprep.subr.mxu0 %v1787
        %1815 = vmatpush1.msra.mxu0 %v1786
        %1816 = vmatprep.subr.mxu0 %v1783
        %1817 = vmatpush1.msra.mxu0 %v1782
        %1818 = vmatprep.subr.mxu0 %v1779
        %1819 = vmatpush1.msra.mxu0 %v1778
        %1820 = vmatprep.subr.mxu0 %v1775
        %1821 = vmatpush1.msra.mxu0 %v1774
        %1822 = vmatprep.subr.mxu0 %v1771
        %1823 = vmatpush1.msra.mxu0 %v1770
        %1824 = vmatprep.subr.mxu0 %v1767
        %1825 = vmatpush1.msra.mxu0 %v1766
        %1826 = vmatprep.subr.mxu0 %v1763
        %1827 = vmatpush1.msra.mxu0 %v1762
        %1828 = vmatprep.subr.mxu0 %v1759
        %1829 = vmatpush1.msra.mxu0 %v1758
        %1830 = vmatprep.subr.mxu0 %v1755
        %1831 = vmatpush1.msra.mxu0 %v1754
        %1832 = vmatprep.subr.mxu0 %v1751
        %1833 = vmatpush1.msra.mxu0 %v1750
        %1834 = vmatprep.subr.mxu0 %v1747
        %1835 = vmatpush1.msra.mxu0 %v1746
        %1836 = vmatprep.subr.mxu0 %v1743
        %1837 = vmatpush1.msra.mxu0 %v1742
        %1838 = vmatprep.subr.mxu0 0.0
        %1839 = vmatpush2.msra.mxu0 0.0
        %1840 = vmatprep.subr.mxu0 0.0
        %1841 = vmatpush2.msra.mxu0 0.0
        %1842 = vmatprep.subr.mxu0 0.0
        %1843 = vmatpush2.msra.mxu0 0.0
        %1844 = vmatprep.subr.mxu0 0.0
        %1845 = vmatpush2.msra.mxu0 0.0
        %1846 = vmatprep.subr.mxu0 0.0
        %1847 = vmatpush2.msra.mxu0 0.0
        %1848 = vmatprep.subr.mxu0 0.0
        %1849 = vmatpush2.msra.mxu0 0.0
        %1850 = vmatprep.subr.mxu0 0.0
        %1851 = vmatpush2.msra.mxu0 0.0
        %1852 = vmatprep.subr.mxu0 0.0
        %1853 = vmatpush2.msra.mxu0 0.0
        %1854 = vmatprep.subr.mxu0 0.0
        %1855 = vmatpush2.msra.mxu0 0.0
        %1856 = vmatprep.subr.mxu0 0.0
        %1857 = vmatpush2.msra.mxu0 0.0
        %1858 = vmatprep.subr.mxu0 0.0
        %1859 = vmatpush2.msra.mxu0 0.0
        %1860 = vmatprep.subr.mxu0 0.0
        %1861 = vmatpush2.msra.mxu0 0.0
        %1862 = vmatprep.subr.mxu0 0.0
        %1863 = vmatpush2.msra.mxu0 0.0
        %1864 = vmatprep.subr.mxu0 0.0
        %1865 = vmatpush2.msra.mxu0 0.0
        %1866 = vmatprep.subr.mxu0 0.0
        %1867 = vmatpush2.msra.mxu0 0.0
        %1868 = vmatprep.subr.mxu0 0.0
        %1869 = vmatpush2.msra.mxu0 0.0
        %1870 = vmatprep.mubr.f32.mxu0 0.0
        %1871 = vmatmul.mubr.f32.gmra.mxu0 %v1732
        %v1872 = vpop.f32.mrf.mxu0
        %v1873 = vadd.f32 0.0, %v1872
        %v1874 = vpop.f32.mrf.mxu0
        %v1875 = vadd.f32 0.0, %v1874
        %1876 = vdwg.mxu0
        %1877 = vmatprep.subr.mxu0 %v1805
        %1878 = vmatpush1.msra.mxu0 %v1804
        %1879 = vmatprep.subr.mxu0 %v1801
        %1880 = vmatpush1.msra.mxu0 %v1800
        %1881 = vmatprep.subr.mxu0 %v1797
        %1882 = vmatpush1.msra.mxu0 %v1796
        %1883 = vmatprep.subr.mxu0 %v1793
        %1884 = vmatpush1.msra.mxu0 %v1792
        %1885 = vmatprep.subr.mxu0 %v1789
        %1886 = vmatpush1.msra.mxu0 %v1788
        %1887 = vmatprep.subr.mxu0 %v1785
        %1888 = vmatpush1.msra.mxu0 %v1784
        %1889 = vmatprep.subr.mxu0 %v1781
        %1890 = vmatpush1.msra.mxu0 %v1780
        %1891 = vmatprep.subr.mxu0 %v1777
        %1892 = vmatpush1.msra.mxu0 %v1776
        %1893 = vmatprep.subr.mxu0 %v1773
        %1894 = vmatpush1.msra.mxu0 %v1772
        %1895 = vmatprep.subr.mxu0 %v1769
        %1896 = vmatpush1.msra.mxu0 %v1768
        %1897 = vmatprep.subr.mxu0 %v1765
        %1898 = vmatpush1.msra.mxu0 %v1764
        %1899 = vmatprep.subr.mxu0 %v1761
        %1900 = vmatpush1.msra.mxu0 %v1760
        %1901 = vmatprep.subr.mxu0 %v1757
        %1902 = vmatpush1.msra.mxu0 %v1756
        %1903 = vmatprep.subr.mxu0 %v1753
        %1904 = vmatpush1.msra.mxu0 %v1752
        %1905 = vmatprep.subr.mxu0 %v1749
        %1906 = vmatpush1.msra.mxu0 %v1748
        %1907 = vmatprep.subr.mxu0 %v1745
        %1908 = vmatpush1.msra.mxu0 %v1744
        %1909 = vmatprep.subr.mxu0 0.0
        %1910 = vmatpush2.msra.mxu0 0.0
        %1911 = vmatprep.subr.mxu0 0.0
        %1912 = vmatpush2.msra.mxu0 0.0
        %1913 = vmatprep.subr.mxu0 0.0
        %1914 = vmatpush2.msra.mxu0 0.0
        %1915 = vmatprep.subr.mxu0 0.0
        %1916 = vmatpush2.msra.mxu0 0.0
        %1917 = vmatprep.subr.mxu0 0.0
        %1918 = vmatpush2.msra.mxu0 0.0
        %1919 = vmatprep.subr.mxu0 0.0
        %1920 = vmatpush2.msra.mxu0 0.0
        %1921 = vmatprep.subr.mxu0 0.0
        %1922 = vmatpush2.msra.mxu0 0.0
        %1923 = vmatprep.subr.mxu0 0.0
        %1924 = vmatpush2.msra.mxu0 0.0
        %1925 = vmatprep.subr.mxu0 0.0
        %1926 = vmatpush2.msra.mxu0 0.0
        %1927 = vmatprep.subr.mxu0 0.0
        %1928 = vmatpush2.msra.mxu0 0.0
        %1929 = vmatprep.subr.mxu0 0.0
        %1930 = vmatpush2.msra.mxu0 0.0
        %1931 = vmatprep.subr.mxu0 0.0
        %1932 = vmatpush2.msra.mxu0 0.0
        %1933 = vmatprep.subr.mxu0 0.0
        %1934 = vmatpush2.msra.mxu0 0.0
        %1935 = vmatprep.subr.mxu0 0.0
        %1936 = vmatpush2.msra.mxu0 0.0
        %1937 = vmatprep.subr.mxu0 0.0
        %1938 = vmatpush2.msra.mxu0 0.0
        %1939 = vmatprep.subr.mxu0 0.0
        %1940 = vmatpush2.msra.mxu0 0.0
        %1941 = vmatprep.mubr.f32.mxu0 0.0
        %1942 = vmatmul.mubr.f32.gmra.mxu0 %v1732
        %v1943 = vpop.f32.mrf.mxu0
        %v1944 = vadd.f32 0.0, %v1943
        %v1945 = vpop.f32.mrf.mxu0
        %v1946 = vadd.f32 0.0, %v1945
        %1947 = vdwg.mxu0
        %v1948 = vadd.f32 %v1738, %v1873
        %v1949 = vadd.f32 %v1739, %v1875
        %v1950 = vadd.f32 %v1740, %v1944
        %v1951 = vadd.f32 %v1741, %v1946
        %v1952 = vxor.u32 %v1948, 2147483648
        %v1953 = vmul.f32 %v1952, 1.442695
        %v1954 = vpow.pop %v1953
        %v1955 = vadd.f32 %v1954, 1.0
        %v1956 = vrcp.pop %v1955
        %v1957 = vmul.f32 1.0, %v1956
        %v1958 = vxor.u32 %v1949, 2147483648
        %v1959 = vmul.f32 %v1958, 1.442695
        %v1960 = vpow.pop %v1959
        %v1961 = vadd.f32 %v1960, 1.0
        %v1962 = vrcp.pop %v1961
        %v1963 = vmul.f32 1.0, %v1962
        %v1964 = vtanh.pop %v1950
        %v1965 = vxor.u32 %v1951, 2147483648
        %v1966 = vmul.f32 %v1965, 1.442695
        %v1967 = vpow.pop %v1966
        %v1968 = vadd.f32 %v1967, 1.0
        %v1969 = vrcp.pop %v1968
        %v1970 = vmul.f32 1.0, %v1969
        %v1971 = vmul.f32 %v1963, %v1730
        %v1972 = vmul.f32 %v1957, %v1964
        %v1973 = vadd.f32 %v1971, %v1972
        %v1974 = vtanh.pop %v1973
        %v1975 = vmul.f32 %v1970, %v1974
        %s1976 = sadd.s32 0, 4
        %s1977 = smul.u32 %s1976, 8
        %s1978 = scalar_lea.vmem [#allocation2], %s1977
        %1979 = vst [vmem:[%s1978] sm:$0xff] %v1975
        %s1980 = scalar_lea.vmem [#allocation3], 160
        %v1981 = vld [vmem:[%s1980] sm:$0xff]
        %v1982 = vld [vmem:[%s1980 + $0x8] sm:$0xff]
        %v1983 = vld [vmem:[%s1980 + $0x10] sm:$0xff]
        %v1984 = vld [vmem:[%s1980 + $0x18] sm:$0xff]
        %v1985 = vld [vmem:[%s343] sm:$0xff]
        %v1986 = vld [vmem:[%s343 + $0x8] sm:$0xff]
        %v1987 = vld [vmem:[%s343 + $0x10] sm:$0xff]
        %v1988 = vld [vmem:[%s343 + $0x18] sm:$0xff]
        %v1989 = vld [vmem:[%s343 + $0x20] sm:$0xff]
        %v1990 = vld [vmem:[%s343 + $0x28] sm:$0xff]
        %v1991 = vld [vmem:[%s343 + $0x30] sm:$0xff]
        %v1992 = vld [vmem:[%s343 + $0x38] sm:$0xff]
        %v1993 = vld [vmem:[%s343 + $0x40] sm:$0xff]
        %v1994 = vld [vmem:[%s343 + $0x48] sm:$0xff]
        %v1995 = vld [vmem:[%s343 + $0x50] sm:$0xff]
        %v1996 = vld [vmem:[%s343 + $0x58] sm:$0xff]
        %v1997 = vld [vmem:[%s343 + $0x60] sm:$0xff]
        %v1998 = vld [vmem:[%s343 + $0x68] sm:$0xff]
        %v1999 = vld [vmem:[%s343 + $0x70] sm:$0xff]
        %v2000 = vld [vmem:[%s343 + $0x78] sm:$0xff]
        %v2001 = vld [vmem:[%s343 + $0x80] sm:$0xff]
        %v2002 = vld [vmem:[%s343 + $0x88] sm:$0xff]
        %v2003 = vld [vmem:[%s343 + $0x90] sm:$0xff]
        %v2004 = vld [vmem:[%s343 + $0x98] sm:$0xff]
        %v2005 = vld [vmem:[%s343 + $0xa0] sm:$0xff]
        %v2006 = vld [vmem:[%s343 + $0xa8] sm:$0xff]
        %v2007 = vld [vmem:[%s343 + $0xb0] sm:$0xff]
        %v2008 = vld [vmem:[%s343 + $0xb8] sm:$0xff]
        %v2009 = vld [vmem:[%s343 + $0xc0] sm:$0xff]
        %v2010 = vld [vmem:[%s343 + $0xc8] sm:$0xff]
        %v2011 = vld [vmem:[%s343 + $0xd0] sm:$0xff]
        %v2012 = vld [vmem:[%s343 + $0xd8] sm:$0xff]
        %v2013 = vld [vmem:[%s343 + $0xe0] sm:$0xff]
        %v2014 = vld [vmem:[%s343 + $0xe8] sm:$0xff]
        %v2015 = vld [vmem:[%s343 + $0xf0] sm:$0xff]
        %v2016 = vld [vmem:[%s343 + $0xf8] sm:$0xff]
        %v2017 = vld [vmem:[%s343 + $0x100] sm:$0xff]
        %v2018 = vld [vmem:[%s343 + $0x108] sm:$0xff]
        %v2019 = vld [vmem:[%s343 + $0x110] sm:$0xff]
        %v2020 = vld [vmem:[%s343 + $0x118] sm:$0xff]
        %v2021 = vld [vmem:[%s343 + $0x120] sm:$0xff]
        %v2022 = vld [vmem:[%s343 + $0x128] sm:$0xff]
        %v2023 = vld [vmem:[%s343 + $0x130] sm:$0xff]
        %v2024 = vld [vmem:[%s343 + $0x138] sm:$0xff]
        %v2025 = vld [vmem:[%s343 + $0x140] sm:$0xff]
        %v2026 = vld [vmem:[%s343 + $0x148] sm:$0xff]
        %v2027 = vld [vmem:[%s343 + $0x150] sm:$0xff]
        %v2028 = vld [vmem:[%s343 + $0x158] sm:$0xff]
        %v2029 = vld [vmem:[%s343 + $0x160] sm:$0xff]
        %v2030 = vld [vmem:[%s343 + $0x168] sm:$0xff]
        %v2031 = vld [vmem:[%s343 + $0x170] sm:$0xff]
        %v2032 = vld [vmem:[%s343 + $0x178] sm:$0xff]
        %v2033 = vld [vmem:[%s343 + $0x180] sm:$0xff]
        %v2034 = vld [vmem:[%s343 + $0x188] sm:$0xff]
        %v2035 = vld [vmem:[%s343 + $0x190] sm:$0xff]
        %v2036 = vld [vmem:[%s343 + $0x198] sm:$0xff]
        %v2037 = vld [vmem:[%s343 + $0x1a0] sm:$0xff]
        %v2038 = vld [vmem:[%s343 + $0x1a8] sm:$0xff]
        %v2039 = vld [vmem:[%s343 + $0x1b0] sm:$0xff]
        %v2040 = vld [vmem:[%s343 + $0x1b8] sm:$0xff]
        %v2041 = vld [vmem:[%s343 + $0x1c0] sm:$0xff]
        %v2042 = vld [vmem:[%s343 + $0x1c8] sm:$0xff]
        %v2043 = vld [vmem:[%s343 + $0x1d0] sm:$0xff]
        %v2044 = vld [vmem:[%s343 + $0x1d8] sm:$0xff]
        %v2045 = vld [vmem:[%s343 + $0x1e0] sm:$0xff]
        %v2046 = vld [vmem:[%s343 + $0x1e8] sm:$0xff]
        %v2047 = vld [vmem:[%s343 + $0x1f0] sm:$0xff]
        %v2048 = vld [vmem:[%s343 + $0x1f8] sm:$0xff]
        %2049 = vmatprep.subr.mxu0 %v2046
        %2050 = vmatpush1.msra.mxu0 %v2045
        %2051 = vmatprep.subr.mxu0 %v2042
        %2052 = vmatpush1.msra.mxu0 %v2041
        %2053 = vmatprep.subr.mxu0 %v2038
        %2054 = vmatpush1.msra.mxu0 %v2037
        %2055 = vmatprep.subr.mxu0 %v2034
        %2056 = vmatpush1.msra.mxu0 %v2033
        %2057 = vmatprep.subr.mxu0 %v2030
        %2058 = vmatpush1.msra.mxu0 %v2029
        %2059 = vmatprep.subr.mxu0 %v2026
        %2060 = vmatpush1.msra.mxu0 %v2025
        %2061 = vmatprep.subr.mxu0 %v2022
        %2062 = vmatpush1.msra.mxu0 %v2021
        %2063 = vmatprep.subr.mxu0 %v2018
        %2064 = vmatpush1.msra.mxu0 %v2017
        %2065 = vmatprep.subr.mxu0 %v2014
        %2066 = vmatpush1.msra.mxu0 %v2013
        %2067 = vmatprep.subr.mxu0 %v2010
        %2068 = vmatpush1.msra.mxu0 %v2009
        %2069 = vmatprep.subr.mxu0 %v2006
        %2070 = vmatpush1.msra.mxu0 %v2005
        %2071 = vmatprep.subr.mxu0 %v2002
        %2072 = vmatpush1.msra.mxu0 %v2001
        %2073 = vmatprep.subr.mxu0 %v1998
        %2074 = vmatpush1.msra.mxu0 %v1997
        %2075 = vmatprep.subr.mxu0 %v1994
        %2076 = vmatpush1.msra.mxu0 %v1993
        %2077 = vmatprep.subr.mxu0 %v1990
        %2078 = vmatpush1.msra.mxu0 %v1989
        %2079 = vmatprep.subr.mxu0 %v1986
        %2080 = vmatpush1.msra.mxu0 %v1985
        %2081 = vmatprep.subr.mxu0 0.0
        %2082 = vmatpush2.msra.mxu0 0.0
        %2083 = vmatprep.subr.mxu0 0.0
        %2084 = vmatpush2.msra.mxu0 0.0
        %2085 = vmatprep.subr.mxu0 0.0
        %2086 = vmatpush2.msra.mxu0 0.0
        %2087 = vmatprep.subr.mxu0 0.0
        %2088 = vmatpush2.msra.mxu0 0.0
        %2089 = vmatprep.subr.mxu0 0.0
        %2090 = vmatpush2.msra.mxu0 0.0
        %2091 = vmatprep.subr.mxu0 0.0
        %2092 = vmatpush2.msra.mxu0 0.0
        %2093 = vmatprep.subr.mxu0 0.0
        %2094 = vmatpush2.msra.mxu0 0.0
        %2095 = vmatprep.subr.mxu0 0.0
        %2096 = vmatpush2.msra.mxu0 0.0
        %2097 = vmatprep.subr.mxu0 0.0
        %2098 = vmatpush2.msra.mxu0 0.0
        %2099 = vmatprep.subr.mxu0 0.0
        %2100 = vmatpush2.msra.mxu0 0.0
        %2101 = vmatprep.subr.mxu0 0.0
        %2102 = vmatpush2.msra.mxu0 0.0
        %2103 = vmatprep.subr.mxu0 0.0
        %2104 = vmatpush2.msra.mxu0 0.0
        %2105 = vmatprep.subr.mxu0 0.0
        %2106 = vmatpush2.msra.mxu0 0.0
        %2107 = vmatprep.subr.mxu0 0.0
        %2108 = vmatpush2.msra.mxu0 0.0
        %2109 = vmatprep.subr.mxu0 0.0
        %2110 = vmatpush2.msra.mxu0 0.0
        %2111 = vmatprep.subr.mxu0 0.0
        %2112 = vmatpush2.msra.mxu0 0.0
        %2113 = vmatprep.mubr.f32.mxu0 0.0
        %2114 = vmatmul.mubr.f32.gmra.mxu0 %v1975
        %v2115 = vpop.f32.mrf.mxu0
        %v2116 = vadd.f32 0.0, %v2115
        %v2117 = vpop.f32.mrf.mxu0
        %v2118 = vadd.f32 0.0, %v2117
        %2119 = vdwg.mxu0
        %2120 = vmatprep.subr.mxu0 %v2048
        %2121 = vmatpush1.msra.mxu0 %v2047
        %2122 = vmatprep.subr.mxu0 %v2044
        %2123 = vmatpush1.msra.mxu0 %v2043
        %2124 = vmatprep.subr.mxu0 %v2040
        %2125 = vmatpush1.msra.mxu0 %v2039
        %2126 = vmatprep.subr.mxu0 %v2036
        %2127 = vmatpush1.msra.mxu0 %v2035
        %2128 = vmatprep.subr.mxu0 %v2032
        %2129 = vmatpush1.msra.mxu0 %v2031
        %2130 = vmatprep.subr.mxu0 %v2028
        %2131 = vmatpush1.msra.mxu0 %v2027
        %2132 = vmatprep.subr.mxu0 %v2024
        %2133 = vmatpush1.msra.mxu0 %v2023
        %2134 = vmatprep.subr.mxu0 %v2020
        %2135 = vmatpush1.msra.mxu0 %v2019
        %2136 = vmatprep.subr.mxu0 %v2016
        %2137 = vmatpush1.msra.mxu0 %v2015
        %2138 = vmatprep.subr.mxu0 %v2012
        %2139 = vmatpush1.msra.mxu0 %v2011
        %2140 = vmatprep.subr.mxu0 %v2008
        %2141 = vmatpush1.msra.mxu0 %v2007
        %2142 = vmatprep.subr.mxu0 %v2004
        %2143 = vmatpush1.msra.mxu0 %v2003
        %2144 = vmatprep.subr.mxu0 %v2000
        %2145 = vmatpush1.msra.mxu0 %v1999
        %2146 = vmatprep.subr.mxu0 %v1996
        %2147 = vmatpush1.msra.mxu0 %v1995
        %2148 = vmatprep.subr.mxu0 %v1992
        %2149 = vmatpush1.msra.mxu0 %v1991
        %2150 = vmatprep.subr.mxu0 %v1988
        %2151 = vmatpush1.msra.mxu0 %v1987
        %2152 = vmatprep.subr.mxu0 0.0
        %2153 = vmatpush2.msra.mxu0 0.0
        %2154 = vmatprep.subr.mxu0 0.0
        %2155 = vmatpush2.msra.mxu0 0.0
        %2156 = vmatprep.subr.mxu0 0.0
        %2157 = vmatpush2.msra.mxu0 0.0
        %2158 = vmatprep.subr.mxu0 0.0
        %2159 = vmatpush2.msra.mxu0 0.0
        %2160 = vmatprep.subr.mxu0 0.0
        %2161 = vmatpush2.msra.mxu0 0.0
        %2162 = vmatprep.subr.mxu0 0.0
        %2163 = vmatpush2.msra.mxu0 0.0
        %2164 = vmatprep.subr.mxu0 0.0
        %2165 = vmatpush2.msra.mxu0 0.0
        %2166 = vmatprep.subr.mxu0 0.0
        %2167 = vmatpush2.msra.mxu0 0.0
        %2168 = vmatprep.subr.mxu0 0.0
        %2169 = vmatpush2.msra.mxu0 0.0
        %2170 = vmatprep.subr.mxu0 0.0
        %2171 = vmatpush2.msra.mxu0 0.0
        %2172 = vmatprep.subr.mxu0 0.0
        %2173 = vmatpush2.msra.mxu0 0.0
        %2174 = vmatprep.subr.mxu0 0.0
        %2175 = vmatpush2.msra.mxu0 0.0
        %2176 = vmatprep.subr.mxu0 0.0
        %2177 = vmatpush2.msra.mxu0 0.0
        %2178 = vmatprep.subr.mxu0 0.0
        %2179 = vmatpush2.msra.mxu0 0.0
        %2180 = vmatprep.subr.mxu0 0.0
        %2181 = vmatpush2.msra.mxu0 0.0
        %2182 = vmatprep.subr.mxu0 0.0
        %2183 = vmatpush2.msra.mxu0 0.0
        %2184 = vmatprep.mubr.f32.mxu0 0.0
        %2185 = vmatmul.mubr.f32.gmra.mxu0 %v1975
        %v2186 = vpop.f32.mrf.mxu0
        %v2187 = vadd.f32 0.0, %v2186
        %v2188 = vpop.f32.mrf.mxu0
        %v2189 = vadd.f32 0.0, %v2188
        %2190 = vdwg.mxu0
        %v2191 = vadd.f32 %v1981, %v2116
        %v2192 = vadd.f32 %v1982, %v2118
        %v2193 = vadd.f32 %v1983, %v2187
        %v2194 = vadd.f32 %v1984, %v2189
        %v2195 = vxor.u32 %v2191, 2147483648
        %v2196 = vmul.f32 %v2195, 1.442695
        %v2197 = vpow.pop %v2196
        %v2198 = vadd.f32 %v2197, 1.0
        %v2199 = vrcp.pop %v2198
        %v2200 = vmul.f32 1.0, %v2199
        %v2201 = vxor.u32 %v2192, 2147483648
        %v2202 = vmul.f32 %v2201, 1.442695
        %v2203 = vpow.pop %v2202
        %v2204 = vadd.f32 %v2203, 1.0
        %v2205 = vrcp.pop %v2204
        %v2206 = vmul.f32 1.0, %v2205
        %v2207 = vtanh.pop %v2193
        %v2208 = vxor.u32 %v2194, 2147483648
        %v2209 = vmul.f32 %v2208, 1.442695
        %v2210 = vpow.pop %v2209
        %v2211 = vadd.f32 %v2210, 1.0
        %v2212 = vrcp.pop %v2211
        %v2213 = vmul.f32 1.0, %v2212
        %v2214 = vmul.f32 %v2206, %v1973
        %v2215 = vmul.f32 %v2200, %v2207
        %v2216 = vadd.f32 %v2214, %v2215
        %v2217 = vtanh.pop %v2216
        %v2218 = vmul.f32 %v2213, %v2217
        %s2219 = sadd.s32 0, 5
        %s2220 = smul.u32 %s2219, 8
        %s2221 = scalar_lea.vmem [#allocation2], %s2220
        %2222 = vst [vmem:[%s2221] sm:$0xff] %v2218
        %s2223 = scalar_lea.vmem [#allocation3], 192
        %v2224 = vld [vmem:[%s2223] sm:$0xff]
        %v2225 = vld [vmem:[%s2223 + $0x8] sm:$0xff]
        %v2226 = vld [vmem:[%s2223 + $0x10] sm:$0xff]
        %v2227 = vld [vmem:[%s2223 + $0x18] sm:$0xff]
        %v2228 = vld [vmem:[%s343] sm:$0xff]
        %v2229 = vld [vmem:[%s343 + $0x8] sm:$0xff]
        %v2230 = vld [vmem:[%s343 + $0x10] sm:$0xff]
        %v2231 = vld [vmem:[%s343 + $0x18] sm:$0xff]
        %v2232 = vld [vmem:[%s343 + $0x20] sm:$0xff]
        %v2233 = vld [vmem:[%s343 + $0x28] sm:$0xff]
        %v2234 = vld [vmem:[%s343 + $0x30] sm:$0xff]
        %v2235 = vld [vmem:[%s343 + $0x38] sm:$0xff]
        %v2236 = vld [vmem:[%s343 + $0x40] sm:$0xff]
        %v2237 = vld [vmem:[%s343 + $0x48] sm:$0xff]
        %v2238 = vld [vmem:[%s343 + $0x50] sm:$0xff]
        %v2239 = vld [vmem:[%s343 + $0x58] sm:$0xff]
        %v2240 = vld [vmem:[%s343 + $0x60] sm:$0xff]
        %v2241 = vld [vmem:[%s343 + $0x68] sm:$0xff]
        %v2242 = vld [vmem:[%s343 + $0x70] sm:$0xff]
        %v2243 = vld [vmem:[%s343 + $0x78] sm:$0xff]
        %v2244 = vld [vmem:[%s343 + $0x80] sm:$0xff]
        %v2245 = vld [vmem:[%s343 + $0x88] sm:$0xff]
        %v2246 = vld [vmem:[%s343 + $0x90] sm:$0xff]
        %v2247 = vld [vmem:[%s343 + $0x98] sm:$0xff]
        %v2248 = vld [vmem:[%s343 + $0xa0] sm:$0xff]
        %v2249 = vld [vmem:[%s343 + $0xa8] sm:$0xff]
        %v2250 = vld [vmem:[%s343 + $0xb0] sm:$0xff]
        %v2251 = vld [vmem:[%s343 + $0xb8] sm:$0xff]
        %v2252 = vld [vmem:[%s343 + $0xc0] sm:$0xff]
        %v2253 = vld [vmem:[%s343 + $0xc8] sm:$0xff]
        %v2254 = vld [vmem:[%s343 + $0xd0] sm:$0xff]
        %v2255 = vld [vmem:[%s343 + $0xd8] sm:$0xff]
        %v2256 = vld [vmem:[%s343 + $0xe0] sm:$0xff]
        %v2257 = vld [vmem:[%s343 + $0xe8] sm:$0xff]
        %v2258 = vld [vmem:[%s343 + $0xf0] sm:$0xff]
        %v2259 = vld [vmem:[%s343 + $0xf8] sm:$0xff]
        %v2260 = vld [vmem:[%s343 + $0x100] sm:$0xff]
        %v2261 = vld [vmem:[%s343 + $0x108] sm:$0xff]
        %v2262 = vld [vmem:[%s343 + $0x110] sm:$0xff]
        %v2263 = vld [vmem:[%s343 + $0x118] sm:$0xff]
        %v2264 = vld [vmem:[%s343 + $0x120] sm:$0xff]
        %v2265 = vld [vmem:[%s343 + $0x128] sm:$0xff]
        %v2266 = vld [vmem:[%s343 + $0x130] sm:$0xff]
        %v2267 = vld [vmem:[%s343 + $0x138] sm:$0xff]
        %v2268 = vld [vmem:[%s343 + $0x140] sm:$0xff]
        %v2269 = vld [vmem:[%s343 + $0x148] sm:$0xff]
        %v2270 = vld [vmem:[%s343 + $0x150] sm:$0xff]
        %v2271 = vld [vmem:[%s343 + $0x158] sm:$0xff]
        %v2272 = vld [vmem:[%s343 + $0x160] sm:$0xff]
        %v2273 = vld [vmem:[%s343 + $0x168] sm:$0xff]
        %v2274 = vld [vmem:[%s343 + $0x170] sm:$0xff]
        %v2275 = vld [vmem:[%s343 + $0x178] sm:$0xff]
        %v2276 = vld [vmem:[%s343 + $0x180] sm:$0xff]
        %v2277 = vld [vmem:[%s343 + $0x188] sm:$0xff]
        %v2278 = vld [vmem:[%s343 + $0x190] sm:$0xff]
        %v2279 = vld [vmem:[%s343 + $0x198] sm:$0xff]
        %v2280 = vld [vmem:[%s343 + $0x1a0] sm:$0xff]
        %v2281 = vld [vmem:[%s343 + $0x1a8] sm:$0xff]
        %v2282 = vld [vmem:[%s343 + $0x1b0] sm:$0xff]
        %v2283 = vld [vmem:[%s343 + $0x1b8] sm:$0xff]
        %v2284 = vld [vmem:[%s343 + $0x1c0] sm:$0xff]
        %v2285 = vld [vmem:[%s343 + $0x1c8] sm:$0xff]
        %v2286 = vld [vmem:[%s343 + $0x1d0] sm:$0xff]
        %v2287 = vld [vmem:[%s343 + $0x1d8] sm:$0xff]
        %v2288 = vld [vmem:[%s343 + $0x1e0] sm:$0xff]
        %v2289 = vld [vmem:[%s343 + $0x1e8] sm:$0xff]
        %v2290 = vld [vmem:[%s343 + $0x1f0] sm:$0xff]
        %v2291 = vld [vmem:[%s343 + $0x1f8] sm:$0xff]
        %2292 = vmatprep.subr.mxu0 %v2289
        %2293 = vmatpush1.msra.mxu0 %v2288
        %2294 = vmatprep.subr.mxu0 %v2285
        %2295 = vmatpush1.msra.mxu0 %v2284
        %2296 = vmatprep.subr.mxu0 %v2281
        %2297 = vmatpush1.msra.mxu0 %v2280
        %2298 = vmatprep.subr.mxu0 %v2277
        %2299 = vmatpush1.msra.mxu0 %v2276
        %2300 = vmatprep.subr.mxu0 %v2273
        %2301 = vmatpush1.msra.mxu0 %v2272
        %2302 = vmatprep.subr.mxu0 %v2269
        %2303 = vmatpush1.msra.mxu0 %v2268
        %2304 = vmatprep.subr.mxu0 %v2265
        %2305 = vmatpush1.msra.mxu0 %v2264
        %2306 = vmatprep.subr.mxu0 %v2261
        %2307 = vmatpush1.msra.mxu0 %v2260
        %2308 = vmatprep.subr.mxu0 %v2257
        %2309 = vmatpush1.msra.mxu0 %v2256
        %2310 = vmatprep.subr.mxu0 %v2253
        %2311 = vmatpush1.msra.mxu0 %v2252
        %2312 = vmatprep.subr.mxu0 %v2249
        %2313 = vmatpush1.msra.mxu0 %v2248
        %2314 = vmatprep.subr.mxu0 %v2245
        %2315 = vmatpush1.msra.mxu0 %v2244
        %2316 = vmatprep.subr.mxu0 %v2241
        %2317 = vmatpush1.msra.mxu0 %v2240
        %2318 = vmatprep.subr.mxu0 %v2237
        %2319 = vmatpush1.msra.mxu0 %v2236
        %2320 = vmatprep.subr.mxu0 %v2233
        %2321 = vmatpush1.msra.mxu0 %v2232
        %2322 = vmatprep.subr.mxu0 %v2229
        %2323 = vmatpush1.msra.mxu0 %v2228
        %2324 = vmatprep.subr.mxu0 0.0
        %2325 = vmatpush2.msra.mxu0 0.0
        %2326 = vmatprep.subr.mxu0 0.0
        %2327 = vmatpush2.msra.mxu0 0.0
        %2328 = vmatprep.subr.mxu0 0.0
        %2329 = vmatpush2.msra.mxu0 0.0
        %2330 = vmatprep.subr.mxu0 0.0
        %2331 = vmatpush2.msra.mxu0 0.0
        %2332 = vmatprep.subr.mxu0 0.0
        %2333 = vmatpush2.msra.mxu0 0.0
        %2334 = vmatprep.subr.mxu0 0.0
        %2335 = vmatpush2.msra.mxu0 0.0
        %2336 = vmatprep.subr.mxu0 0.0
        %2337 = vmatpush2.msra.mxu0 0.0
        %2338 = vmatprep.subr.mxu0 0.0
        %2339 = vmatpush2.msra.mxu0 0.0
        %2340 = vmatprep.subr.mxu0 0.0
        %2341 = vmatpush2.msra.mxu0 0.0
        %2342 = vmatprep.subr.mxu0 0.0
        %2343 = vmatpush2.msra.mxu0 0.0
        %2344 = vmatprep.subr.mxu0 0.0
        %2345 = vmatpush2.msra.mxu0 0.0
        %2346 = vmatprep.subr.mxu0 0.0
        %2347 = vmatpush2.msra.mxu0 0.0
        %2348 = vmatprep.subr.mxu0 0.0
        %2349 = vmatpush2.msra.mxu0 0.0
        %2350 = vmatprep.subr.mxu0 0.0
        %2351 = vmatpush2.msra.mxu0 0.0
        %2352 = vmatprep.subr.mxu0 0.0
        %2353 = vmatpush2.msra.mxu0 0.0
        %2354 = vmatprep.subr.mxu0 0.0
        %2355 = vmatpush2.msra.mxu0 0.0
        %2356 = vmatprep.mubr.f32.mxu0 0.0
        %2357 = vmatmul.mubr.f32.gmra.mxu0 %v2218
        %v2358 = vpop.f32.mrf.mxu0
        %v2359 = vadd.f32 0.0, %v2358
        %v2360 = vpop.f32.mrf.mxu0
        %v2361 = vadd.f32 0.0, %v2360
        %2362 = vdwg.mxu0
        %2363 = vmatprep.subr.mxu0 %v2291
        %2364 = vmatpush1.msra.mxu0 %v2290
        %2365 = vmatprep.subr.mxu0 %v2287
        %2366 = vmatpush1.msra.mxu0 %v2286
        %2367 = vmatprep.subr.mxu0 %v2283
        %2368 = vmatpush1.msra.mxu0 %v2282
        %2369 = vmatprep.subr.mxu0 %v2279
        %2370 = vmatpush1.msra.mxu0 %v2278
        %2371 = vmatprep.subr.mxu0 %v2275
        %2372 = vmatpush1.msra.mxu0 %v2274
        %2373 = vmatprep.subr.mxu0 %v2271
        %2374 = vmatpush1.msra.mxu0 %v2270
        %2375 = vmatprep.subr.mxu0 %v2267
        %2376 = vmatpush1.msra.mxu0 %v2266
        %2377 = vmatprep.subr.mxu0 %v2263
        %2378 = vmatpush1.msra.mxu0 %v2262
        %2379 = vmatprep.subr.mxu0 %v2259
        %2380 = vmatpush1.msra.mxu0 %v2258
        %2381 = vmatprep.subr.mxu0 %v2255
        %2382 = vmatpush1.msra.mxu0 %v2254
        %2383 = vmatprep.subr.mxu0 %v2251
        %2384 = vmatpush1.msra.mxu0 %v2250
        %2385 = vmatprep.subr.mxu0 %v2247
        %2386 = vmatpush1.msra.mxu0 %v2246
        %2387 = vmatprep.subr.mxu0 %v2243
        %2388 = vmatpush1.msra.mxu0 %v2242
        %2389 = vmatprep.subr.mxu0 %v2239
        %2390 = vmatpush1.msra.mxu0 %v2238
        %2391 = vmatprep.subr.mxu0 %v2235
        %2392 = vmatpush1.msra.mxu0 %v2234
        %2393 = vmatprep.subr.mxu0 %v2231
        %2394 = vmatpush1.msra.mxu0 %v2230
        %2395 = vmatprep.subr.mxu0 0.0
        %2396 = vmatpush2.msra.mxu0 0.0
        %2397 = vmatprep.subr.mxu0 0.0
        %2398 = vmatpush2.msra.mxu0 0.0
        %2399 = vmatprep.subr.mxu0 0.0
        %2400 = vmatpush2.msra.mxu0 0.0
        %2401 = vmatprep.subr.mxu0 0.0
        %2402 = vmatpush2.msra.mxu0 0.0
        %2403 = vmatprep.subr.mxu0 0.0
        %2404 = vmatpush2.msra.mxu0 0.0
        %2405 = vmatprep.subr.mxu0 0.0
        %2406 = vmatpush2.msra.mxu0 0.0
        %2407 = vmatprep.subr.mxu0 0.0
        %2408 = vmatpush2.msra.mxu0 0.0
        %2409 = vmatprep.subr.mxu0 0.0
        %2410 = vmatpush2.msra.mxu0 0.0
        %2411 = vmatprep.subr.mxu0 0.0
        %2412 = vmatpush2.msra.mxu0 0.0
        %2413 = vmatprep.subr.mxu0 0.0
        %2414 = vmatpush2.msra.mxu0 0.0
        %2415 = vmatprep.subr.mxu0 0.0
        %2416 = vmatpush2.msra.mxu0 0.0
        %2417 = vmatprep.subr.mxu0 0.0
        %2418 = vmatpush2.msra.mxu0 0.0
        %2419 = vmatprep.subr.mxu0 0.0
        %2420 = vmatpush2.msra.mxu0 0.0
        %2421 = vmatprep.subr.mxu0 0.0
        %2422 = vmatpush2.msra.mxu0 0.0
        %2423 = vmatprep.subr.mxu0 0.0
        %2424 = vmatpush2.msra.mxu0 0.0
        %2425 = vmatprep.subr.mxu0 0.0
        %2426 = vmatpush2.msra.mxu0 0.0
        %2427 = vmatprep.mubr.f32.mxu0 0.0
        %2428 = vmatmul.mubr.f32.gmra.mxu0 %v2218
        %v2429 = vpop.f32.mrf.mxu0
        %v2430 = vadd.f32 0.0, %v2429
        %v2431 = vpop.f32.mrf.mxu0
        %v2432 = vadd.f32 0.0, %v2431
        %2433 = vdwg.mxu0
        %v2434 = vadd.f32 %v2224, %v2359
        %v2435 = vadd.f32 %v2225, %v2361
        %v2436 = vadd.f32 %v2226, %v2430
        %v2437 = vadd.f32 %v2227, %v2432
        %v2438 = vxor.u32 %v2434, 2147483648
        %v2439 = vmul.f32 %v2438, 1.442695
        %v2440 = vpow.pop %v2439
        %v2441 = vadd.f32 %v2440, 1.0
        %v2442 = vrcp.pop %v2441
        %v2443 = vmul.f32 1.0, %v2442
        %v2444 = vxor.u32 %v2435, 2147483648
        %v2445 = vmul.f32 %v2444, 1.442695
        %v2446 = vpow.pop %v2445
        %v2447 = vadd.f32 %v2446, 1.0
        %v2448 = vrcp.pop %v2447
        %v2449 = vmul.f32 1.0, %v2448
        %v2450 = vtanh.pop %v2436
        %v2451 = vxor.u32 %v2437, 2147483648
        %v2452 = vmul.f32 %v2451, 1.442695
        %v2453 = vpow.pop %v2452
        %v2454 = vadd.f32 %v2453, 1.0
        %v2455 = vrcp.pop %v2454
        %v2456 = vmul.f32 1.0, %v2455
        %v2457 = vmul.f32 %v2449, %v2216
        %v2458 = vmul.f32 %v2443, %v2450
        %v2459 = vadd.f32 %v2457, %v2458
        %v2460 = vtanh.pop %v2459
        %v2461 = vmul.f32 %v2456, %v2460
        %s2462 = sadd.s32 0, 6
        %s2463 = smul.u32 %s2462, 8
        %s2464 = scalar_lea.vmem [#allocation2], %s2463
        %2465 = vst [vmem:[%s2464] sm:$0xff] %v2461
        %s2466 = scalar_lea.vmem [#allocation3], 224
        %v2467 = vld [vmem:[%s2466] sm:$0xff]
        %v2468 = vld [vmem:[%s2466 + $0x8] sm:$0xff]
        %v2469 = vld [vmem:[%s2466 + $0x10] sm:$0xff]
        %v2470 = vld [vmem:[%s2466 + $0x18] sm:$0xff]
        %v2471 = vld [vmem:[%s343] sm:$0xff]
        %v2472 = vld [vmem:[%s343 + $0x8] sm:$0xff]
        %v2473 = vld [vmem:[%s343 + $0x10] sm:$0xff]
        %v2474 = vld [vmem:[%s343 + $0x18] sm:$0xff]
        %v2475 = vld [vmem:[%s343 + $0x20] sm:$0xff]
        %v2476 = vld [vmem:[%s343 + $0x28] sm:$0xff]
        %v2477 = vld [vmem:[%s343 + $0x30] sm:$0xff]
        %v2478 = vld [vmem:[%s343 + $0x38] sm:$0xff]
        %v2479 = vld [vmem:[%s343 + $0x40] sm:$0xff]
        %v2480 = vld [vmem:[%s343 + $0x48] sm:$0xff]
        %v2481 = vld [vmem:[%s343 + $0x50] sm:$0xff]
        %v2482 = vld [vmem:[%s343 + $0x58] sm:$0xff]
        %v2483 = vld [vmem:[%s343 + $0x60] sm:$0xff]
        %v2484 = vld [vmem:[%s343 + $0x68] sm:$0xff]
        %v2485 = vld [vmem:[%s343 + $0x70] sm:$0xff]
        %v2486 = vld [vmem:[%s343 + $0x78] sm:$0xff]
        %v2487 = vld [vmem:[%s343 + $0x80] sm:$0xff]
        %v2488 = vld [vmem:[%s343 + $0x88] sm:$0xff]
        %v2489 = vld [vmem:[%s343 + $0x90] sm:$0xff]
        %v2490 = vld [vmem:[%s343 + $0x98] sm:$0xff]
        %v2491 = vld [vmem:[%s343 + $0xa0] sm:$0xff]
        %v2492 = vld [vmem:[%s343 + $0xa8] sm:$0xff]
        %v2493 = vld [vmem:[%s343 + $0xb0] sm:$0xff]
        %v2494 = vld [vmem:[%s343 + $0xb8] sm:$0xff]
        %v2495 = vld [vmem:[%s343 + $0xc0] sm:$0xff]
        %v2496 = vld [vmem:[%s343 + $0xc8] sm:$0xff]
        %v2497 = vld [vmem:[%s343 + $0xd0] sm:$0xff]
        %v2498 = vld [vmem:[%s343 + $0xd8] sm:$0xff]
        %v2499 = vld [vmem:[%s343 + $0xe0] sm:$0xff]
        %v2500 = vld [vmem:[%s343 + $0xe8] sm:$0xff]
        %v2501 = vld [vmem:[%s343 + $0xf0] sm:$0xff]
        %v2502 = vld [vmem:[%s343 + $0xf8] sm:$0xff]
        %v2503 = vld [vmem:[%s343 + $0x100] sm:$0xff]
        %v2504 = vld [vmem:[%s343 + $0x108] sm:$0xff]
        %v2505 = vld [vmem:[%s343 + $0x110] sm:$0xff]
        %v2506 = vld [vmem:[%s343 + $0x118] sm:$0xff]
        %v2507 = vld [vmem:[%s343 + $0x120] sm:$0xff]
        %v2508 = vld [vmem:[%s343 + $0x128] sm:$0xff]
        %v2509 = vld [vmem:[%s343 + $0x130] sm:$0xff]
        %v2510 = vld [vmem:[%s343 + $0x138] sm:$0xff]
        %v2511 = vld [vmem:[%s343 + $0x140] sm:$0xff]
        %v2512 = vld [vmem:[%s343 + $0x148] sm:$0xff]
        %v2513 = vld [vmem:[%s343 + $0x150] sm:$0xff]
        %v2514 = vld [vmem:[%s343 + $0x158] sm:$0xff]
        %v2515 = vld [vmem:[%s343 + $0x160] sm:$0xff]
        %v2516 = vld [vmem:[%s343 + $0x168] sm:$0xff]
        %v2517 = vld [vmem:[%s343 + $0x170] sm:$0xff]
        %v2518 = vld [vmem:[%s343 + $0x178] sm:$0xff]
        %v2519 = vld [vmem:[%s343 + $0x180] sm:$0xff]
        %v2520 = vld [vmem:[%s343 + $0x188] sm:$0xff]
        %v2521 = vld [vmem:[%s343 + $0x190] sm:$0xff]
        %v2522 = vld [vmem:[%s343 + $0x198] sm:$0xff]
        %v2523 = vld [vmem:[%s343 + $0x1a0] sm:$0xff]
        %v2524 = vld [vmem:[%s343 + $0x1a8] sm:$0xff]
        %v2525 = vld [vmem:[%s343 + $0x1b0] sm:$0xff]
        %v2526 = vld [vmem:[%s343 + $0x1b8] sm:$0xff]
        %v2527 = vld [vmem:[%s343 + $0x1c0] sm:$0xff]
        %v2528 = vld [vmem:[%s343 + $0x1c8] sm:$0xff]
        %v2529 = vld [vmem:[%s343 + $0x1d0] sm:$0xff]
        %v2530 = vld [vmem:[%s343 + $0x1d8] sm:$0xff]
        %v2531 = vld [vmem:[%s343 + $0x1e0] sm:$0xff]
        %v2532 = vld [vmem:[%s343 + $0x1e8] sm:$0xff]
        %v2533 = vld [vmem:[%s343 + $0x1f0] sm:$0xff]
        %v2534 = vld [vmem:[%s343 + $0x1f8] sm:$0xff]
        %2535 = vmatprep.subr.mxu0 %v2532
        %2536 = vmatpush1.msra.mxu0 %v2531
        %2537 = vmatprep.subr.mxu0 %v2528
        %2538 = vmatpush1.msra.mxu0 %v2527
        %2539 = vmatprep.subr.mxu0 %v2524
        %2540 = vmatpush1.msra.mxu0 %v2523
        %2541 = vmatprep.subr.mxu0 %v2520
        %2542 = vmatpush1.msra.mxu0 %v2519
        %2543 = vmatprep.subr.mxu0 %v2516
        %2544 = vmatpush1.msra.mxu0 %v2515
        %2545 = vmatprep.subr.mxu0 %v2512
        %2546 = vmatpush1.msra.mxu0 %v2511
        %2547 = vmatprep.subr.mxu0 %v2508
        %2548 = vmatpush1.msra.mxu0 %v2507
        %2549 = vmatprep.subr.mxu0 %v2504
        %2550 = vmatpush1.msra.mxu0 %v2503
        %2551 = vmatprep.subr.mxu0 %v2500
        %2552 = vmatpush1.msra.mxu0 %v2499
        %2553 = vmatprep.subr.mxu0 %v2496
        %2554 = vmatpush1.msra.mxu0 %v2495
        %2555 = vmatprep.subr.mxu0 %v2492
        %2556 = vmatpush1.msra.mxu0 %v2491
        %2557 = vmatprep.subr.mxu0 %v2488
        %2558 = vmatpush1.msra.mxu0 %v2487
        %2559 = vmatprep.subr.mxu0 %v2484
        %2560 = vmatpush1.msra.mxu0 %v2483
        %2561 = vmatprep.subr.mxu0 %v2480
        %2562 = vmatpush1.msra.mxu0 %v2479
        %2563 = vmatprep.subr.mxu0 %v2476
        %2564 = vmatpush1.msra.mxu0 %v2475
        %2565 = vmatprep.subr.mxu0 %v2472
        %2566 = vmatpush1.msra.mxu0 %v2471
        %2567 = vmatprep.subr.mxu0 0.0
        %2568 = vmatpush2.msra.mxu0 0.0
        %2569 = vmatprep.subr.mxu0 0.0
        %2570 = vmatpush2.msra.mxu0 0.0
        %2571 = vmatprep.subr.mxu0 0.0
        %2572 = vmatpush2.msra.mxu0 0.0
        %2573 = vmatprep.subr.mxu0 0.0
        %2574 = vmatpush2.msra.mxu0 0.0
        %2575 = vmatprep.subr.mxu0 0.0
        %2576 = vmatpush2.msra.mxu0 0.0
        %2577 = vmatprep.subr.mxu0 0.0
        %2578 = vmatpush2.msra.mxu0 0.0
        %2579 = vmatprep.subr.mxu0 0.0
        %2580 = vmatpush2.msra.mxu0 0.0
        %2581 = vmatprep.subr.mxu0 0.0
        %2582 = vmatpush2.msra.mxu0 0.0
        %2583 = vmatprep.subr.mxu0 0.0
        %2584 = vmatpush2.msra.mxu0 0.0
        %2585 = vmatprep.subr.mxu0 0.0
        %2586 = vmatpush2.msra.mxu0 0.0
        %2587 = vmatprep.subr.mxu0 0.0
        %2588 = vmatpush2.msra.mxu0 0.0
        %2589 = vmatprep.subr.mxu0 0.0
        %2590 = vmatpush2.msra.mxu0 0.0
        %2591 = vmatprep.subr.mxu0 0.0
        %2592 = vmatpush2.msra.mxu0 0.0
        %2593 = vmatprep.subr.mxu0 0.0
        %2594 = vmatpush2.msra.mxu0 0.0
        %2595 = vmatprep.subr.mxu0 0.0
        %2596 = vmatpush2.msra.mxu0 0.0
        %2597 = vmatprep.subr.mxu0 0.0
        %2598 = vmatpush2.msra.mxu0 0.0
        %2599 = vmatprep.mubr.f32.mxu0 0.0
        %2600 = vmatmul.mubr.f32.gmra.mxu0 %v2461
        %v2601 = vpop.f32.mrf.mxu0
        %v2602 = vadd.f32 0.0, %v2601
        %v2603 = vpop.f32.mrf.mxu0
        %v2604 = vadd.f32 0.0, %v2603
        %2605 = vdwg.mxu0
        %2606 = vmatprep.subr.mxu0 %v2534
        %2607 = vmatpush1.msra.mxu0 %v2533
        %2608 = vmatprep.subr.mxu0 %v2530
        %2609 = vmatpush1.msra.mxu0 %v2529
        %2610 = vmatprep.subr.mxu0 %v2526
        %2611 = vmatpush1.msra.mxu0 %v2525
        %2612 = vmatprep.subr.mxu0 %v2522
        %2613 = vmatpush1.msra.mxu0 %v2521
        %2614 = vmatprep.subr.mxu0 %v2518
        %2615 = vmatpush1.msra.mxu0 %v2517
        %2616 = vmatprep.subr.mxu0 %v2514
        %2617 = vmatpush1.msra.mxu0 %v2513
        %2618 = vmatprep.subr.mxu0 %v2510
        %2619 = vmatpush1.msra.mxu0 %v2509
        %2620 = vmatprep.subr.mxu0 %v2506
        %2621 = vmatpush1.msra.mxu0 %v2505
        %2622 = vmatprep.subr.mxu0 %v2502
        %2623 = vmatpush1.msra.mxu0 %v2501
        %2624 = vmatprep.subr.mxu0 %v2498
        %2625 = vmatpush1.msra.mxu0 %v2497
        %2626 = vmatprep.subr.mxu0 %v2494
        %2627 = vmatpush1.msra.mxu0 %v2493
        %2628 = vmatprep.subr.mxu0 %v2490
        %2629 = vmatpush1.msra.mxu0 %v2489
        %2630 = vmatprep.subr.mxu0 %v2486
        %2631 = vmatpush1.msra.mxu0 %v2485
        %2632 = vmatprep.subr.mxu0 %v2482
        %2633 = vmatpush1.msra.mxu0 %v2481
        %2634 = vmatprep.subr.mxu0 %v2478
        %2635 = vmatpush1.msra.mxu0 %v2477
        %2636 = vmatprep.subr.mxu0 %v2474
        %2637 = vmatpush1.msra.mxu0 %v2473
        %2638 = vmatprep.subr.mxu0 0.0
        %2639 = vmatpush2.msra.mxu0 0.0
        %2640 = vmatprep.subr.mxu0 0.0
        %2641 = vmatpush2.msra.mxu0 0.0
        %2642 = vmatprep.subr.mxu0 0.0
        %2643 = vmatpush2.msra.mxu0 0.0
        %2644 = vmatprep.subr.mxu0 0.0
        %2645 = vmatpush2.msra.mxu0 0.0
        %2646 = vmatprep.subr.mxu0 0.0
        %2647 = vmatpush2.msra.mxu0 0.0
        %2648 = vmatprep.subr.mxu0 0.0
        %2649 = vmatpush2.msra.mxu0 0.0
        %2650 = vmatprep.subr.mxu0 0.0
        %2651 = vmatpush2.msra.mxu0 0.0
        %2652 = vmatprep.subr.mxu0 0.0
        %2653 = vmatpush2.msra.mxu0 0.0
        %2654 = vmatprep.subr.mxu0 0.0
        %2655 = vmatpush2.msra.mxu0 0.0
        %2656 = vmatprep.subr.mxu0 0.0
        %2657 = vmatpush2.msra.mxu0 0.0
        %2658 = vmatprep.subr.mxu0 0.0
        %2659 = vmatpush2.msra.mxu0 0.0
        %2660 = vmatprep.subr.mxu0 0.0
        %2661 = vmatpush2.msra.mxu0 0.0
        %2662 = vmatprep.subr.mxu0 0.0
        %2663 = vmatpush2.msra.mxu0 0.0
        %2664 = vmatprep.subr.mxu0 0.0
        %2665 = vmatpush2.msra.mxu0 0.0
        %2666 = vmatprep.subr.mxu0 0.0
        %2667 = vmatpush2.msra.mxu0 0.0
        %2668 = vmatprep.subr.mxu0 0.0
        %2669 = vmatpush2.msra.mxu0 0.0
        %2670 = vmatprep.mubr.f32.mxu0 0.0
        %2671 = vmatmul.mubr.f32.gmra.mxu0 %v2461
        %v2672 = vpop.f32.mrf.mxu0
        %v2673 = vadd.f32 0.0, %v2672
        %v2674 = vpop.f32.mrf.mxu0
        %v2675 = vadd.f32 0.0, %v2674
        %2676 = vdwg.mxu0
        %v2677 = vadd.f32 %v2467, %v2602
        %v2678 = vadd.f32 %v2468, %v2604
        %v2679 = vadd.f32 %v2469, %v2673
        %v2680 = vadd.f32 %v2470, %v2675
        %v2681 = vxor.u32 %v2677, 2147483648
        %v2682 = vmul.f32 %v2681, 1.442695
        %v2683 = vpow.pop %v2682
        %v2684 = vadd.f32 %v2683, 1.0
        %v2685 = vrcp.pop %v2684
        %v2686 = vmul.f32 1.0, %v2685
        %v2687 = vxor.u32 %v2678, 2147483648
        %v2688 = vmul.f32 %v2687, 1.442695
        %v2689 = vpow.pop %v2688
        %v2690 = vadd.f32 %v2689, 1.0
        %v2691 = vrcp.pop %v2690
        %v2692 = vmul.f32 1.0, %v2691
        %v2693 = vtanh.pop %v2679
        %v2694 = vxor.u32 %v2680, 2147483648
        %v2695 = vmul.f32 %v2694, 1.442695
        %v2696 = vpow.pop %v2695
        %v2697 = vadd.f32 %v2696, 1.0
        %v2698 = vrcp.pop %v2697
        %v2699 = vmul.f32 1.0, %v2698
        %v2700 = vmul.f32 %v2692, %v2459
        %v2701 = vmul.f32 %v2686, %v2693
        %v2702 = vadd.f32 %v2700, %v2701
        %v2703 = vtanh.pop %v2702
        %v2704 = vmul.f32 %v2699, %v2703
        %s2705 = sadd.s32 0, 7
        %s2706 = smul.u32 %s2705, 8
        %s2707 = scalar_lea.vmem [#allocation2], %s2706
        %2708 = vst [vmem:[%s2707] sm:$0xff] %v2704
        %v2709 = vld [vmem:[#allocation12] sm:$0xff]
        %v2710 = vld [vmem:[#allocation12 + $0x8] sm:$0xff]
        %v2711 = vld [vmem:[#allocation12 + $0x10] sm:$0xff]
        %v2712 = vld [vmem:[#allocation12 + $0x18] sm:$0xff]
        %v2713 = vld [vmem:[#allocation12 + $0x20] sm:$0xff]
        %v2714 = vld [vmem:[#allocation12 + $0x28] sm:$0xff]
        %v2715 = vld [vmem:[#allocation12 + $0x30] sm:$0xff]
        %v2716 = vld [vmem:[#allocation12 + $0x38] sm:$0xff]
        %v2717 = vld [vmem:[#allocation12 + $0x40] sm:$0xff]
        %v2718 = vld [vmem:[#allocation12 + $0x48] sm:$0xff]
        %v2719 = vld [vmem:[#allocation12 + $0x50] sm:$0xff]
        %v2720 = vld [vmem:[#allocation12 + $0x58] sm:$0xff]
        %v2721 = vld [vmem:[#allocation12 + $0x60] sm:$0xff]
        %v2722 = vld [vmem:[#allocation12 + $0x68] sm:$0xff]
        %v2723 = vld [vmem:[#allocation12 + $0x70] sm:$0xff]
        %v2724 = vld [vmem:[#allocation12 + $0x78] sm:$0xff]
        %v2725 = vld [vmem:[%s5] sm:$0x1]
        %v2727 = vlaneseq
        %v2728 = vshrl.u32 %v2727, 7
        %v2729 = vsub.s32 0, %v2728
        %v2730 = vrot.slane %v2725, %v2729
        %2732 = vmatprep.subr.mxu0 0.0
        %2733 = vmatpush1.msra.mxu0 %v2724
        %2734 = vmatprep.subr.mxu0 0.0
        %2735 = vmatpush1.msra.mxu0 %v2723
        %2736 = vmatprep.subr.mxu0 0.0
        %2737 = vmatpush1.msra.mxu0 %v2722
        %2738 = vmatprep.subr.mxu0 0.0
        %2739 = vmatpush1.msra.mxu0 %v2721
        %2740 = vmatprep.subr.mxu0 0.0
        %2741 = vmatpush1.msra.mxu0 %v2720
        %2742 = vmatprep.subr.mxu0 0.0
        %2743 = vmatpush1.msra.mxu0 %v2719
        %2744 = vmatprep.subr.mxu0 0.0
        %2745 = vmatpush1.msra.mxu0 %v2718
        %2746 = vmatprep.subr.mxu0 0.0
        %2747 = vmatpush1.msra.mxu0 %v2717
        %2748 = vmatprep.subr.mxu0 0.0
        %2749 = vmatpush1.msra.mxu0 %v2716
        %2750 = vmatprep.subr.mxu0 0.0
        %2751 = vmatpush1.msra.mxu0 %v2715
        %2752 = vmatprep.subr.mxu0 0.0
        %2753 = vmatpush1.msra.mxu0 %v2714
        %2754 = vmatprep.subr.mxu0 0.0
        %2755 = vmatpush1.msra.mxu0 %v2713
        %2756 = vmatprep.subr.mxu0 0.0
        %2757 = vmatpush1.msra.mxu0 %v2712
        %2758 = vmatprep.subr.mxu0 0.0
        %2759 = vmatpush1.msra.mxu0 %v2711
        %2760 = vmatprep.subr.mxu0 0.0
        %2761 = vmatpush1.msra.mxu0 %v2710
        %2762 = vmatprep.subr.mxu0 0.0
        %2763 = vmatpush1.msra.mxu0 %v2709
        %2764 = vmatprep.subr.mxu0 0.0
        %2765 = vmatpush2.msra.mxu0 0.0
        %2766 = vmatprep.subr.mxu0 0.0
        %2767 = vmatpush2.msra.mxu0 0.0
        %2768 = vmatprep.subr.mxu0 0.0
        %2769 = vmatpush2.msra.mxu0 0.0
        %2770 = vmatprep.subr.mxu0 0.0
        %2771 = vmatpush2.msra.mxu0 0.0
        %2772 = vmatprep.subr.mxu0 0.0
        %2773 = vmatpush2.msra.mxu0 0.0
        %2774 = vmatprep.subr.mxu0 0.0
        %2775 = vmatpush2.msra.mxu0 0.0
        %2776 = vmatprep.subr.mxu0 0.0
        %2777 = vmatpush2.msra.mxu0 0.0
        %2778 = vmatprep.subr.mxu0 0.0
        %2779 = vmatpush2.msra.mxu0 0.0
        %2780 = vmatprep.subr.mxu0 0.0
        %2781 = vmatpush2.msra.mxu0 0.0
        %2782 = vmatprep.subr.mxu0 0.0
        %2783 = vmatpush2.msra.mxu0 0.0
        %2784 = vmatprep.subr.mxu0 0.0
        %2785 = vmatpush2.msra.mxu0 0.0
        %2786 = vmatprep.subr.mxu0 0.0
        %2787 = vmatpush2.msra.mxu0 0.0
        %2788 = vmatprep.subr.mxu0 0.0
        %2789 = vmatpush2.msra.mxu0 0.0
        %2790 = vmatprep.subr.mxu0 0.0
        %2791 = vmatpush2.msra.mxu0 0.0
        %2792 = vmatprep.subr.mxu0 0.0
        %2793 = vmatpush2.msra.mxu0 0.0
        %2794 = vmatprep.subr.mxu0 0.0
        %2795 = vmatpush2.msra.mxu0 0.0
        %2796 = vmatprep.mubr.f32.mxu0 0.0
        %2797 = vmatmul.mubr.f32.gmra.mxu0 %v2704
        %v2798 = vpop.f32.mrf.mxu0
        %v2799 = vadd.f32 %v2730, %v2798
        %v2800 = vpop.f32.mrf.mxu0
        %2801 = vdwg.mxu0
        %2802 = vst [vmem:[%s394] sm:$0xff] %v2799
        %s2803 = sand.u32 %s195, 1
        %s2804 = scalar_lea.sflag [#allocation6], %s2803
        %s2805 = sand.u32 %s195, 1
        %s2806 = smul.addr %s2805, 8
        %s2807 = scalar_lea.vmem [#allocation13], %s2806
        // Predicated region
        $region69: #{tpu_custom_call.1} parent=43 // pred_check
          %p2808 = pneg %p205
        $region70: #{tpu_custom_call.1} parent=43 // pred_check_branch
          %2810 = sbr.rel (%p2808) target = $region72
        $region71: #{tpu_custom_call.1} parent=43 // pred_region
          %s2812 = ssub.s32 128, 128
          %2813 = vsyncadd %s2804, %s2812
          %s2814 = sadd.s32 %s31, %s32
          %s2815 = smul.addr %s2814, 128
          %s2816 = scalar_lea.hbm %s6, %s2815
          %s2818 = sshll.u32 %s2807, 4
          %s2819 = int_to_ptr.vmem [resolvable:$true] %s2818
          %2821 = dma.vmem_to_hbm [thread:$0]  %s2819, 128, %s2816, %s2804
        $region72: #{tpu_custom_call.1} parent=43 // pred_fallthru
          _
      $region44: #{tpu_custom_call.1} parent=5 // pred_fallthru
        _
      %p2822 = scmp.le.s32.totalorder 2, %s22
      // Predicated region
      $region73: #{tpu_custom_call.1} parent=5 // pred_check
        %p2823 = pneg %p2822
      $region74: #{tpu_custom_call.1} parent=5 // pred_check_branch
        %2825 = sbr.rel (%p2823) target = $region76
      $region75: #{tpu_custom_call.1} parent=5 // pred_region
        %s2826 = ssub.s32 %s22, 2
        // Predicated region
        $region77: #{tpu_custom_call.1} parent=75 // pred_check
          %p2827 = pneg %p211
        $region78: #{tpu_custom_call.1} parent=75 // pred_check_branch
          %2829 = sbr.rel (%p2827) target = $region80
        $region79: #{tpu_custom_call.1} parent=75 // pred_region
          %s2830 = sand.u32 %s196, 1
          %s2831 = scalar_lea.sflag [#allocation6], %s2830
          %s2832 = sand.u32 %s196, 1
          %s2833 = smul.addr %s2832, 8
          %s2834 = scalar_lea.vmem [#allocation13], %s2833
          %2835 = dma.done %s2831, 128
        $region80: #{tpu_custom_call.1} parent=75 // pred_fallthru
          _
      $region76: #{tpu_custom_call.1} parent=5 // pred_fallthru
        _
    $region6: #{tpu_custom_call.1} parent=1 // loop_footer
      %s26 = sadd.s32 1, %s22
    $region7: #{tpu_custom_call.1} parent=1 // loop_footer_branch
      %21 = sbr.rel target = $region3
    $region8: #{tpu_custom_call.1} parent=1 // loop_exit
      _
    %2836 = vsyncpa [#allocation5], 1
    %s2837 = scalar_lea.sflag [#allocation5], 1
    %2838 = vsyncpa %s2837, 1
    %2839 = vsyncpa [#allocation8], 1
    %s2840 = scalar_lea.sflag [#allocation8], 1
    %2841 = vsyncpa %s2840, 1
    %2842 = vsyncpa [#allocation11], 1
    %s2843 = scalar_lea.sflag [#allocation11], 1
    %2844 = vsyncpa %s2843, 1
    %2845 = vsyncpa [#allocation6], 1
    %s2846 = scalar_lea.sflag [#allocation6], 1
    %2847 = vsyncpa %s2846, 1

</llo_original>
